<compile_context>
chip_gen: v7x
topology: tpu7x:2x2x1
jax: 0.10.0
libtpu: 0.0.40
codegen_flags: <defaults>
</compile_context>

<pallas_src>
import math
from functools import partial

import jax
import jax.numpy as jnp
from jax import lax
from jax.experimental import pallas as pl
from jax.experimental.pallas import tpu as pltpu

# Small, module-consistent hyperparameters (shrunk from PyTorch defaults).
B_FEAT = 64        # "b": projection feature size
D_HID = 32         # "d": GRU hidden size
NUM_LAYERS = 2
FC_SIZES = [64, 32]
OUTPUT_SIZE = 4
BATCH = 2
SEQ = 8

_VMEM = pl.BlockSpec(memory_space=pltpu.MemorySpace.VMEM)


# --------------------------- Fused Pallas kernel -----------------------------

def _pqrnn_kernel(x_ref,
                  wih0_ref, bi0_ref, whf0_ref, whb0_ref, bnf0_ref, bnb0_ref,
                  wih1_ref, bi1_ref, whf1_ref, whb1_ref, bnf1_ref, bnb1_ref,
                  w1_ref, b1_ref, w2_ref, b2_ref, w3_ref, b3_ref,
                  out_ref,
                  x1_scr, y_scr,
                  *, seq_len, batch, hidden, output_size):
    """Entire PQRNN forward (GRU branch) for one small batch.

    x_ref:     (T*B, In0)  time-major rows (row = t*B + b), raw projection
    wih*_ref:  (In, 6H)    [fw r,z,n | bw r,z,n] input-to-hidden weights
    bi*_ref:   (1, 6H)     pre-folded biases (r,z: b_ih+b_hh ; n: b_ih only)
    whf/whb:   (H, 3H)     hidden-to-hidden weights per direction
    bnf/bnb:   (1, H)      b_hn per direction (applied inside the n gate)
    w1..w3:    head Linear weights, pre-transposed (in, out); b1..b3: (1, out)
    out_ref:   (B, T*O)    lane-packed logits; wrapper reshapes to (B, T, O)
    x1_scr:    (T*B, 2H)   VMEM scratch: layer-0 [h_f | h_b] (= layer-1 input)
    y_scr:     (T*B, 2H)   VMEM scratch: layer-1 [h_f | h_b]
    """
    T, Bs, H = seq_len, batch, hidden

    def gru_bidir(x_flat, wih_ref_, bias_ref_, whf_ref_, whb_ref_,
                  bnf_ref_, bnb_ref_, out_sref):
        # Hoisted input-to-hidden matmul: all timesteps, both directions, one shot.
        gi = jnp.dot(x_flat, wih_ref_[...],
                     preferred_element_type=jnp.float32) + bias_ref_[...]
        whf = whf_ref_[...]
        whb = whb_ref_[...]
        bnf = bnf_ref_[...]
        bnb = bnb_ref_[...]
        hf = jnp.zeros((Bs, H), jnp.float32)
        hb = jnp.zeros((Bs, H), jnp.float32)
        # Fully unrolled recurrence (T is a compile-time constant).
        for i in range(T):
            j = T - 1 - i
            # ---- forward direction, time i ----
            gif = gi[i * Bs:(i + 1) * Bs, 0:3 * H]
            ghf = jnp.dot(hf, whf, preferred_element_type=jnp.float32)
            r = jax.nn.sigmoid(gif[:, 0:H] + ghf[:, 0:H])
            z = jax.nn.sigmoid(gif[:, H:2 * H] + ghf[:, H:2 * H])
            n = jnp.tanh(gif[:, 2 * H:3 * H] + r * (ghf[:, 2 * H:3 * H] + bnf))
            hf = (1.0 - z) * n + z * hf
            out_sref[i * Bs:(i + 1) * Bs, 0:H] = hf
            # ---- backward direction, time j = T-1-i ----
            gib = gi[j * Bs:(j + 1) * Bs, 3 * H:6 * H]
            ghb = jnp.dot(hb, whb, preferred_element_type=jnp.float32)
            rb = jax.nn.sigmoid(gib[:, 0:H] + ghb[:, 0:H])
            zb = jax.nn.sigmoid(gib[:, H:2 * H] + ghb[:, H:2 * H])
            nb = jnp.tanh(gib[:, 2 * H:3 * H] + rb * (ghb[:, 2 * H:3 * H] + bnb))
            hb = (1.0 - zb) * nb + zb * hb
            out_sref[j * Bs:(j + 1) * Bs, H:2 * H] = hb

    # Layer 0 (Hardtanh fused into the hoisted matmul's input).
    x0 = jnp.clip(x_ref[...].astype(jnp.float32), -1.0, 1.0)
    gru_bidir(x0, wih0_ref, bi0_ref, whf0_ref, whb0_ref, bnf0_ref, bnb0_ref, x1_scr)

    # Layer 1 (input is the concatenated [h_f | h_b] of layer 0, already in scratch).
    gru_bidir(x1_scr[...], wih1_ref, bi1_ref, whf1_ref, whb1_ref,
              bnf1_ref, bnb1_ref, y_scr)

    # Head: sum of direction halves, then [ReLU, Linear] x 3, batched over T*B rows.
    y = y_scr[...]
    a = y[:, 0:H] + y[:, H:2 * H]
    a = jnp.maximum(a, 0.0)
    a = jnp.dot(a, w1_ref[...], preferred_element_type=jnp.float32) + b1_ref[...]
    a = jnp.maximum(a, 0.0)
    a = jnp.dot(a, w2_ref[...], preferred_element_type=jnp.float32) + b2_ref[...]
    a = jnp.maximum(a, 0.0)
    logits = jnp.dot(a, w3_ref[...], preferred_element_type=jnp.float32) + b3_ref[...]

    # Emit directly in (batch, seq*output) lane-packed layout.
    O = output_size
    for t in range(T):
        out_ref[:, t * O:(t + 1) * O] = logits[t * Bs:(t + 1) * Bs, :]


# ------------------------------ Wrappers --------------------------------------

def prepare_params(params):
    """Pre-transpose / pre-fold the PyTorch-layout params once, outside the forward."""
    H = D_HID
    prepped = {"gru": [], "head": []}
    for layer in params["gru"]:
        wif, whf, bif, bhf = layer["fw"]
        wib, whb, bib, bhb = layer["bw"]
        wih_cat = jnp.concatenate([wif.T, wib.T], axis=1)                  # (In, 6H)
        bias_cat = jnp.concatenate([
            bif[:2 * H] + bhf[:2 * H], bif[2 * H:],                        # fw: r,z (+b_hh), n
            bib[:2 * H] + bhb[:2 * H], bib[2 * H:],                        # bw: r,z (+b_hh), n
        ]).reshape(1, 6 * H)
        prepped["gru"].append((wih_cat, bias_cat, whf.T, whb.T,
                               bhf[2 * H:].reshape(1, H), bhb[2 * H:].reshape(1, H)))
    for w, b in params["head"]:
        prepped["head"].append((w.T, b.reshape(1, -1)))
    return prepped


@jax.jit
def pqrnn_forward(projection, attention_mask, prepped):
    del attention_mask  # unused for rnn_type in {LSTM, GRU} (matches reference module)
    B, T, _ = projection.shape
    # Time-major flattened rows (row = t*B + b); the only XLA glue op (4 KB copy).
    x_tm = jnp.transpose(projection, (1, 0, 2)).reshape(T * B, B_FEAT).astype(jnp.float32)

    wih0, bi0, whf0, whb0, bnf0, bnb0 = prepped["gru"][0]
    wih1, bi1, whf1, whb1, bnf1, bnb1 = prepped["gru"][1]
    (w1, b1), (w2, b2), (w3, b3) = prepped["head"]

    kern = partial(_pqrnn_kernel, seq_len=T, batch=B, hidden=D_HID,
                   output_size=OUTPUT_SIZE)
    out = pl.pallas_call(
        kern,
        out_shape=jax.ShapeDtypeStruct((B, T * OUTPUT_SIZE), jnp.float32),
        in_specs=[_VMEM] * 19,
        out_specs=_VMEM,
        scratch_shapes=[pltpu.VMEM((T * B, 2 * D_HID), jnp.float32),   # layer-0 [hf|hb]
                        pltpu.VMEM((T * B, 2 * D_HID), jnp.float32)],  # layer-1 [hf|hb]
    )(x_tm,
      wih0, bi0, whf0, whb0, bnf0, bnb0,
      wih1, bi1, whf1, whb1, bnf1, bnb1,
      w1, b1, w2, b2, w3, b3)
    return out.reshape(B, T, OUTPUT_SIZE)          # free contiguous reshape


# --------------------------- Parameter init ----------------------------------

def init_params(key):
    params = {"gru": [], "head": []}
    bound = 1.0 / math.sqrt(D_HID)
    for li in range(NUM_LAYERS):
        in_sz = B_FEAT if li == 0 else 2 * D_HID
        layer = {}
        for direction in ("fw", "bw"):
            key, k1, k2, k3, k4 = jax.random.split(key, 5)
            w_ih = jax.random.uniform(k1, (3 * D_HID, in_sz), jnp.float32, -bound, bound)
            w_hh = jax.random.uniform(k2, (3 * D_HID, D_HID), jnp.float32, -bound, bound)
            b_ih = jax.random.uniform(k3, (3 * D_HID,), jnp.float32, -bound, bound)
            b_hh = jax.random.uniform(k4, (3 * D_HID,), jnp.float32, -bound, bound)
            layer[direction] = (w_ih, w_hh, b_ih, b_hh)
        params["gru"].append(layer)
    for fan_in, fan_out in zip([D_HID] + FC_SIZES, FC_SIZES + [OUTPUT_SIZE]):
        key, k1, k2 = jax.random.split(key, 3)
        lb = 1.0 / math.sqrt(fan_in)
        w = jax.random.uniform(k1, (fan_out, fan_in), jnp.float32, -lb, lb)
        b = jax.random.uniform(k2, (fan_out,), jnp.float32, -lb, lb)
        params["head"].append((w, b))
    return params


# ------------------------- Pure-JAX reference --------------------------------

def _reference_forward(projection, params):
    hp = jax.lax.Precision.HIGHEST
    H = D_HID

    def gru_dir(x, wp):
        w_ih, w_hh, b_ih, b_hh = wp

        def step(h, x_t):
            gi = jnp.dot(x_t, w_ih.T, precision=hp) + b_ih
            gh = jnp.dot(h, w_hh.T, precision=hp) + b_hh
            r = jax.nn.sigmoid(gi[:, :H] + gh[:, :H])
            z = jax.nn.sigmoid(gi[:, H:2 * H] + gh[:, H:2 * H])
            n = jnp.tanh(gi[:, 2 * H:] + r * gh[:, 2 * H:])
            h_new = (1.0 - z) * n + z * h
            return h_new, h_new

        h0 = jnp.zeros((x.shape[1], H), jnp.float32)
        _, ys = lax.scan(step, h0, x)
        return ys

    x = jnp.clip(jnp.transpose(projection, (1, 0, 2)), -1.0, 1.0)
    layer_in = x
    h_f = h_b = None
    for li in range(NUM_LAYERS):
        layer = params["gru"][li]
        h_f = gru_dir(layer_in, layer["fw"])
        h_b = jnp.flip(gru_dir(jnp.flip(layer_in, 0), layer["bw"]), 0)
        layer_in = jnp.concatenate([h_f, h_b], -1)
    out = jnp.transpose(h_f + h_b, (1, 0, 2))
    for w, b in params["head"]:
        out = jnp.maximum(out, 0.0)
        out = jnp.dot(out, w.T, precision=hp) + b
    return out


# --------------------------------- Main ---------------------------------------

if __name__ == "__main__":
    key = jax.random.PRNGKey(0)
    pkey, xkey = jax.random.split(key)
    params = init_params(pkey)
    prepped = prepare_params(params)   # one-time weight repacking (outside forward)

    projection = jax.random.normal(xkey, (BATCH, SEQ, B_FEAT), jnp.float32)
    attention_mask = jnp.ones((BATCH, SEQ), jnp.int32)

    logits = pqrnn_forward(projection, attention_mask, prepped)
    logits = jax.block_until_ready(logits)

    assert logits.shape == (BATCH, SEQ, OUTPUT_SIZE)
    ref = _reference_forward(projection, params)
    assert jnp.allclose(logits, ref, atol=2e-3, rtol=2e-3), (
        f"max abs err {jnp.max(jnp.abs(logits - ref))}")

    print("KERNEL_OK")
</pallas_src>

<mosaic_0001>
module attributes {stable_mosaic.version = 11 : i64} {
  func.func @_pqrnn_kernel(%arg0: memref<16x64xf32, #tpu.memory_space<vmem>>, %arg1: memref<64x192xf32, #tpu.memory_space<vmem>>, %arg2: memref<1x192xf32, #tpu.memory_space<vmem>>, %arg3: memref<32x96xf32, #tpu.memory_space<vmem>>, %arg4: memref<32x96xf32, #tpu.memory_space<vmem>>, %arg5: memref<1x32xf32, #tpu.memory_space<vmem>>, %arg6: memref<1x32xf32, #tpu.memory_space<vmem>>, %arg7: memref<64x192xf32, #tpu.memory_space<vmem>>, %arg8: memref<1x192xf32, #tpu.memory_space<vmem>>, %arg9: memref<32x96xf32, #tpu.memory_space<vmem>>, %arg10: memref<32x96xf32, #tpu.memory_space<vmem>>, %arg11: memref<1x32xf32, #tpu.memory_space<vmem>>, %arg12: memref<1x32xf32, #tpu.memory_space<vmem>>, %arg13: memref<32x64xf32, #tpu.memory_space<vmem>>, %arg14: memref<1x64xf32, #tpu.memory_space<vmem>>, %arg15: memref<64x32xf32, #tpu.memory_space<vmem>>, %arg16: memref<1x32xf32, #tpu.memory_space<vmem>>, %arg17: memref<32x4xf32, #tpu.memory_space<vmem>>, %arg18: memref<1x4xf32, #tpu.memory_space<vmem>>, %arg19: memref<2x32xf32, #tpu.memory_space<vmem>>, %arg20: memref<16x64xf32, #tpu.memory_space<vmem>>, %arg21: memref<16x64xf32, #tpu.memory_space<vmem>>) attributes {dimension_semantics = [], scalar_prefetch = 0 : i64, scratch_operands = 2 : i64, tpu.core_type = #tpu.core_type<tc>} {
    %c0 = arith.constant 0 : index
    %c0_0 = arith.constant 0 : index
    %0 = vector.load %arg0[%c0, %c0_0] : memref<16x64xf32, #tpu.memory_space<vmem>>, vector<16x64xf32>
    %cst = arith.constant -1.000000e+00 : f32
    %cst_1 = arith.constant 1.000000e+00 : f32
    %1 = vector.broadcast %cst : f32 to vector<16x64xf32>
    %2 = arith.maximumf %1, %0 : vector<16x64xf32>
    %3 = vector.broadcast %cst_1 : f32 to vector<16x64xf32>
    %4 = arith.minimumf %3, %2 : vector<16x64xf32>
    %c0_2 = arith.constant 0 : index
    %c0_3 = arith.constant 0 : index
    %5 = vector.load %arg1[%c0_2, %c0_3] : memref<64x192xf32, #tpu.memory_space<vmem>>, vector<64x192xf32>
    %cst_4 = arith.constant dense<0.000000e+00> : vector<16x192xf32>
    %6 = tpu.matmul %4, %5, %cst_4 {dimension_numbers = #tpu.dot_dimension_numbers<[1], [0], [0], [1], [0, 0, 1, 1], [], []>} : vector<16x64xf32>, vector<64x192xf32>, vector<16x192xf32> -> vector<16x192xf32>
    %c0_5 = arith.constant 0 : index
    %c0_6 = arith.constant 0 : index
    %7 = vector.load %arg2[%c0_5, %c0_6] : memref<1x192xf32, #tpu.memory_space<vmem>>, vector<1x192xf32>
    %8 = vector.broadcast %7 : vector<1x192xf32> to vector<16x192xf32>
    %9 = arith.addf %6, %8 : vector<16x192xf32>
    %c0_7 = arith.constant 0 : index
    %c0_8 = arith.constant 0 : index
    %10 = vector.load %arg3[%c0_7, %c0_8] : memref<32x96xf32, #tpu.memory_space<vmem>>, vector<32x96xf32>
    %c0_9 = arith.constant 0 : index
    %c0_10 = arith.constant 0 : index
    %11 = vector.load %arg4[%c0_9, %c0_10] : memref<32x96xf32, #tpu.memory_space<vmem>>, vector<32x96xf32>
    %c0_11 = arith.constant 0 : index
    %c0_12 = arith.constant 0 : index
    %12 = vector.load %arg5[%c0_11, %c0_12] : memref<1x32xf32, #tpu.memory_space<vmem>>, vector<1x32xf32>
    %c0_13 = arith.constant 0 : index
    %c0_14 = arith.constant 0 : index
    %13 = vector.load %arg6[%c0_13, %c0_14] : memref<1x32xf32, #tpu.memory_space<vmem>>, vector<1x32xf32>
    %cst_15 = arith.constant 0.000000e+00 : f32
    %14 = vector.broadcast %cst_15 : f32 to vector<2x32xf32>
    %cst_16 = arith.constant 0.000000e+00 : f32
    %15 = vector.broadcast %cst_16 : f32 to vector<2x32xf32>
    %16 = vector.extract_strided_slice %9 {offsets = [0, 0], sizes = [2, 96], strides = [1, 1]} : vector<16x192xf32> to vector<2x96xf32>
    %cst_17 = arith.constant dense<0.000000e+00> : vector<2x96xf32>
    %17 = tpu.matmul %14, %10, %cst_17 {dimension_numbers = #tpu.dot_dimension_numbers<[1], [0], [0], [1], [0, 0, 1, 1], [], []>} : vector<2x32xf32>, vector<32x96xf32>, vector<2x96xf32> -> vector<2x96xf32>
    %18 = vector.extract_strided_slice %16 {offsets = [0, 0], sizes = [2, 32], strides = [1, 1]} : vector<2x96xf32> to vector<2x32xf32>
    %19 = vector.extract_strided_slice %17 {offsets = [0, 0], sizes = [2, 32], strides = [1, 1]} : vector<2x96xf32> to vector<2x32xf32>
    %20 = arith.addf %18, %19 : vector<2x32xf32>
    %21 = arith.negf %20 : vector<2x32xf32>
    %22 = math.exp %21 : vector<2x32xf32>
    %cst_18 = arith.constant 1.000000e+00 : f32
    %23 = vector.broadcast %cst_18 : f32 to vector<2x32xf32>
    %24 = arith.addf %23, %22 : vector<2x32xf32>
    %25 = arith.divf %23, %24 : vector<2x32xf32>
    %26 = vector.extract_strided_slice %16 {offsets = [0, 32], sizes = [2, 32], strides = [1, 1]} : vector<2x96xf32> to vector<2x32xf32>
    %27 = vector.extract_strided_slice %17 {offsets = [0, 32], sizes = [2, 32], strides = [1, 1]} : vector<2x96xf32> to vector<2x32xf32>
    %28 = arith.addf %26, %27 : vector<2x32xf32>
    %29 = arith.negf %28 : vector<2x32xf32>
    %30 = math.exp %29 : vector<2x32xf32>
    %cst_19 = arith.constant 1.000000e+00 : f32
    %31 = vector.broadcast %cst_19 : f32 to vector<2x32xf32>
    %32 = arith.addf %31, %30 : vector<2x32xf32>
    %33 = arith.divf %31, %32 : vector<2x32xf32>
    %34 = vector.extract_strided_slice %16 {offsets = [0, 64], sizes = [2, 32], strides = [1, 1]} : vector<2x96xf32> to vector<2x32xf32>
    %35 = vector.extract_strided_slice %17 {offsets = [0, 64], sizes = [2, 32], strides = [1, 1]} : vector<2x96xf32> to vector<2x32xf32>
    %36 = vector.broadcast %12 : vector<1x32xf32> to vector<2x32xf32>
    %37 = arith.addf %35, %36 : vector<2x32xf32>
    %38 = arith.mulf %25, %37 : vector<2x32xf32>
    %39 = arith.addf %34, %38 : vector<2x32xf32>
    %40 = math.tanh %39 : vector<2x32xf32>
    %cst_20 = arith.constant 1.000000e+00 : f32
    %41 = vector.broadcast %cst_20 : f32 to vector<2x32xf32>
    %42 = arith.subf %41, %33 : vector<2x32xf32>
    %43 = arith.mulf %42, %40 : vector<2x32xf32>
    %44 = arith.mulf %33, %14 : vector<2x32xf32>
    %45 = arith.addf %43, %44 : vector<2x32xf32>
    %c0_21 = arith.constant 0 : index
    %c0_22 = arith.constant 0 : index
    %46 = vector.load %arg20[%c0_21, %c0_22] : memref<16x64xf32, #tpu.memory_space<vmem>>, vector<2x32xf32>
    tpu.vector_store %arg20[%c0_21, %c0_22], %45 {strides = array<i32>} : memref<16x64xf32, #tpu.memory_space<vmem>>, vector<2x32xf32>,
    %47 = vector.extract_strided_slice %9 {offsets = [14, 96], sizes = [2, 96], strides = [1, 1]} : vector<16x192xf32> to vector<2x96xf32>
    %cst_23 = arith.constant dense<0.000000e+00> : vector<2x96xf32>
    %48 = tpu.matmul %15, %11, %cst_23 {dimension_numbers = #tpu.dot_dimension_numbers<[1], [0], [0], [1], [0, 0, 1, 1], [], []>} : vector<2x32xf32>, vector<32x96xf32>, vector<2x96xf32> -> vector<2x96xf32>
    %49 = vector.extract_strided_slice %47 {offsets = [0, 0], sizes = [2, 32], strides = [1, 1]} : vector<2x96xf32> to vector<2x32xf32>
    %50 = vector.extract_strided_slice %48 {offsets = [0, 0], sizes = [2, 32], strides = [1, 1]} : vector<2x96xf32> to vector<2x32xf32>
    %51 = arith.addf %49, %50 : vector<2x32xf32>
    %52 = arith.negf %51 : vector<2x32xf32>
    %53 = math.exp %52 : vector<2x32xf32>
    %cst_24 = arith.constant 1.000000e+00 : f32
    %54 = vector.broadcast %cst_24 : f32 to vector<2x32xf32>
    %55 = arith.addf %54, %53 : vector<2x32xf32>
    %56 = arith.divf %54, %55 : vector<2x32xf32>
    %57 = vector.extract_strided_slice %47 {offsets = [0, 32], sizes = [2, 32], strides = [1, 1]} : vector<2x96xf32> to vector<2x32xf32>
    %58 = vector.extract_strided_slice %48 {offsets = [0, 32], sizes = [2, 32], strides = [1, 1]} : vector<2x96xf32> to vector<2x32xf32>
    %59 = arith.addf %57, %58 : vector<2x32xf32>
    %60 = arith.negf %59 : vector<2x32xf32>
    %61 = math.exp %60 : vector<2x32xf32>
    %cst_25 = arith.constant 1.000000e+00 : f32
    %62 = vector.broadcast %cst_25 : f32 to vector<2x32xf32>
    %63 = arith.addf %62, %61 : vector<2x32xf32>
    %64 = arith.divf %62, %63 : vector<2x32xf32>
    %65 = vector.extract_strided_slice %47 {offsets = [0, 64], sizes = [2, 32], strides = [1, 1]} : vector<2x96xf32> to vector<2x32xf32>
    %66 = vector.extract_strided_slice %48 {offsets = [0, 64], sizes = [2, 32], strides = [1, 1]} : vector<2x96xf32> to vector<2x32xf32>
    %67 = vector.broadcast %13 : vector<1x32xf32> to vector<2x32xf32>
    %68 = arith.addf %66, %67 : vector<2x32xf32>
    %69 = arith.mulf %56, %68 : vector<2x32xf32>
    %70 = arith.addf %65, %69 : vector<2x32xf32>
    %71 = math.tanh %70 : vector<2x32xf32>
    %cst_26 = arith.constant 1.000000e+00 : f32
    %72 = vector.broadcast %cst_26 : f32 to vector<2x32xf32>
    %73 = arith.subf %72, %64 : vector<2x32xf32>
    %74 = arith.mulf %73, %71 : vector<2x32xf32>
    %75 = arith.mulf %64, %15 : vector<2x32xf32>
    %76 = arith.addf %74, %75 : vector<2x32xf32>
    %c14 = arith.constant 14 : index
    %c32 = arith.constant 32 : index
    %77 = vector.load %arg20[%c14, %c32] : memref<16x64xf32, #tpu.memory_space<vmem>>, vector<2x32xf32>
    tpu.vector_store %arg20[%c14, %c32], %76 {strides = array<i32>} : memref<16x64xf32, #tpu.memory_space<vmem>>, vector<2x32xf32>,
    %78 = vector.extract_strided_slice %9 {offsets = [2, 0], sizes = [2, 96], strides = [1, 1]} : vector<16x192xf32> to vector<2x96xf32>
    %cst_27 = arith.constant dense<0.000000e+00> : vector<2x96xf32>
    %79 = tpu.matmul %45, %10, %cst_27 {dimension_numbers = #tpu.dot_dimension_numbers<[1], [0], [0], [1], [0, 0, 1, 1], [], []>} : vector<2x32xf32>, vector<32x96xf32>, vector<2x96xf32> -> vector<2x96xf32>
    %80 = vector.extract_strided_slice %78 {offsets = [0, 0], sizes = [2, 32], strides = [1, 1]} : vector<2x96xf32> to vector<2x32xf32>
    %81 = vector.extract_strided_slice %79 {offsets = [0, 0], sizes = [2, 32], strides = [1, 1]} : vector<2x96xf32> to vector<2x32xf32>
    %82 = arith.addf %80, %81 : vector<2x32xf32>
    %83 = arith.negf %82 : vector<2x32xf32>
    %84 = math.exp %83 : vector<2x32xf32>
    %cst_28 = arith.constant 1.000000e+00 : f32
    %85 = vector.broadcast %cst_28 : f32 to vector<2x32xf32>
    %86 = arith.addf %85, %84 : vector<2x32xf32>
    %87 = arith.divf %85, %86 : vector<2x32xf32>
    %88 = vector.extract_strided_slice %78 {offsets = [0, 32], sizes = [2, 32], strides = [1, 1]} : vector<2x96xf32> to vector<2x32xf32>
    %89 = vector.extract_strided_slice %79 {offsets = [0, 32], sizes = [2, 32], strides = [1, 1]} : vector<2x96xf32> to vector<2x32xf32>
    %90 = arith.addf %88, %89 : vector<2x32xf32>
    %91 = arith.negf %90 : vector<2x32xf32>
    %92 = math.exp %91 : vector<2x32xf32>
    %cst_29 = arith.constant 1.000000e+00 : f32
    %93 = vector.broadcast %cst_29 : f32 to vector<2x32xf32>
    %94 = arith.addf %93, %92 : vector<2x32xf32>
    %95 = arith.divf %93, %94 : vector<2x32xf32>
    %96 = vector.extract_strided_slice %78 {offsets = [0, 64], sizes = [2, 32], strides = [1, 1]} : vector<2x96xf32> to vector<2x32xf32>
    %97 = vector.extract_strided_slice %79 {offsets = [0, 64], sizes = [2, 32], strides = [1, 1]} : vector<2x96xf32> to vector<2x32xf32>
    %98 = vector.broadcast %12 : vector<1x32xf32> to vector<2x32xf32>
    %99 = arith.addf %97, %98 : vector<2x32xf32>
    %100 = arith.mulf %87, %99 : vector<2x32xf32>
    %101 = arith.addf %96, %100 : vector<2x32xf32>
    %102 = math.tanh %101 : vector<2x32xf32>
    %cst_30 = arith.constant 1.000000e+00 : f32
    %103 = vector.broadcast %cst_30 : f32 to vector<2x32xf32>
    %104 = arith.subf %103, %95 : vector<2x32xf32>
    %105 = arith.mulf %104, %102 : vector<2x32xf32>
    %106 = arith.mulf %95, %45 : vector<2x32xf32>
    %107 = arith.addf %105, %106 : vector<2x32xf32>
    %c2 = arith.constant 2 : index
    %c0_31 = arith.constant 0 : index
    %108 = vector.load %arg20[%c2, %c0_31] : memref<16x64xf32, #tpu.memory_space<vmem>>, vector<2x32xf32>
    tpu.vector_store %arg20[%c2, %c0_31], %107 {strides = array<i32>} : memref<16x64xf32, #tpu.memory_space<vmem>>, vector<2x32xf32>,
    %109 = vector.extract_strided_slice %9 {offsets = [12, 96], sizes = [2, 96], strides = [1, 1]} : vector<16x192xf32> to vector<2x96xf32>
    %cst_32 = arith.constant dense<0.000000e+00> : vector<2x96xf32>
    %110 = tpu.matmul %76, %11, %cst_32 {dimension_numbers = #tpu.dot_dimension_numbers<[1], [0], [0], [1], [0, 0, 1, 1], [], []>} : vector<2x32xf32>, vector<32x96xf32>, vector<2x96xf32> -> vector<2x96xf32>
    %111 = vector.extract_strided_slice %109 {offsets = [0, 0], sizes = [2, 32], strides = [1, 1]} : vector<2x96xf32> to vector<2x32xf32>
    %112 = vector.extract_strided_slice %110 {offsets = [0, 0], sizes = [2, 32], strides = [1, 1]} : vector<2x96xf32> to vector<2x32xf32>
    %113 = arith.addf %111, %112 : vector<2x32xf32>
    %114 = arith.negf %113 : vector<2x32xf32>
    %115 = math.exp %114 : vector<2x32xf32>
    %cst_33 = arith.constant 1.000000e+00 : f32
    %116 = vector.broadcast %cst_33 : f32 to vector<2x32xf32>
    %117 = arith.addf %116, %115 : vector<2x32xf32>
    %118 = arith.divf %116, %117 : vector<2x32xf32>
    %119 = vector.extract_strided_slice %109 {offsets = [0, 32], sizes = [2, 32], strides = [1, 1]} : vector<2x96xf32> to vector<2x32xf32>
    %120 = vector.extract_strided_slice %110 {offsets = [0, 32], sizes = [2, 32], strides = [1, 1]} : vector<2x96xf32> to vector<2x32xf32>
    %121 = arith.addf %119, %120 : vector<2x32xf32>
    %122 = arith.negf %121 : vector<2x32xf32>
    %123 = math.exp %122 : vector<2x32xf32>
    %cst_34 = arith.constant 1.000000e+00 : f32
    %124 = vector.broadcast %cst_34 : f32 to vector<2x32xf32>
    %125 = arith.addf %124, %123 : vector<2x32xf32>
    %126 = arith.divf %124, %125 : vector<2x32xf32>
    %127 = vector.extract_strided_slice %109 {offsets = [0, 64], sizes = [2, 32], strides = [1, 1]} : vector<2x96xf32> to vector<2x32xf32>
    %128 = vector.extract_strided_slice %110 {offsets = [0, 64], sizes = [2, 32], strides = [1, 1]} : vector<2x96xf32> to vector<2x32xf32>
    %129 = vector.broadcast %13 : vector<1x32xf32> to vector<2x32xf32>
    %130 = arith.addf %128, %129 : vector<2x32xf32>
    %131 = arith.mulf %118, %130 : vector<2x32xf32>
    %132 = arith.addf %127, %131 : vector<2x32xf32>
    %133 = math.tanh %132 : vector<2x32xf32>
    %cst_35 = arith.constant 1.000000e+00 : f32
    %134 = vector.broadcast %cst_35 : f32 to vector<2x32xf32>
    %135 = arith.subf %134, %126 : vector<2x32xf32>
    %136 = arith.mulf %135, %133 : vector<2x32xf32>
    %137 = arith.mulf %126, %76 : vector<2x32xf32>
    %138 = arith.addf %136, %137 : vector<2x32xf32>
    %c12 = arith.constant 12 : index
    %c32_36 = arith.constant 32 : index
    %139 = vector.load %arg20[%c12, %c32_36] : memref<16x64xf32, #tpu.memory_space<vmem>>, vector<2x32xf32>
    tpu.vector_store %arg20[%c12, %c32_36], %138 {strides = array<i32>} : memref<16x64xf32, #tpu.memory_space<vmem>>, vector<2x32xf32>,
    %140 = vector.extract_strided_slice %9 {offsets = [4, 0], sizes = [2, 96], strides = [1, 1]} : vector<16x192xf32> to vector<2x96xf32>
    %cst_37 = arith.constant dense<0.000000e+00> : vector<2x96xf32>
    %141 = tpu.matmul %107, %10, %cst_37 {dimension_numbers = #tpu.dot_dimension_numbers<[1], [0], [0], [1], [0, 0, 1, 1], [], []>} : vector<2x32xf32>, vector<32x96xf32>, vector<2x96xf32> -> vector<2x96xf32>
    %142 = vector.extract_strided_slice %140 {offsets = [0, 0], sizes = [2, 32], strides = [1, 1]} : vector<2x96xf32> to vector<2x32xf32>
    %143 = vector.extract_strided_slice %141 {offsets = [0, 0], sizes = [2, 32], strides = [1, 1]} : vector<2x96xf32> to vector<2x32xf32>
    %144 = arith.addf %142, %143 : vector<2x32xf32>
    %145 = arith.negf %144 : vector<2x32xf32>
    %146 = math.exp %145 : vector<2x32xf32>
    %cst_38 = arith.constant 1.000000e+00 : f32
    %147 = vector.broadcast %cst_38 : f32 to vector<2x32xf32>
    %148 = arith.addf %147, %146 : vector<2x32xf32>
    %149 = arith.divf %147, %148 : vector<2x32xf32>
    %150 = vector.extract_strided_slice %140 {offsets = [0, 32], sizes = [2, 32], strides = [1, 1]} : vector<2x96xf32> to vector<2x32xf32>
    %151 = vector.extract_strided_slice %141 {offsets = [0, 32], sizes = [2, 32], strides = [1, 1]} : vector<2x96xf32> to vector<2x32xf32>
    %152 = arith.addf %150, %151 : vector<2x32xf32>
    %153 = arith.negf %152 : vector<2x32xf32>
    %154 = math.exp %153 : vector<2x32xf32>
    %cst_39 = arith.constant 1.000000e+00 : f32
    %155 = vector.broadcast %cst_39 : f32 to vector<2x32xf32>
    %156 = arith.addf %155, %154 : vector<2x32xf32>
    %157 = arith.divf %155, %156 : vector<2x32xf32>
    %158 = vector.extract_strided_slice %140 {offsets = [0, 64], sizes = [2, 32], strides = [1, 1]} : vector<2x96xf32> to vector<2x32xf32>
    %159 = vector.extract_strided_slice %141 {offsets = [0, 64], sizes = [2, 32], strides = [1, 1]} : vector<2x96xf32> to vector<2x32xf32>
    %160 = vector.broadcast %12 : vector<1x32xf32> to vector<2x32xf32>
    %161 = arith.addf %159, %160 : vector<2x32xf32>
    %162 = arith.mulf %149, %161 : vector<2x32xf32>
    %163 = arith.addf %158, %162 : vector<2x32xf32>
    %164 = math.tanh %163 : vector<2x32xf32>
    %cst_40 = arith.constant 1.000000e+00 : f32
    %165 = vector.broadcast %cst_40 : f32 to vector<2x32xf32>
    %166 = arith.subf %165, %157 : vector<2x32xf32>
    %167 = arith.mulf %166, %164 : vector<2x32xf32>
    %168 = arith.mulf %157, %107 : vector<2x32xf32>
    %169 = arith.addf %167, %168 : vector<2x32xf32>
    %c4 = arith.constant 4 : index
    %c0_41 = arith.constant 0 : index
    %170 = vector.load %arg20[%c4, %c0_41] : memref<16x64xf32, #tpu.memory_space<vmem>>, vector<2x32xf32>
    tpu.vector_store %arg20[%c4, %c0_41], %169 {strides = array<i32>} : memref<16x64xf32, #tpu.memory_space<vmem>>, vector<2x32xf32>,
    %171 = vector.extract_strided_slice %9 {offsets = [10, 96], sizes = [2, 96], strides = [1, 1]} : vector<16x192xf32> to vector<2x96xf32>
    %cst_42 = arith.constant dense<0.000000e+00> : vector<2x96xf32>
    %172 = tpu.matmul %138, %11, %cst_42 {dimension_numbers = #tpu.dot_dimension_numbers<[1], [0], [0], [1], [0, 0, 1, 1], [], []>} : vector<2x32xf32>, vector<32x96xf32>, vector<2x96xf32> -> vector<2x96xf32>
    %173 = vector.extract_strided_slice %171 {offsets = [0, 0], sizes = [2, 32], strides = [1, 1]} : vector<2x96xf32> to vector<2x32xf32>
    %174 = vector.extract_strided_slice %172 {offsets = [0, 0], sizes = [2, 32], strides = [1, 1]} : vector<2x96xf32> to vector<2x32xf32>
    %175 = arith.addf %173, %174 : vector<2x32xf32>
    %176 = arith.negf %175 : vector<2x32xf32>
    %177 = math.exp %176 : vector<2x32xf32>
    %cst_43 = arith.constant 1.000000e+00 : f32
    %178 = vector.broadcast %cst_43 : f32 to vector<2x32xf32>
    %179 = arith.addf %178, %177 : vector<2x32xf32>
    %180 = arith.divf %178, %179 : vector<2x32xf32>
    %181 = vector.extract_strided_slice %171 {offsets = [0, 32], sizes = [2, 32], strides = [1, 1]} : vector<2x96xf32> to vector<2x32xf32>
    %182 = vector.extract_strided_slice %172 {offsets = [0, 32], sizes = [2, 32], strides = [1, 1]} : vector<2x96xf32> to vector<2x32xf32>
    %183 = arith.addf %181, %182 : vector<2x32xf32>
    %184 = arith.negf %183 : vector<2x32xf32>
    %185 = math.exp %184 : vector<2x32xf32>
    %cst_44 = arith.constant 1.000000e+00 : f32
    %186 = vector.broadcast %cst_44 : f32 to vector<2x32xf32>
    %187 = arith.addf %186, %185 : vector<2x32xf32>
    %188 = arith.divf %186, %187 : vector<2x32xf32>
    %189 = vector.extract_strided_slice %171 {offsets = [0, 64], sizes = [2, 32], strides = [1, 1]} : vector<2x96xf32> to vector<2x32xf32>
    %190 = vector.extract_strided_slice %172 {offsets = [0, 64], sizes = [2, 32], strides = [1, 1]} : vector<2x96xf32> to vector<2x32xf32>
    %191 = vector.broadcast %13 : vector<1x32xf32> to vector<2x32xf32>
    %192 = arith.addf %190, %191 : vector<2x32xf32>
    %193 = arith.mulf %180, %192 : vector<2x32xf32>
    %194 = arith.addf %189, %193 : vector<2x32xf32>
    %195 = math.tanh %194 : vector<2x32xf32>
    %cst_45 = arith.constant 1.000000e+00 : f32
    %196 = vector.broadcast %cst_45 : f32 to vector<2x32xf32>
    %197 = arith.subf %196, %188 : vector<2x32xf32>
    %198 = arith.mulf %197, %195 : vector<2x32xf32>
    %199 = arith.mulf %188, %138 : vector<2x32xf32>
    %200 = arith.addf %198, %199 : vector<2x32xf32>
    %c10 = arith.constant 10 : index
    %c32_46 = arith.constant 32 : index
    %201 = vector.load %arg20[%c10, %c32_46] : memref<16x64xf32, #tpu.memory_space<vmem>>, vector<2x32xf32>
    tpu.vector_store %arg20[%c10, %c32_46], %200 {strides = array<i32>} : memref<16x64xf32, #tpu.memory_space<vmem>>, vector<2x32xf32>,
    %202 = vector.extract_strided_slice %9 {offsets = [6, 0], sizes = [2, 96], strides = [1, 1]} : vector<16x192xf32> to vector<2x96xf32>
    %cst_47 = arith.constant dense<0.000000e+00> : vector<2x96xf32>
    %203 = tpu.matmul %169, %10, %cst_47 {dimension_numbers = #tpu.dot_dimension_numbers<[1], [0], [0], [1], [0, 0, 1, 1], [], []>} : vector<2x32xf32>, vector<32x96xf32>, vector<2x96xf32> -> vector<2x96xf32>
    %204 = vector.extract_strided_slice %202 {offsets = [0, 0], sizes = [2, 32], strides = [1, 1]} : vector<2x96xf32> to vector<2x32xf32>
    %205 = vector.extract_strided_slice %203 {offsets = [0, 0], sizes = [2, 32], strides = [1, 1]} : vector<2x96xf32> to vector<2x32xf32>
    %206 = arith.addf %204, %205 : vector<2x32xf32>
    %207 = arith.negf %206 : vector<2x32xf32>
    %208 = math.exp %207 : vector<2x32xf32>
    %cst_48 = arith.constant 1.000000e+00 : f32
    %209 = vector.broadcast %cst_48 : f32 to vector<2x32xf32>
    %210 = arith.addf %209, %208 : vector<2x32xf32>
    %211 = arith.divf %209, %210 : vector<2x32xf32>
    %212 = vector.extract_strided_slice %202 {offsets = [0, 32], sizes = [2, 32], strides = [1, 1]} : vector<2x96xf32> to vector<2x32xf32>
    %213 = vector.extract_strided_slice %203 {offsets = [0, 32], sizes = [2, 32], strides = [1, 1]} : vector<2x96xf32> to vector<2x32xf32>
    %214 = arith.addf %212, %213 : vector<2x32xf32>
    %215 = arith.negf %214 : vector<2x32xf32>
    %216 = math.exp %215 : vector<2x32xf32>
    %cst_49 = arith.constant 1.000000e+00 : f32
    %217 = vector.broadcast %cst_49 : f32 to vector<2x32xf32>
    %218 = arith.addf %217, %216 : vector<2x32xf32>
    %219 = arith.divf %217, %218 : vector<2x32xf32>
    %220 = vector.extract_strided_slice %202 {offsets = [0, 64], sizes = [2, 32], strides = [1, 1]} : vector<2x96xf32> to vector<2x32xf32>
    %221 = vector.extract_strided_slice %203 {offsets = [0, 64], sizes = [2, 32], strides = [1, 1]} : vector<2x96xf32> to vector<2x32xf32>
    %222 = vector.broadcast %12 : vector<1x32xf32> to vector<2x32xf32>
    %223 = arith.addf %221, %222 : vector<2x32xf32>
    %224 = arith.mulf %211, %223 : vector<2x32xf32>
    %225 = arith.addf %220, %224 : vector<2x32xf32>
    %226 = math.tanh %225 : vector<2x32xf32>
    %cst_50 = arith.constant 1.000000e+00 : f32
    %227 = vector.broadcast %cst_50 : f32 to vector<2x32xf32>
    %228 = arith.subf %227, %219 : vector<2x32xf32>
    %229 = arith.mulf %228, %226 : vector<2x32xf32>
    %230 = arith.mulf %219, %169 : vector<2x32xf32>
    %231 = arith.addf %229, %230 : vector<2x32xf32>
    %c6 = arith.constant 6 : index
    %c0_51 = arith.constant 0 : index
    %232 = vector.load %arg20[%c6, %c0_51] : memref<16x64xf32, #tpu.memory_space<vmem>>, vector<2x32xf32>
    tpu.vector_store %arg20[%c6, %c0_51], %231 {strides = array<i32>} : memref<16x64xf32, #tpu.memory_space<vmem>>, vector<2x32xf32>,
    %233 = vector.extract_strided_slice %9 {offsets = [8, 96], sizes = [2, 96], strides = [1, 1]} : vector<16x192xf32> to vector<2x96xf32>
    %cst_52 = arith.constant dense<0.000000e+00> : vector<2x96xf32>
    %234 = tpu.matmul %200, %11, %cst_52 {dimension_numbers = #tpu.dot_dimension_numbers<[1], [0], [0], [1], [0, 0, 1, 1], [], []>} : vector<2x32xf32>, vector<32x96xf32>, vector<2x96xf32> -> vector<2x96xf32>
    %235 = vector.extract_strided_slice %233 {offsets = [0, 0], sizes = [2, 32], strides = [1, 1]} : vector<2x96xf32> to vector<2x32xf32>
    %236 = vector.extract_strided_slice %234 {offsets = [0, 0], sizes = [2, 32], strides = [1, 1]} : vector<2x96xf32> to vector<2x32xf32>
    %237 = arith.addf %235, %236 : vector<2x32xf32>
    %238 = arith.negf %237 : vector<2x32xf32>
    %239 = math.exp %238 : vector<2x32xf32>
    %cst_53 = arith.constant 1.000000e+00 : f32
    %240 = vector.broadcast %cst_53 : f32 to vector<2x32xf32>
    %241 = arith.addf %240, %239 : vector<2x32xf32>
    %242 = arith.divf %240, %241 : vector<2x32xf32>
    %243 = vector.extract_strided_slice %233 {offsets = [0, 32], sizes = [2, 32], strides = [1, 1]} : vector<2x96xf32> to vector<2x32xf32>
    %244 = vector.extract_strided_slice %234 {offsets = [0, 32], sizes = [2, 32], strides = [1, 1]} : vector<2x96xf32> to vector<2x32xf32>
    %245 = arith.addf %243, %244 : vector<2x32xf32>
    %246 = arith.negf %245 : vector<2x32xf32>
    %247 = math.exp %246 : vector<2x32xf32>
    %cst_54 = arith.constant 1.000000e+00 : f32
    %248 = vector.broadcast %cst_54 : f32 to vector<2x32xf32>
    %249 = arith.addf %248, %247 : vector<2x32xf32>
    %250 = arith.divf %248, %249 : vector<2x32xf32>
    %251 = vector.extract_strided_slice %233 {offsets = [0, 64], sizes = [2, 32], strides = [1, 1]} : vector<2x96xf32> to vector<2x32xf32>
    %252 = vector.extract_strided_slice %234 {offsets = [0, 64], sizes = [2, 32], strides = [1, 1]} : vector<2x96xf32> to vector<2x32xf32>
    %253 = vector.broadcast %13 : vector<1x32xf32> to vector<2x32xf32>
    %254 = arith.addf %252, %253 : vector<2x32xf32>
    %255 = arith.mulf %242, %254 : vector<2x32xf32>
    %256 = arith.addf %251, %255 : vector<2x32xf32>
    %257 = math.tanh %256 : vector<2x32xf32>
    %cst_55 = arith.constant 1.000000e+00 : f32
    %258 = vector.broadcast %cst_55 : f32 to vector<2x32xf32>
    %259 = arith.subf %258, %250 : vector<2x32xf32>
    %260 = arith.mulf %259, %257 : vector<2x32xf32>
    %261 = arith.mulf %250, %200 : vector<2x32xf32>
    %262 = arith.addf %260, %261 : vector<2x32xf32>
    %c8 = arith.constant 8 : index
    %c32_56 = arith.constant 32 : index
    %263 = vector.load %arg20[%c8, %c32_56] : memref<16x64xf32, #tpu.memory_space<vmem>>, vector<2x32xf32>
    tpu.vector_store %arg20[%c8, %c32_56], %262 {strides = array<i32>} : memref<16x64xf32, #tpu.memory_space<vmem>>, vector<2x32xf32>,
    %264 = vector.extract_strided_slice %9 {offsets = [8, 0], sizes = [2, 96], strides = [1, 1]} : vector<16x192xf32> to vector<2x96xf32>
    %cst_57 = arith.constant dense<0.000000e+00> : vector<2x96xf32>
    %265 = tpu.matmul %231, %10, %cst_57 {dimension_numbers = #tpu.dot_dimension_numbers<[1], [0], [0], [1], [0, 0, 1, 1], [], []>} : vector<2x32xf32>, vector<32x96xf32>, vector<2x96xf32> -> vector<2x96xf32>
    %266 = vector.extract_strided_slice %264 {offsets = [0, 0], sizes = [2, 32], strides = [1, 1]} : vector<2x96xf32> to vector<2x32xf32>
    %267 = vector.extract_strided_slice %265 {offsets = [0, 0], sizes = [2, 32], strides = [1, 1]} : vector<2x96xf32> to vector<2x32xf32>
    %268 = arith.addf %266, %267 : vector<2x32xf32>
    %269 = arith.negf %268 : vector<2x32xf32>
    %270 = math.exp %269 : vector<2x32xf32>
    %cst_58 = arith.constant 1.000000e+00 : f32
    %271 = vector.broadcast %cst_58 : f32 to vector<2x32xf32>
    %272 = arith.addf %271, %270 : vector<2x32xf32>
    %273 = arith.divf %271, %272 : vector<2x32xf32>
    %274 = vector.extract_strided_slice %264 {offsets = [0, 32], sizes = [2, 32], strides = [1, 1]} : vector<2x96xf32> to vector<2x32xf32>
    %275 = vector.extract_strided_slice %265 {offsets = [0, 32], sizes = [2, 32], strides = [1, 1]} : vector<2x96xf32> to vector<2x32xf32>
    %276 = arith.addf %274, %275 : vector<2x32xf32>
    %277 = arith.negf %276 : vector<2x32xf32>
    %278 = math.exp %277 : vector<2x32xf32>
    %cst_59 = arith.constant 1.000000e+00 : f32
    %279 = vector.broadcast %cst_59 : f32 to vector<2x32xf32>
    %280 = arith.addf %279, %278 : vector<2x32xf32>
    %281 = arith.divf %279, %280 : vector<2x32xf32>
    %282 = vector.extract_strided_slice %264 {offsets = [0, 64], sizes = [2, 32], strides = [1, 1]} : vector<2x96xf32> to vector<2x32xf32>
    %283 = vector.extract_strided_slice %265 {offsets = [0, 64], sizes = [2, 32], strides = [1, 1]} : vector<2x96xf32> to vector<2x32xf32>
    %284 = vector.broadcast %12 : vector<1x32xf32> to vector<2x32xf32>
    %285 = arith.addf %283, %284 : vector<2x32xf32>
    %286 = arith.mulf %273, %285 : vector<2x32xf32>
    %287 = arith.addf %282, %286 : vector<2x32xf32>
    %288 = math.tanh %287 : vector<2x32xf32>
    %cst_60 = arith.constant 1.000000e+00 : f32
    %289 = vector.broadcast %cst_60 : f32 to vector<2x32xf32>
    %290 = arith.subf %289, %281 : vector<2x32xf32>
    %291 = arith.mulf %290, %288 : vector<2x32xf32>
    %292 = arith.mulf %281, %231 : vector<2x32xf32>
    %293 = arith.addf %291, %292 : vector<2x32xf32>
    %c8_61 = arith.constant 8 : index
    %c0_62 = arith.constant 0 : index
    %294 = vector.load %arg20[%c8_61, %c0_62] : memref<16x64xf32, #tpu.memory_space<vmem>>, vector<2x32xf32>
    tpu.vector_store %arg20[%c8_61, %c0_62], %293 {strides = array<i32>} : memref<16x64xf32, #tpu.memory_space<vmem>>, vector<2x32xf32>,
    %295 = vector.extract_strided_slice %9 {offsets = [6, 96], sizes = [2, 96], strides = [1, 1]} : vector<16x192xf32> to vector<2x96xf32>
    %cst_63 = arith.constant dense<0.000000e+00> : vector<2x96xf32>
    %296 = tpu.matmul %262, %11, %cst_63 {dimension_numbers = #tpu.dot_dimension_numbers<[1], [0], [0], [1], [0, 0, 1, 1], [], []>} : vector<2x32xf32>, vector<32x96xf32>, vector<2x96xf32> -> vector<2x96xf32>
    %297 = vector.extract_strided_slice %295 {offsets = [0, 0], sizes = [2, 32], strides = [1, 1]} : vector<2x96xf32> to vector<2x32xf32>
    %298 = vector.extract_strided_slice %296 {offsets = [0, 0], sizes = [2, 32], strides = [1, 1]} : vector<2x96xf32> to vector<2x32xf32>
    %299 = arith.addf %297, %298 : vector<2x32xf32>
    %300 = arith.negf %299 : vector<2x32xf32>
    %301 = math.exp %300 : vector<2x32xf32>
    %cst_64 = arith.constant 1.000000e+00 : f32
    %302 = vector.broadcast %cst_64 : f32 to vector<2x32xf32>
    %303 = arith.addf %302, %301 : vector<2x32xf32>
    %304 = arith.divf %302, %303 : vector<2x32xf32>
    %305 = vector.extract_strided_slice %295 {offsets = [0, 32], sizes = [2, 32], strides = [1, 1]} : vector<2x96xf32> to vector<2x32xf32>
    %306 = vector.extract_strided_slice %296 {offsets = [0, 32], sizes = [2, 32], strides = [1, 1]} : vector<2x96xf32> to vector<2x32xf32>
    %307 = arith.addf %305, %306 : vector<2x32xf32>
    %308 = arith.negf %307 : vector<2x32xf32>
    %309 = math.exp %308 : vector<2x32xf32>
    %cst_65 = arith.constant 1.000000e+00 : f32
    %310 = vector.broadcast %cst_65 : f32 to vector<2x32xf32>
    %311 = arith.addf %310, %309 : vector<2x32xf32>
    %312 = arith.divf %310, %311 : vector<2x32xf32>
    %313 = vector.extract_strided_slice %295 {offsets = [0, 64], sizes = [2, 32], strides = [1, 1]} : vector<2x96xf32> to vector<2x32xf32>
    %314 = vector.extract_strided_slice %296 {offsets = [0, 64], sizes = [2, 32], strides = [1, 1]} : vector<2x96xf32> to vector<2x32xf32>
    %315 = vector.broadcast %13 : vector<1x32xf32> to vector<2x32xf32>
    %316 = arith.addf %314, %315 : vector<2x32xf32>
    %317 = arith.mulf %304, %316 : vector<2x32xf32>
    %318 = arith.addf %313, %317 : vector<2x32xf32>
    %319 = math.tanh %318 : vector<2x32xf32>
    %cst_66 = arith.constant 1.000000e+00 : f32
    %320 = vector.broadcast %cst_66 : f32 to vector<2x32xf32>
    %321 = arith.subf %320, %312 : vector<2x32xf32>
    %322 = arith.mulf %321, %319 : vector<2x32xf32>
    %323 = arith.mulf %312, %262 : vector<2x32xf32>
    %324 = arith.addf %322, %323 : vector<2x32xf32>
    %c6_67 = arith.constant 6 : index
    %c32_68 = arith.constant 32 : index
    %325 = vector.load %arg20[%c6_67, %c32_68] : memref<16x64xf32, #tpu.memory_space<vmem>>, vector<2x32xf32>
    tpu.vector_store %arg20[%c6_67, %c32_68], %324 {strides = array<i32>} : memref<16x64xf32, #tpu.memory_space<vmem>>, vector<2x32xf32>,
    %326 = vector.extract_strided_slice %9 {offsets = [10, 0], sizes = [2, 96], strides = [1, 1]} : vector<16x192xf32> to vector<2x96xf32>
    %cst_69 = arith.constant dense<0.000000e+00> : vector<2x96xf32>
    %327 = tpu.matmul %293, %10, %cst_69 {dimension_numbers = #tpu.dot_dimension_numbers<[1], [0], [0], [1], [0, 0, 1, 1], [], []>} : vector<2x32xf32>, vector<32x96xf32>, vector<2x96xf32> -> vector<2x96xf32>
    %328 = vector.extract_strided_slice %326 {offsets = [0, 0], sizes = [2, 32], strides = [1, 1]} : vector<2x96xf32> to vector<2x32xf32>
    %329 = vector.extract_strided_slice %327 {offsets = [0, 0], sizes = [2, 32], strides = [1, 1]} : vector<2x96xf32> to vector<2x32xf32>
    %330 = arith.addf %328, %329 : vector<2x32xf32>
    %331 = arith.negf %330 : vector<2x32xf32>
    %332 = math.exp %331 : vector<2x32xf32>
    %cst_70 = arith.constant 1.000000e+00 : f32
    %333 = vector.broadcast %cst_70 : f32 to vector<2x32xf32>
    %334 = arith.addf %333, %332 : vector<2x32xf32>
    %335 = arith.divf %333, %334 : vector<2x32xf32>
    %336 = vector.extract_strided_slice %326 {offsets = [0, 32], sizes = [2, 32], strides = [1, 1]} : vector<2x96xf32> to vector<2x32xf32>
    %337 = vector.extract_strided_slice %327 {offsets = [0, 32], sizes = [2, 32], strides = [1, 1]} : vector<2x96xf32> to vector<2x32xf32>
    %338 = arith.addf %336, %337 : vector<2x32xf32>
    %339 = arith.negf %338 : vector<2x32xf32>
    %340 = math.exp %339 : vector<2x32xf32>
    %cst_71 = arith.constant 1.000000e+00 : f32
    %341 = vector.broadcast %cst_71 : f32 to vector<2x32xf32>
    %342 = arith.addf %341, %340 : vector<2x32xf32>
    %343 = arith.divf %341, %342 : vector<2x32xf32>
    %344 = vector.extract_strided_slice %326 {offsets = [0, 64], sizes = [2, 32], strides = [1, 1]} : vector<2x96xf32> to vector<2x32xf32>
    %345 = vector.extract_strided_slice %327 {offsets = [0, 64], sizes = [2, 32], strides = [1, 1]} : vector<2x96xf32> to vector<2x32xf32>
    %346 = vector.broadcast %12 : vector<1x32xf32> to vector<2x32xf32>
    %347 = arith.addf %345, %346 : vector<2x32xf32>
    %348 = arith.mulf %335, %347 : vector<2x32xf32>
    %349 = arith.addf %344, %348 : vector<2x32xf32>
    %350 = math.tanh %349 : vector<2x32xf32>
    %cst_72 = arith.constant 1.000000e+00 : f32
    %351 = vector.broadcast %cst_72 : f32 to vector<2x32xf32>
    %352 = arith.subf %351, %343 : vector<2x32xf32>
    %353 = arith.mulf %352, %350 : vector<2x32xf32>
    %354 = arith.mulf %343, %293 : vector<2x32xf32>
    %355 = arith.addf %353, %354 : vector<2x32xf32>
    %c10_73 = arith.constant 10 : index
    %c0_74 = arith.constant 0 : index
    %356 = vector.load %arg20[%c10_73, %c0_74] : memref<16x64xf32, #tpu.memory_space<vmem>>, vector<2x32xf32>
    tpu.vector_store %arg20[%c10_73, %c0_74], %355 {strides = array<i32>} : memref<16x64xf32, #tpu.memory_space<vmem>>, vector<2x32xf32>,
    %357 = vector.extract_strided_slice %9 {offsets = [4, 96], sizes = [2, 96], strides = [1, 1]} : vector<16x192xf32> to vector<2x96xf32>
    %cst_75 = arith.constant dense<0.000000e+00> : vector<2x96xf32>
    %358 = tpu.matmul %324, %11, %cst_75 {dimension_numbers = #tpu.dot_dimension_numbers<[1], [0], [0], [1], [0, 0, 1, 1], [], []>} : vector<2x32xf32>, vector<32x96xf32>, vector<2x96xf32> -> vector<2x96xf32>
    %359 = vector.extract_strided_slice %357 {offsets = [0, 0], sizes = [2, 32], strides = [1, 1]} : vector<2x96xf32> to vector<2x32xf32>
    %360 = vector.extract_strided_slice %358 {offsets = [0, 0], sizes = [2, 32], strides = [1, 1]} : vector<2x96xf32> to vector<2x32xf32>
    %361 = arith.addf %359, %360 : vector<2x32xf32>
    %362 = arith.negf %361 : vector<2x32xf32>
    %363 = math.exp %362 : vector<2x32xf32>
    %cst_76 = arith.constant 1.000000e+00 : f32
    %364 = vector.broadcast %cst_76 : f32 to vector<2x32xf32>
    %365 = arith.addf %364, %363 : vector<2x32xf32>
    %366 = arith.divf %364, %365 : vector<2x32xf32>
    %367 = vector.extract_strided_slice %357 {offsets = [0, 32], sizes = [2, 32], strides = [1, 1]} : vector<2x96xf32> to vector<2x32xf32>
    %368 = vector.extract_strided_slice %358 {offsets = [0, 32], sizes = [2, 32], strides = [1, 1]} : vector<2x96xf32> to vector<2x32xf32>
    %369 = arith.addf %367, %368 : vector<2x32xf32>
    %370 = arith.negf %369 : vector<2x32xf32>
    %371 = math.exp %370 : vector<2x32xf32>
    %cst_77 = arith.constant 1.000000e+00 : f32
    %372 = vector.broadcast %cst_77 : f32 to vector<2x32xf32>
    %373 = arith.addf %372, %371 : vector<2x32xf32>
    %374 = arith.divf %372, %373 : vector<2x32xf32>
    %375 = vector.extract_strided_slice %357 {offsets = [0, 64], sizes = [2, 32], strides = [1, 1]} : vector<2x96xf32> to vector<2x32xf32>
    %376 = vector.extract_strided_slice %358 {offsets = [0, 64], sizes = [2, 32], strides = [1, 1]} : vector<2x96xf32> to vector<2x32xf32>
    %377 = vector.broadcast %13 : vector<1x32xf32> to vector<2x32xf32>
    %378 = arith.addf %376, %377 : vector<2x32xf32>
    %379 = arith.mulf %366, %378 : vector<2x32xf32>
    %380 = arith.addf %375, %379 : vector<2x32xf32>
    %381 = math.tanh %380 : vector<2x32xf32>
    %cst_78 = arith.constant 1.000000e+00 : f32
    %382 = vector.broadcast %cst_78 : f32 to vector<2x32xf32>
    %383 = arith.subf %382, %374 : vector<2x32xf32>
    %384 = arith.mulf %383, %381 : vector<2x32xf32>
    %385 = arith.mulf %374, %324 : vector<2x32xf32>
    %386 = arith.addf %384, %385 : vector<2x32xf32>
    %c4_79 = arith.constant 4 : index
    %c32_80 = arith.constant 32 : index
    %387 = vector.load %arg20[%c4_79, %c32_80] : memref<16x64xf32, #tpu.memory_space<vmem>>, vector<2x32xf32>
    tpu.vector_store %arg20[%c4_79, %c32_80], %386 {strides = array<i32>} : memref<16x64xf32, #tpu.memory_space<vmem>>, vector<2x32xf32>,
    %388 = vector.extract_strided_slice %9 {offsets = [12, 0], sizes = [2, 96], strides = [1, 1]} : vector<16x192xf32> to vector<2x96xf32>
    %cst_81 = arith.constant dense<0.000000e+00> : vector<2x96xf32>
    %389 = tpu.matmul %355, %10, %cst_81 {dimension_numbers = #tpu.dot_dimension_numbers<[1], [0], [0], [1], [0, 0, 1, 1], [], []>} : vector<2x32xf32>, vector<32x96xf32>, vector<2x96xf32> -> vector<2x96xf32>
    %390 = vector.extract_strided_slice %388 {offsets = [0, 0], sizes = [2, 32], strides = [1, 1]} : vector<2x96xf32> to vector<2x32xf32>
    %391 = vector.extract_strided_slice %389 {offsets = [0, 0], sizes = [2, 32], strides = [1, 1]} : vector<2x96xf32> to vector<2x32xf32>
    %392 = arith.addf %390, %391 : vector<2x32xf32>
    %393 = arith.negf %392 : vector<2x32xf32>
    %394 = math.exp %393 : vector<2x32xf32>
    %cst_82 = arith.constant 1.000000e+00 : f32
    %395 = vector.broadcast %cst_82 : f32 to vector<2x32xf32>
    %396 = arith.addf %395, %394 : vector<2x32xf32>
    %397 = arith.divf %395, %396 : vector<2x32xf32>
    %398 = vector.extract_strided_slice %388 {offsets = [0, 32], sizes = [2, 32], strides = [1, 1]} : vector<2x96xf32> to vector<2x32xf32>
    %399 = vector.extract_strided_slice %389 {offsets = [0, 32], sizes = [2, 32], strides = [1, 1]} : vector<2x96xf32> to vector<2x32xf32>
    %400 = arith.addf %398, %399 : vector<2x32xf32>
    %401 = arith.negf %400 : vector<2x32xf32>
    %402 = math.exp %401 : vector<2x32xf32>
    %cst_83 = arith.constant 1.000000e+00 : f32
    %403 = vector.broadcast %cst_83 : f32 to vector<2x32xf32>
    %404 = arith.addf %403, %402 : vector<2x32xf32>
    %405 = arith.divf %403, %404 : vector<2x32xf32>
    %406 = vector.extract_strided_slice %388 {offsets = [0, 64], sizes = [2, 32], strides = [1, 1]} : vector<2x96xf32> to vector<2x32xf32>
    %407 = vector.extract_strided_slice %389 {offsets = [0, 64], sizes = [2, 32], strides = [1, 1]} : vector<2x96xf32> to vector<2x32xf32>
    %408 = vector.broadcast %12 : vector<1x32xf32> to vector<2x32xf32>
    %409 = arith.addf %407, %408 : vector<2x32xf32>
    %410 = arith.mulf %397, %409 : vector<2x32xf32>
    %411 = arith.addf %406, %410 : vector<2x32xf32>
    %412 = math.tanh %411 : vector<2x32xf32>
    %cst_84 = arith.constant 1.000000e+00 : f32
    %413 = vector.broadcast %cst_84 : f32 to vector<2x32xf32>
    %414 = arith.subf %413, %405 : vector<2x32xf32>
    %415 = arith.mulf %414, %412 : vector<2x32xf32>
    %416 = arith.mulf %405, %355 : vector<2x32xf32>
    %417 = arith.addf %415, %416 : vector<2x32xf32>
    %c12_85 = arith.constant 12 : index
    %c0_86 = arith.constant 0 : index
    %418 = vector.load %arg20[%c12_85, %c0_86] : memref<16x64xf32, #tpu.memory_space<vmem>>, vector<2x32xf32>
    tpu.vector_store %arg20[%c12_85, %c0_86], %417 {strides = array<i32>} : memref<16x64xf32, #tpu.memory_space<vmem>>, vector<2x32xf32>,
    %419 = vector.extract_strided_slice %9 {offsets = [2, 96], sizes = [2, 96], strides = [1, 1]} : vector<16x192xf32> to vector<2x96xf32>
    %cst_87 = arith.constant dense<0.000000e+00> : vector<2x96xf32>
    %420 = tpu.matmul %386, %11, %cst_87 {dimension_numbers = #tpu.dot_dimension_numbers<[1], [0], [0], [1], [0, 0, 1, 1], [], []>} : vector<2x32xf32>, vector<32x96xf32>, vector<2x96xf32> -> vector<2x96xf32>
    %421 = vector.extract_strided_slice %419 {offsets = [0, 0], sizes = [2, 32], strides = [1, 1]} : vector<2x96xf32> to vector<2x32xf32>
    %422 = vector.extract_strided_slice %420 {offsets = [0, 0], sizes = [2, 32], strides = [1, 1]} : vector<2x96xf32> to vector<2x32xf32>
    %423 = arith.addf %421, %422 : vector<2x32xf32>
    %424 = arith.negf %423 : vector<2x32xf32>
    %425 = math.exp %424 : vector<2x32xf32>
    %cst_88 = arith.constant 1.000000e+00 : f32
    %426 = vector.broadcast %cst_88 : f32 to vector<2x32xf32>
    %427 = arith.addf %426, %425 : vector<2x32xf32>
    %428 = arith.divf %426, %427 : vector<2x32xf32>
    %429 = vector.extract_strided_slice %419 {offsets = [0, 32], sizes = [2, 32], strides = [1, 1]} : vector<2x96xf32> to vector<2x32xf32>
    %430 = vector.extract_strided_slice %420 {offsets = [0, 32], sizes = [2, 32], strides = [1, 1]} : vector<2x96xf32> to vector<2x32xf32>
    %431 = arith.addf %429, %430 : vector<2x32xf32>
    %432 = arith.negf %431 : vector<2x32xf32>
    %433 = math.exp %432 : vector<2x32xf32>
    %cst_89 = arith.constant 1.000000e+00 : f32
    %434 = vector.broadcast %cst_89 : f32 to vector<2x32xf32>
    %435 = arith.addf %434, %433 : vector<2x32xf32>
    %436 = arith.divf %434, %435 : vector<2x32xf32>
    %437 = vector.extract_strided_slice %419 {offsets = [0, 64], sizes = [2, 32], strides = [1, 1]} : vector<2x96xf32> to vector<2x32xf32>
    %438 = vector.extract_strided_slice %420 {offsets = [0, 64], sizes = [2, 32], strides = [1, 1]} : vector<2x96xf32> to vector<2x32xf32>
    %439 = vector.broadcast %13 : vector<1x32xf32> to vector<2x32xf32>
    %440 = arith.addf %438, %439 : vector<2x32xf32>
    %441 = arith.mulf %428, %440 : vector<2x32xf32>
    %442 = arith.addf %437, %441 : vector<2x32xf32>
    %443 = math.tanh %442 : vector<2x32xf32>
    %cst_90 = arith.constant 1.000000e+00 : f32
    %444 = vector.broadcast %cst_90 : f32 to vector<2x32xf32>
    %445 = arith.subf %444, %436 : vector<2x32xf32>
    %446 = arith.mulf %445, %443 : vector<2x32xf32>
    %447 = arith.mulf %436, %386 : vector<2x32xf32>
    %448 = arith.addf %446, %447 : vector<2x32xf32>
    %c2_91 = arith.constant 2 : index
    %c32_92 = arith.constant 32 : index
    %449 = vector.load %arg20[%c2_91, %c32_92] : memref<16x64xf32, #tpu.memory_space<vmem>>, vector<2x32xf32>
    tpu.vector_store %arg20[%c2_91, %c32_92], %448 {strides = array<i32>} : memref<16x64xf32, #tpu.memory_space<vmem>>, vector<2x32xf32>,
    %450 = vector.extract_strided_slice %9 {offsets = [14, 0], sizes = [2, 96], strides = [1, 1]} : vector<16x192xf32> to vector<2x96xf32>
    %cst_93 = arith.constant dense<0.000000e+00> : vector<2x96xf32>
    %451 = tpu.matmul %417, %10, %cst_93 {dimension_numbers = #tpu.dot_dimension_numbers<[1], [0], [0], [1], [0, 0, 1, 1], [], []>} : vector<2x32xf32>, vector<32x96xf32>, vector<2x96xf32> -> vector<2x96xf32>
    %452 = vector.extract_strided_slice %450 {offsets = [0, 0], sizes = [2, 32], strides = [1, 1]} : vector<2x96xf32> to vector<2x32xf32>
    %453 = vector.extract_strided_slice %451 {offsets = [0, 0], sizes = [2, 32], strides = [1, 1]} : vector<2x96xf32> to vector<2x32xf32>
    %454 = arith.addf %452, %453 : vector<2x32xf32>
    %455 = arith.negf %454 : vector<2x32xf32>
    %456 = math.exp %455 : vector<2x32xf32>
    %cst_94 = arith.constant 1.000000e+00 : f32
    %457 = vector.broadcast %cst_94 : f32 to vector<2x32xf32>
    %458 = arith.addf %457, %456 : vector<2x32xf32>
    %459 = arith.divf %457, %458 : vector<2x32xf32>
    %460 = vector.extract_strided_slice %450 {offsets = [0, 32], sizes = [2, 32], strides = [1, 1]} : vector<2x96xf32> to vector<2x32xf32>
    %461 = vector.extract_strided_slice %451 {offsets = [0, 32], sizes = [2, 32], strides = [1, 1]} : vector<2x96xf32> to vector<2x32xf32>
    %462 = arith.addf %460, %461 : vector<2x32xf32>
    %463 = arith.negf %462 : vector<2x32xf32>
    %464 = math.exp %463 : vector<2x32xf32>
    %cst_95 = arith.constant 1.000000e+00 : f32
    %465 = vector.broadcast %cst_95 : f32 to vector<2x32xf32>
    %466 = arith.addf %465, %464 : vector<2x32xf32>
    %467 = arith.divf %465, %466 : vector<2x32xf32>
    %468 = vector.extract_strided_slice %450 {offsets = [0, 64], sizes = [2, 32], strides = [1, 1]} : vector<2x96xf32> to vector<2x32xf32>
    %469 = vector.extract_strided_slice %451 {offsets = [0, 64], sizes = [2, 32], strides = [1, 1]} : vector<2x96xf32> to vector<2x32xf32>
    %470 = vector.broadcast %12 : vector<1x32xf32> to vector<2x32xf32>
    %471 = arith.addf %469, %470 : vector<2x32xf32>
    %472 = arith.mulf %459, %471 : vector<2x32xf32>
    %473 = arith.addf %468, %472 : vector<2x32xf32>
    %474 = math.tanh %473 : vector<2x32xf32>
    %cst_96 = arith.constant 1.000000e+00 : f32
    %475 = vector.broadcast %cst_96 : f32 to vector<2x32xf32>
    %476 = arith.subf %475, %467 : vector<2x32xf32>
    %477 = arith.mulf %476, %474 : vector<2x32xf32>
    %478 = arith.mulf %467, %417 : vector<2x32xf32>
    %479 = arith.addf %477, %478 : vector<2x32xf32>
    %c14_97 = arith.constant 14 : index
    %c0_98 = arith.constant 0 : index
    %480 = vector.load %arg20[%c14_97, %c0_98] : memref<16x64xf32, #tpu.memory_space<vmem>>, vector<2x32xf32>
    tpu.vector_store %arg20[%c14_97, %c0_98], %479 {strides = array<i32>} : memref<16x64xf32, #tpu.memory_space<vmem>>, vector<2x32xf32>,
    %481 = vector.extract_strided_slice %9 {offsets = [0, 96], sizes = [2, 96], strides = [1, 1]} : vector<16x192xf32> to vector<2x96xf32>
    %cst_99 = arith.constant dense<0.000000e+00> : vector<2x96xf32>
    %482 = tpu.matmul %448, %11, %cst_99 {dimension_numbers = #tpu.dot_dimension_numbers<[1], [0], [0], [1], [0, 0, 1, 1], [], []>} : vector<2x32xf32>, vector<32x96xf32>, vector<2x96xf32> -> vector<2x96xf32>
    %483 = vector.extract_strided_slice %481 {offsets = [0, 0], sizes = [2, 32], strides = [1, 1]} : vector<2x96xf32> to vector<2x32xf32>
    %484 = vector.extract_strided_slice %482 {offsets = [0, 0], sizes = [2, 32], strides = [1, 1]} : vector<2x96xf32> to vector<2x32xf32>
    %485 = arith.addf %483, %484 : vector<2x32xf32>
    %486 = arith.negf %485 : vector<2x32xf32>
    %487 = math.exp %486 : vector<2x32xf32>
    %cst_100 = arith.constant 1.000000e+00 : f32
    %488 = vector.broadcast %cst_100 : f32 to vector<2x32xf32>
    %489 = arith.addf %488, %487 : vector<2x32xf32>
    %490 = arith.divf %488, %489 : vector<2x32xf32>
    %491 = vector.extract_strided_slice %481 {offsets = [0, 32], sizes = [2, 32], strides = [1, 1]} : vector<2x96xf32> to vector<2x32xf32>
    %492 = vector.extract_strided_slice %482 {offsets = [0, 32], sizes = [2, 32], strides = [1, 1]} : vector<2x96xf32> to vector<2x32xf32>
    %493 = arith.addf %491, %492 : vector<2x32xf32>
    %494 = arith.negf %493 : vector<2x32xf32>
    %495 = math.exp %494 : vector<2x32xf32>
    %cst_101 = arith.constant 1.000000e+00 : f32
    %496 = vector.broadcast %cst_101 : f32 to vector<2x32xf32>
    %497 = arith.addf %496, %495 : vector<2x32xf32>
    %498 = arith.divf %496, %497 : vector<2x32xf32>
    %499 = vector.extract_strided_slice %481 {offsets = [0, 64], sizes = [2, 32], strides = [1, 1]} : vector<2x96xf32> to vector<2x32xf32>
    %500 = vector.extract_strided_slice %482 {offsets = [0, 64], sizes = [2, 32], strides = [1, 1]} : vector<2x96xf32> to vector<2x32xf32>
    %501 = vector.broadcast %13 : vector<1x32xf32> to vector<2x32xf32>
    %502 = arith.addf %500, %501 : vector<2x32xf32>
    %503 = arith.mulf %490, %502 : vector<2x32xf32>
    %504 = arith.addf %499, %503 : vector<2x32xf32>
    %505 = math.tanh %504 : vector<2x32xf32>
    %cst_102 = arith.constant 1.000000e+00 : f32
    %506 = vector.broadcast %cst_102 : f32 to vector<2x32xf32>
    %507 = arith.subf %506, %498 : vector<2x32xf32>
    %508 = arith.mulf %507, %505 : vector<2x32xf32>
    %509 = arith.mulf %498, %448 : vector<2x32xf32>
    %510 = arith.addf %508, %509 : vector<2x32xf32>
    %c0_103 = arith.constant 0 : index
    %c32_104 = arith.constant 32 : index
    %511 = vector.load %arg20[%c0_103, %c32_104] : memref<16x64xf32, #tpu.memory_space<vmem>>, vector<2x32xf32>
    tpu.vector_store %arg20[%c0_103, %c32_104], %510 {strides = array<i32>} : memref<16x64xf32, #tpu.memory_space<vmem>>, vector<2x32xf32>,
    %c0_105 = arith.constant 0 : index
    %c0_106 = arith.constant 0 : index
    %512 = vector.load %arg20[%c0_105, %c0_106] : memref<16x64xf32, #tpu.memory_space<vmem>>, vector<16x64xf32>
    %c0_107 = arith.constant 0 : index
    %c0_108 = arith.constant 0 : index
    %513 = vector.load %arg7[%c0_107, %c0_108] : memref<64x192xf32, #tpu.memory_space<vmem>>, vector<64x192xf32>
    %cst_109 = arith.constant dense<0.000000e+00> : vector<16x192xf32>
    %514 = tpu.matmul %512, %513, %cst_109 {dimension_numbers = #tpu.dot_dimension_numbers<[1], [0], [0], [1], [0, 0, 1, 1], [], []>} : vector<16x64xf32>, vector<64x192xf32>, vector<16x192xf32> -> vector<16x192xf32>
    %c0_110 = arith.constant 0 : index
    %c0_111 = arith.constant 0 : index
    %515 = vector.load %arg8[%c0_110, %c0_111] : memref<1x192xf32, #tpu.memory_space<vmem>>, vector<1x192xf32>
    %516 = vector.broadcast %515 : vector<1x192xf32> to vector<16x192xf32>
    %517 = arith.addf %514, %516 : vector<16x192xf32>
    %c0_112 = arith.constant 0 : index
    %c0_113 = arith.constant 0 : index
    %518 = vector.load %arg9[%c0_112, %c0_113] : memref<32x96xf32, #tpu.memory_space<vmem>>, vector<32x96xf32>
    %c0_114 = arith.constant 0 : index
    %c0_115 = arith.constant 0 : index
    %519 = vector.load %arg10[%c0_114, %c0_115] : memref<32x96xf32, #tpu.memory_space<vmem>>, vector<32x96xf32>
    %c0_116 = arith.constant 0 : index
    %c0_117 = arith.constant 0 : index
    %520 = vector.load %arg11[%c0_116, %c0_117] : memref<1x32xf32, #tpu.memory_space<vmem>>, vector<1x32xf32>
    %c0_118 = arith.constant 0 : index
    %c0_119 = arith.constant 0 : index
    %521 = vector.load %arg12[%c0_118, %c0_119] : memref<1x32xf32, #tpu.memory_space<vmem>>, vector<1x32xf32>
    %cst_120 = arith.constant 0.000000e+00 : f32
    %522 = vector.broadcast %cst_120 : f32 to vector<2x32xf32>
    %cst_121 = arith.constant 0.000000e+00 : f32
    %523 = vector.broadcast %cst_121 : f32 to vector<2x32xf32>
    %524 = vector.extract_strided_slice %517 {offsets = [0, 0], sizes = [2, 96], strides = [1, 1]} : vector<16x192xf32> to vector<2x96xf32>
    %cst_122 = arith.constant dense<0.000000e+00> : vector<2x96xf32>
    %525 = tpu.matmul %522, %518, %cst_122 {dimension_numbers = #tpu.dot_dimension_numbers<[1], [0], [0], [1], [0, 0, 1, 1], [], []>} : vector<2x32xf32>, vector<32x96xf32>, vector<2x96xf32> -> vector<2x96xf32>
    %526 = vector.extract_strided_slice %524 {offsets = [0, 0], sizes = [2, 32], strides = [1, 1]} : vector<2x96xf32> to vector<2x32xf32>
    %527 = vector.extract_strided_slice %525 {offsets = [0, 0], sizes = [2, 32], strides = [1, 1]} : vector<2x96xf32> to vector<2x32xf32>
    %528 = arith.addf %526, %527 : vector<2x32xf32>
    %529 = arith.negf %528 : vector<2x32xf32>
    %530 = math.exp %529 : vector<2x32xf32>
    %cst_123 = arith.constant 1.000000e+00 : f32
    %531 = vector.broadcast %cst_123 : f32 to vector<2x32xf32>
    %532 = arith.addf %531, %530 : vector<2x32xf32>
    %533 = arith.divf %531, %532 : vector<2x32xf32>
    %534 = vector.extract_strided_slice %524 {offsets = [0, 32], sizes = [2, 32], strides = [1, 1]} : vector<2x96xf32> to vector<2x32xf32>
    %535 = vector.extract_strided_slice %525 {offsets = [0, 32], sizes = [2, 32], strides = [1, 1]} : vector<2x96xf32> to vector<2x32xf32>
    %536 = arith.addf %534, %535 : vector<2x32xf32>
    %537 = arith.negf %536 : vector<2x32xf32>
    %538 = math.exp %537 : vector<2x32xf32>
    %cst_124 = arith.constant 1.000000e+00 : f32
    %539 = vector.broadcast %cst_124 : f32 to vector<2x32xf32>
    %540 = arith.addf %539, %538 : vector<2x32xf32>
    %541 = arith.divf %539, %540 : vector<2x32xf32>
    %542 = vector.extract_strided_slice %524 {offsets = [0, 64], sizes = [2, 32], strides = [1, 1]} : vector<2x96xf32> to vector<2x32xf32>
    %543 = vector.extract_strided_slice %525 {offsets = [0, 64], sizes = [2, 32], strides = [1, 1]} : vector<2x96xf32> to vector<2x32xf32>
    %544 = vector.broadcast %520 : vector<1x32xf32> to vector<2x32xf32>
    %545 = arith.addf %543, %544 : vector<2x32xf32>
    %546 = arith.mulf %533, %545 : vector<2x32xf32>
    %547 = arith.addf %542, %546 : vector<2x32xf32>
    %548 = math.tanh %547 : vector<2x32xf32>
    %cst_125 = arith.constant 1.000000e+00 : f32
    %549 = vector.broadcast %cst_125 : f32 to vector<2x32xf32>
    %550 = arith.subf %549, %541 : vector<2x32xf32>
    %551 = arith.mulf %550, %548 : vector<2x32xf32>
    %552 = arith.mulf %541, %522 : vector<2x32xf32>
    %553 = arith.addf %551, %552 : vector<2x32xf32>
    %c0_126 = arith.constant 0 : index
    %c0_127 = arith.constant 0 : index
    %554 = vector.load %arg21[%c0_126, %c0_127] : memref<16x64xf32, #tpu.memory_space<vmem>>, vector<2x32xf32>
    tpu.vector_store %arg21[%c0_126, %c0_127], %553 {strides = array<i32>} : memref<16x64xf32, #tpu.memory_space<vmem>>, vector<2x32xf32>,
    %555 = vector.extract_strided_slice %517 {offsets = [14, 96], sizes = [2, 96], strides = [1, 1]} : vector<16x192xf32> to vector<2x96xf32>
    %cst_128 = arith.constant dense<0.000000e+00> : vector<2x96xf32>
    %556 = tpu.matmul %523, %519, %cst_128 {dimension_numbers = #tpu.dot_dimension_numbers<[1], [0], [0], [1], [0, 0, 1, 1], [], []>} : vector<2x32xf32>, vector<32x96xf32>, vector<2x96xf32> -> vector<2x96xf32>
    %557 = vector.extract_strided_slice %555 {offsets = [0, 0], sizes = [2, 32], strides = [1, 1]} : vector<2x96xf32> to vector<2x32xf32>
    %558 = vector.extract_strided_slice %556 {offsets = [0, 0], sizes = [2, 32], strides = [1, 1]} : vector<2x96xf32> to vector<2x32xf32>
    %559 = arith.addf %557, %558 : vector<2x32xf32>
    %560 = arith.negf %559 : vector<2x32xf32>
    %561 = math.exp %560 : vector<2x32xf32>
    %cst_129 = arith.constant 1.000000e+00 : f32
    %562 = vector.broadcast %cst_129 : f32 to vector<2x32xf32>
    %563 = arith.addf %562, %561 : vector<2x32xf32>
    %564 = arith.divf %562, %563 : vector<2x32xf32>
    %565 = vector.extract_strided_slice %555 {offsets = [0, 32], sizes = [2, 32], strides = [1, 1]} : vector<2x96xf32> to vector<2x32xf32>
    %566 = vector.extract_strided_slice %556 {offsets = [0, 32], sizes = [2, 32], strides = [1, 1]} : vector<2x96xf32> to vector<2x32xf32>
    %567 = arith.addf %565, %566 : vector<2x32xf32>
    %568 = arith.negf %567 : vector<2x32xf32>
    %569 = math.exp %568 : vector<2x32xf32>
    %cst_130 = arith.constant 1.000000e+00 : f32
    %570 = vector.broadcast %cst_130 : f32 to vector<2x32xf32>
    %571 = arith.addf %570, %569 : vector<2x32xf32>
    %572 = arith.divf %570, %571 : vector<2x32xf32>
    %573 = vector.extract_strided_slice %555 {offsets = [0, 64], sizes = [2, 32], strides = [1, 1]} : vector<2x96xf32> to vector<2x32xf32>
    %574 = vector.extract_strided_slice %556 {offsets = [0, 64], sizes = [2, 32], strides = [1, 1]} : vector<2x96xf32> to vector<2x32xf32>
    %575 = vector.broadcast %521 : vector<1x32xf32> to vector<2x32xf32>
    %576 = arith.addf %574, %575 : vector<2x32xf32>
    %577 = arith.mulf %564, %576 : vector<2x32xf32>
    %578 = arith.addf %573, %577 : vector<2x32xf32>
    %579 = math.tanh %578 : vector<2x32xf32>
    %cst_131 = arith.constant 1.000000e+00 : f32
    %580 = vector.broadcast %cst_131 : f32 to vector<2x32xf32>
    %581 = arith.subf %580, %572 : vector<2x32xf32>
    %582 = arith.mulf %581, %579 : vector<2x32xf32>
    %583 = arith.mulf %572, %523 : vector<2x32xf32>
    %584 = arith.addf %582, %583 : vector<2x32xf32>
    %c14_132 = arith.constant 14 : index
    %c32_133 = arith.constant 32 : index
    %585 = vector.load %arg21[%c14_132, %c32_133] : memref<16x64xf32, #tpu.memory_space<vmem>>, vector<2x32xf32>
    tpu.vector_store %arg21[%c14_132, %c32_133], %584 {strides = array<i32>} : memref<16x64xf32, #tpu.memory_space<vmem>>, vector<2x32xf32>,
    %586 = vector.extract_strided_slice %517 {offsets = [2, 0], sizes = [2, 96], strides = [1, 1]} : vector<16x192xf32> to vector<2x96xf32>
    %cst_134 = arith.constant dense<0.000000e+00> : vector<2x96xf32>
    %587 = tpu.matmul %553, %518, %cst_134 {dimension_numbers = #tpu.dot_dimension_numbers<[1], [0], [0], [1], [0, 0, 1, 1], [], []>} : vector<2x32xf32>, vector<32x96xf32>, vector<2x96xf32> -> vector<2x96xf32>
    %588 = vector.extract_strided_slice %586 {offsets = [0, 0], sizes = [2, 32], strides = [1, 1]} : vector<2x96xf32> to vector<2x32xf32>
    %589 = vector.extract_strided_slice %587 {offsets = [0, 0], sizes = [2, 32], strides = [1, 1]} : vector<2x96xf32> to vector<2x32xf32>
    %590 = arith.addf %588, %589 : vector<2x32xf32>
    %591 = arith.negf %590 : vector<2x32xf32>
    %592 = math.exp %591 : vector<2x32xf32>
    %cst_135 = arith.constant 1.000000e+00 : f32
    %593 = vector.broadcast %cst_135 : f32 to vector<2x32xf32>
    %594 = arith.addf %593, %592 : vector<2x32xf32>
    %595 = arith.divf %593, %594 : vector<2x32xf32>
    %596 = vector.extract_strided_slice %586 {offsets = [0, 32], sizes = [2, 32], strides = [1, 1]} : vector<2x96xf32> to vector<2x32xf32>
    %597 = vector.extract_strided_slice %587 {offsets = [0, 32], sizes = [2, 32], strides = [1, 1]} : vector<2x96xf32> to vector<2x32xf32>
    %598 = arith.addf %596, %597 : vector<2x32xf32>
    %599 = arith.negf %598 : vector<2x32xf32>
    %600 = math.exp %599 : vector<2x32xf32>
    %cst_136 = arith.constant 1.000000e+00 : f32
    %601 = vector.broadcast %cst_136 : f32 to vector<2x32xf32>
    %602 = arith.addf %601, %600 : vector<2x32xf32>
    %603 = arith.divf %601, %602 : vector<2x32xf32>
    %604 = vector.extract_strided_slice %586 {offsets = [0, 64], sizes = [2, 32], strides = [1, 1]} : vector<2x96xf32> to vector<2x32xf32>
    %605 = vector.extract_strided_slice %587 {offsets = [0, 64], sizes = [2, 32], strides = [1, 1]} : vector<2x96xf32> to vector<2x32xf32>
    %606 = vector.broadcast %520 : vector<1x32xf32> to vector<2x32xf32>
    %607 = arith.addf %605, %606 : vector<2x32xf32>
    %608 = arith.mulf %595, %607 : vector<2x32xf32>
    %609 = arith.addf %604, %608 : vector<2x32xf32>
    %610 = math.tanh %609 : vector<2x32xf32>
    %cst_137 = arith.constant 1.000000e+00 : f32
    %611 = vector.broadcast %cst_137 : f32 to vector<2x32xf32>
    %612 = arith.subf %611, %603 : vector<2x32xf32>
    %613 = arith.mulf %612, %610 : vector<2x32xf32>
    %614 = arith.mulf %603, %553 : vector<2x32xf32>
    %615 = arith.addf %613, %614 : vector<2x32xf32>
    %c2_138 = arith.constant 2 : index
    %c0_139 = arith.constant 0 : index
    %616 = vector.load %arg21[%c2_138, %c0_139] : memref<16x64xf32, #tpu.memory_space<vmem>>, vector<2x32xf32>
    tpu.vector_store %arg21[%c2_138, %c0_139], %615 {strides = array<i32>} : memref<16x64xf32, #tpu.memory_space<vmem>>, vector<2x32xf32>,
    %617 = vector.extract_strided_slice %517 {offsets = [12, 96], sizes = [2, 96], strides = [1, 1]} : vector<16x192xf32> to vector<2x96xf32>
    %cst_140 = arith.constant dense<0.000000e+00> : vector<2x96xf32>
    %618 = tpu.matmul %584, %519, %cst_140 {dimension_numbers = #tpu.dot_dimension_numbers<[1], [0], [0], [1], [0, 0, 1, 1], [], []>} : vector<2x32xf32>, vector<32x96xf32>, vector<2x96xf32> -> vector<2x96xf32>
    %619 = vector.extract_strided_slice %617 {offsets = [0, 0], sizes = [2, 32], strides = [1, 1]} : vector<2x96xf32> to vector<2x32xf32>
    %620 = vector.extract_strided_slice %618 {offsets = [0, 0], sizes = [2, 32], strides = [1, 1]} : vector<2x96xf32> to vector<2x32xf32>
    %621 = arith.addf %619, %620 : vector<2x32xf32>
    %622 = arith.negf %621 : vector<2x32xf32>
    %623 = math.exp %622 : vector<2x32xf32>
    %cst_141 = arith.constant 1.000000e+00 : f32
    %624 = vector.broadcast %cst_141 : f32 to vector<2x32xf32>
    %625 = arith.addf %624, %623 : vector<2x32xf32>
    %626 = arith.divf %624, %625 : vector<2x32xf32>
    %627 = vector.extract_strided_slice %617 {offsets = [0, 32], sizes = [2, 32], strides = [1, 1]} : vector<2x96xf32> to vector<2x32xf32>
    %628 = vector.extract_strided_slice %618 {offsets = [0, 32], sizes = [2, 32], strides = [1, 1]} : vector<2x96xf32> to vector<2x32xf32>
    %629 = arith.addf %627, %628 : vector<2x32xf32>
    %630 = arith.negf %629 : vector<2x32xf32>
    %631 = math.exp %630 : vector<2x32xf32>
    %cst_142 = arith.constant 1.000000e+00 : f32
    %632 = vector.broadcast %cst_142 : f32 to vector<2x32xf32>
    %633 = arith.addf %632, %631 : vector<2x32xf32>
    %634 = arith.divf %632, %633 : vector<2x32xf32>
    %635 = vector.extract_strided_slice %617 {offsets = [0, 64], sizes = [2, 32], strides = [1, 1]} : vector<2x96xf32> to vector<2x32xf32>
    %636 = vector.extract_strided_slice %618 {offsets = [0, 64], sizes = [2, 32], strides = [1, 1]} : vector<2x96xf32> to vector<2x32xf32>
    %637 = vector.broadcast %521 : vector<1x32xf32> to vector<2x32xf32>
    %638 = arith.addf %636, %637 : vector<2x32xf32>
    %639 = arith.mulf %626, %638 : vector<2x32xf32>
    %640 = arith.addf %635, %639 : vector<2x32xf32>
    %641 = math.tanh %640 : vector<2x32xf32>
    %cst_143 = arith.constant 1.000000e+00 : f32
    %642 = vector.broadcast %cst_143 : f32 to vector<2x32xf32>
    %643 = arith.subf %642, %634 : vector<2x32xf32>
    %644 = arith.mulf %643, %641 : vector<2x32xf32>
    %645 = arith.mulf %634, %584 : vector<2x32xf32>
    %646 = arith.addf %644, %645 : vector<2x32xf32>
    %c12_144 = arith.constant 12 : index
    %c32_145 = arith.constant 32 : index
    %647 = vector.load %arg21[%c12_144, %c32_145] : memref<16x64xf32, #tpu.memory_space<vmem>>, vector<2x32xf32>
    tpu.vector_store %arg21[%c12_144, %c32_145], %646 {strides = array<i32>} : memref<16x64xf32, #tpu.memory_space<vmem>>, vector<2x32xf32>,
    %648 = vector.extract_strided_slice %517 {offsets = [4, 0], sizes = [2, 96], strides = [1, 1]} : vector<16x192xf32> to vector<2x96xf32>
    %cst_146 = arith.constant dense<0.000000e+00> : vector<2x96xf32>
    %649 = tpu.matmul %615, %518, %cst_146 {dimension_numbers = #tpu.dot_dimension_numbers<[1], [0], [0], [1], [0, 0, 1, 1], [], []>} : vector<2x32xf32>, vector<32x96xf32>, vector<2x96xf32> -> vector<2x96xf32>
    %650 = vector.extract_strided_slice %648 {offsets = [0, 0], sizes = [2, 32], strides = [1, 1]} : vector<2x96xf32> to vector<2x32xf32>
    %651 = vector.extract_strided_slice %649 {offsets = [0, 0], sizes = [2, 32], strides = [1, 1]} : vector<2x96xf32> to vector<2x32xf32>
    %652 = arith.addf %650, %651 : vector<2x32xf32>
    %653 = arith.negf %652 : vector<2x32xf32>
    %654 = math.exp %653 : vector<2x32xf32>
    %cst_147 = arith.constant 1.000000e+00 : f32
    %655 = vector.broadcast %cst_147 : f32 to vector<2x32xf32>
    %656 = arith.addf %655, %654 : vector<2x32xf32>
    %657 = arith.divf %655, %656 : vector<2x32xf32>
    %658 = vector.extract_strided_slice %648 {offsets = [0, 32], sizes = [2, 32], strides = [1, 1]} : vector<2x96xf32> to vector<2x32xf32>
    %659 = vector.extract_strided_slice %649 {offsets = [0, 32], sizes = [2, 32], strides = [1, 1]} : vector<2x96xf32> to vector<2x32xf32>
    %660 = arith.addf %658, %659 : vector<2x32xf32>
    %661 = arith.negf %660 : vector<2x32xf32>
    %662 = math.exp %661 : vector<2x32xf32>
    %cst_148 = arith.constant 1.000000e+00 : f32
    %663 = vector.broadcast %cst_148 : f32 to vector<2x32xf32>
    %664 = arith.addf %663, %662 : vector<2x32xf32>
    %665 = arith.divf %663, %664 : vector<2x32xf32>
    %666 = vector.extract_strided_slice %648 {offsets = [0, 64], sizes = [2, 32], strides = [1, 1]} : vector<2x96xf32> to vector<2x32xf32>
    %667 = vector.extract_strided_slice %649 {offsets = [0, 64], sizes = [2, 32], strides = [1, 1]} : vector<2x96xf32> to vector<2x32xf32>
    %668 = vector.broadcast %520 : vector<1x32xf32> to vector<2x32xf32>
    %669 = arith.addf %667, %668 : vector<2x32xf32>
    %670 = arith.mulf %657, %669 : vector<2x32xf32>
    %671 = arith.addf %666, %670 : vector<2x32xf32>
    %672 = math.tanh %671 : vector<2x32xf32>
    %cst_149 = arith.constant 1.000000e+00 : f32
    %673 = vector.broadcast %cst_149 : f32 to vector<2x32xf32>
    %674 = arith.subf %673, %665 : vector<2x32xf32>
    %675 = arith.mulf %674, %672 : vector<2x32xf32>
    %676 = arith.mulf %665, %615 : vector<2x32xf32>
    %677 = arith.addf %675, %676 : vector<2x32xf32>
    %c4_150 = arith.constant 4 : index
    %c0_151 = arith.constant 0 : index
    %678 = vector.load %arg21[%c4_150, %c0_151] : memref<16x64xf32, #tpu.memory_space<vmem>>, vector<2x32xf32>
    tpu.vector_store %arg21[%c4_150, %c0_151], %677 {strides = array<i32>} : memref<16x64xf32, #tpu.memory_space<vmem>>, vector<2x32xf32>,
    %679 = vector.extract_strided_slice %517 {offsets = [10, 96], sizes = [2, 96], strides = [1, 1]} : vector<16x192xf32> to vector<2x96xf32>
    %cst_152 = arith.constant dense<0.000000e+00> : vector<2x96xf32>
    %680 = tpu.matmul %646, %519, %cst_152 {dimension_numbers = #tpu.dot_dimension_numbers<[1], [0], [0], [1], [0, 0, 1, 1], [], []>} : vector<2x32xf32>, vector<32x96xf32>, vector<2x96xf32> -> vector<2x96xf32>
    %681 = vector.extract_strided_slice %679 {offsets = [0, 0], sizes = [2, 32], strides = [1, 1]} : vector<2x96xf32> to vector<2x32xf32>
    %682 = vector.extract_strided_slice %680 {offsets = [0, 0], sizes = [2, 32], strides = [1, 1]} : vector<2x96xf32> to vector<2x32xf32>
    %683 = arith.addf %681, %682 : vector<2x32xf32>
    %684 = arith.negf %683 : vector<2x32xf32>
    %685 = math.exp %684 : vector<2x32xf32>
    %cst_153 = arith.constant 1.000000e+00 : f32
    %686 = vector.broadcast %cst_153 : f32 to vector<2x32xf32>
    %687 = arith.addf %686, %685 : vector<2x32xf32>
    %688 = arith.divf %686, %687 : vector<2x32xf32>
    %689 = vector.extract_strided_slice %679 {offsets = [0, 32], sizes = [2, 32], strides = [1, 1]} : vector<2x96xf32> to vector<2x32xf32>
    %690 = vector.extract_strided_slice %680 {offsets = [0, 32], sizes = [2, 32], strides = [1, 1]} : vector<2x96xf32> to vector<2x32xf32>
    %691 = arith.addf %689, %690 : vector<2x32xf32>
    %692 = arith.negf %691 : vector<2x32xf32>
    %693 = math.exp %692 : vector<2x32xf32>
    %cst_154 = arith.constant 1.000000e+00 : f32
    %694 = vector.broadcast %cst_154 : f32 to vector<2x32xf32>
    %695 = arith.addf %694, %693 : vector<2x32xf32>
    %696 = arith.divf %694, %695 : vector<2x32xf32>
    %697 = vector.extract_strided_slice %679 {offsets = [0, 64], sizes = [2, 32], strides = [1, 1]} : vector<2x96xf32> to vector<2x32xf32>
    %698 = vector.extract_strided_slice %680 {offsets = [0, 64], sizes = [2, 32], strides = [1, 1]} : vector<2x96xf32> to vector<2x32xf32>
    %699 = vector.broadcast %521 : vector<1x32xf32> to vector<2x32xf32>
    %700 = arith.addf %698, %699 : vector<2x32xf32>
    %701 = arith.mulf %688, %700 : vector<2x32xf32>
    %702 = arith.addf %697, %701 : vector<2x32xf32>
    %703 = math.tanh %702 : vector<2x32xf32>
    %cst_155 = arith.constant 1.000000e+00 : f32
    %704 = vector.broadcast %cst_155 : f32 to vector<2x32xf32>
    %705 = arith.subf %704, %696 : vector<2x32xf32>
    %706 = arith.mulf %705, %703 : vector<2x32xf32>
    %707 = arith.mulf %696, %646 : vector<2x32xf32>
    %708 = arith.addf %706, %707 : vector<2x32xf32>
    %c10_156 = arith.constant 10 : index
    %c32_157 = arith.constant 32 : index
    %709 = vector.load %arg21[%c10_156, %c32_157] : memref<16x64xf32, #tpu.memory_space<vmem>>, vector<2x32xf32>
    tpu.vector_store %arg21[%c10_156, %c32_157], %708 {strides = array<i32>} : memref<16x64xf32, #tpu.memory_space<vmem>>, vector<2x32xf32>,
    %710 = vector.extract_strided_slice %517 {offsets = [6, 0], sizes = [2, 96], strides = [1, 1]} : vector<16x192xf32> to vector<2x96xf32>
    %cst_158 = arith.constant dense<0.000000e+00> : vector<2x96xf32>
    %711 = tpu.matmul %677, %518, %cst_158 {dimension_numbers = #tpu.dot_dimension_numbers<[1], [0], [0], [1], [0, 0, 1, 1], [], []>} : vector<2x32xf32>, vector<32x96xf32>, vector<2x96xf32> -> vector<2x96xf32>
    %712 = vector.extract_strided_slice %710 {offsets = [0, 0], sizes = [2, 32], strides = [1, 1]} : vector<2x96xf32> to vector<2x32xf32>
    %713 = vector.extract_strided_slice %711 {offsets = [0, 0], sizes = [2, 32], strides = [1, 1]} : vector<2x96xf32> to vector<2x32xf32>
    %714 = arith.addf %712, %713 : vector<2x32xf32>
    %715 = arith.negf %714 : vector<2x32xf32>
    %716 = math.exp %715 : vector<2x32xf32>
    %cst_159 = arith.constant 1.000000e+00 : f32
    %717 = vector.broadcast %cst_159 : f32 to vector<2x32xf32>
    %718 = arith.addf %717, %716 : vector<2x32xf32>
    %719 = arith.divf %717, %718 : vector<2x32xf32>
    %720 = vector.extract_strided_slice %710 {offsets = [0, 32], sizes = [2, 32], strides = [1, 1]} : vector<2x96xf32> to vector<2x32xf32>
    %721 = vector.extract_strided_slice %711 {offsets = [0, 32], sizes = [2, 32], strides = [1, 1]} : vector<2x96xf32> to vector<2x32xf32>
    %722 = arith.addf %720, %721 : vector<2x32xf32>
    %723 = arith.negf %722 : vector<2x32xf32>
    %724 = math.exp %723 : vector<2x32xf32>
    %cst_160 = arith.constant 1.000000e+00 : f32
    %725 = vector.broadcast %cst_160 : f32 to vector<2x32xf32>
    %726 = arith.addf %725, %724 : vector<2x32xf32>
    %727 = arith.divf %725, %726 : vector<2x32xf32>
    %728 = vector.extract_strided_slice %710 {offsets = [0, 64], sizes = [2, 32], strides = [1, 1]} : vector<2x96xf32> to vector<2x32xf32>
    %729 = vector.extract_strided_slice %711 {offsets = [0, 64], sizes = [2, 32], strides = [1, 1]} : vector<2x96xf32> to vector<2x32xf32>
    %730 = vector.broadcast %520 : vector<1x32xf32> to vector<2x32xf32>
    %731 = arith.addf %729, %730 : vector<2x32xf32>
    %732 = arith.mulf %719, %731 : vector<2x32xf32>
    %733 = arith.addf %728, %732 : vector<2x32xf32>
    %734 = math.tanh %733 : vector<2x32xf32>
    %cst_161 = arith.constant 1.000000e+00 : f32
    %735 = vector.broadcast %cst_161 : f32 to vector<2x32xf32>
    %736 = arith.subf %735, %727 : vector<2x32xf32>
    %737 = arith.mulf %736, %734 : vector<2x32xf32>
    %738 = arith.mulf %727, %677 : vector<2x32xf32>
    %739 = arith.addf %737, %738 : vector<2x32xf32>
    %c6_162 = arith.constant 6 : index
    %c0_163 = arith.constant 0 : index
    %740 = vector.load %arg21[%c6_162, %c0_163] : memref<16x64xf32, #tpu.memory_space<vmem>>, vector<2x32xf32>
    tpu.vector_store %arg21[%c6_162, %c0_163], %739 {strides = array<i32>} : memref<16x64xf32, #tpu.memory_space<vmem>>, vector<2x32xf32>,
    %741 = vector.extract_strided_slice %517 {offsets = [8, 96], sizes = [2, 96], strides = [1, 1]} : vector<16x192xf32> to vector<2x96xf32>
    %cst_164 = arith.constant dense<0.000000e+00> : vector<2x96xf32>
    %742 = tpu.matmul %708, %519, %cst_164 {dimension_numbers = #tpu.dot_dimension_numbers<[1], [0], [0], [1], [0, 0, 1, 1], [], []>} : vector<2x32xf32>, vector<32x96xf32>, vector<2x96xf32> -> vector<2x96xf32>
    %743 = vector.extract_strided_slice %741 {offsets = [0, 0], sizes = [2, 32], strides = [1, 1]} : vector<2x96xf32> to vector<2x32xf32>
    %744 = vector.extract_strided_slice %742 {offsets = [0, 0], sizes = [2, 32], strides = [1, 1]} : vector<2x96xf32> to vector<2x32xf32>
    %745 = arith.addf %743, %744 : vector<2x32xf32>
    %746 = arith.negf %745 : vector<2x32xf32>
    %747 = math.exp %746 : vector<2x32xf32>
    %cst_165 = arith.constant 1.000000e+00 : f32
    %748 = vector.broadcast %cst_165 : f32 to vector<2x32xf32>
    %749 = arith.addf %748, %747 : vector<2x32xf32>
    %750 = arith.divf %748, %749 : vector<2x32xf32>
    %751 = vector.extract_strided_slice %741 {offsets = [0, 32], sizes = [2, 32], strides = [1, 1]} : vector<2x96xf32> to vector<2x32xf32>
    %752 = vector.extract_strided_slice %742 {offsets = [0, 32], sizes = [2, 32], strides = [1, 1]} : vector<2x96xf32> to vector<2x32xf32>
    %753 = arith.addf %751, %752 : vector<2x32xf32>
    %754 = arith.negf %753 : vector<2x32xf32>
    %755 = math.exp %754 : vector<2x32xf32>
    %cst_166 = arith.constant 1.000000e+00 : f32
    %756 = vector.broadcast %cst_166 : f32 to vector<2x32xf32>
    %757 = arith.addf %756, %755 : vector<2x32xf32>
    %758 = arith.divf %756, %757 : vector<2x32xf32>
    %759 = vector.extract_strided_slice %741 {offsets = [0, 64], sizes = [2, 32], strides = [1, 1]} : vector<2x96xf32> to vector<2x32xf32>
    %760 = vector.extract_strided_slice %742 {offsets = [0, 64], sizes = [2, 32], strides = [1, 1]} : vector<2x96xf32> to vector<2x32xf32>
    %761 = vector.broadcast %521 : vector<1x32xf32> to vector<2x32xf32>
    %762 = arith.addf %760, %761 : vector<2x32xf32>
    %763 = arith.mulf %750, %762 : vector<2x32xf32>
    %764 = arith.addf %759, %763 : vector<2x32xf32>
    %765 = math.tanh %764 : vector<2x32xf32>
    %cst_167 = arith.constant 1.000000e+00 : f32
    %766 = vector.broadcast %cst_167 : f32 to vector<2x32xf32>
    %767 = arith.subf %766, %758 : vector<2x32xf32>
    %768 = arith.mulf %767, %765 : vector<2x32xf32>
    %769 = arith.mulf %758, %708 : vector<2x32xf32>
    %770 = arith.addf %768, %769 : vector<2x32xf32>
    %c8_168 = arith.constant 8 : index
    %c32_169 = arith.constant 32 : index
    %771 = vector.load %arg21[%c8_168, %c32_169] : memref<16x64xf32, #tpu.memory_space<vmem>>, vector<2x32xf32>
    tpu.vector_store %arg21[%c8_168, %c32_169], %770 {strides = array<i32>} : memref<16x64xf32, #tpu.memory_space<vmem>>, vector<2x32xf32>,
    %772 = vector.extract_strided_slice %517 {offsets = [8, 0], sizes = [2, 96], strides = [1, 1]} : vector<16x192xf32> to vector<2x96xf32>
    %cst_170 = arith.constant dense<0.000000e+00> : vector<2x96xf32>
    %773 = tpu.matmul %739, %518, %cst_170 {dimension_numbers = #tpu.dot_dimension_numbers<[1], [0], [0], [1], [0, 0, 1, 1], [], []>} : vector<2x32xf32>, vector<32x96xf32>, vector<2x96xf32> -> vector<2x96xf32>
    %774 = vector.extract_strided_slice %772 {offsets = [0, 0], sizes = [2, 32], strides = [1, 1]} : vector<2x96xf32> to vector<2x32xf32>
    %775 = vector.extract_strided_slice %773 {offsets = [0, 0], sizes = [2, 32], strides = [1, 1]} : vector<2x96xf32> to vector<2x32xf32>
    %776 = arith.addf %774, %775 : vector<2x32xf32>
    %777 = arith.negf %776 : vector<2x32xf32>
    %778 = math.exp %777 : vector<2x32xf32>
    %cst_171 = arith.constant 1.000000e+00 : f32
    %779 = vector.broadcast %cst_171 : f32 to vector<2x32xf32>
    %780 = arith.addf %779, %778 : vector<2x32xf32>
    %781 = arith.divf %779, %780 : vector<2x32xf32>
    %782 = vector.extract_strided_slice %772 {offsets = [0, 32], sizes = [2, 32], strides = [1, 1]} : vector<2x96xf32> to vector<2x32xf32>
    %783 = vector.extract_strided_slice %773 {offsets = [0, 32], sizes = [2, 32], strides = [1, 1]} : vector<2x96xf32> to vector<2x32xf32>
    %784 = arith.addf %782, %783 : vector<2x32xf32>
    %785 = arith.negf %784 : vector<2x32xf32>
    %786 = math.exp %785 : vector<2x32xf32>
    %cst_172 = arith.constant 1.000000e+00 : f32
    %787 = vector.broadcast %cst_172 : f32 to vector<2x32xf32>
    %788 = arith.addf %787, %786 : vector<2x32xf32>
    %789 = arith.divf %787, %788 : vector<2x32xf32>
    %790 = vector.extract_strided_slice %772 {offsets = [0, 64], sizes = [2, 32], strides = [1, 1]} : vector<2x96xf32> to vector<2x32xf32>
    %791 = vector.extract_strided_slice %773 {offsets = [0, 64], sizes = [2, 32], strides = [1, 1]} : vector<2x96xf32> to vector<2x32xf32>
    %792 = vector.broadcast %520 : vector<1x32xf32> to vector<2x32xf32>
    %793 = arith.addf %791, %792 : vector<2x32xf32>
    %794 = arith.mulf %781, %793 : vector<2x32xf32>
    %795 = arith.addf %790, %794 : vector<2x32xf32>
    %796 = math.tanh %795 : vector<2x32xf32>
    %cst_173 = arith.constant 1.000000e+00 : f32
    %797 = vector.broadcast %cst_173 : f32 to vector<2x32xf32>
    %798 = arith.subf %797, %789 : vector<2x32xf32>
    %799 = arith.mulf %798, %796 : vector<2x32xf32>
    %800 = arith.mulf %789, %739 : vector<2x32xf32>
    %801 = arith.addf %799, %800 : vector<2x32xf32>
    %c8_174 = arith.constant 8 : index
    %c0_175 = arith.constant 0 : index
    %802 = vector.load %arg21[%c8_174, %c0_175] : memref<16x64xf32, #tpu.memory_space<vmem>>, vector<2x32xf32>
    tpu.vector_store %arg21[%c8_174, %c0_175], %801 {strides = array<i32>} : memref<16x64xf32, #tpu.memory_space<vmem>>, vector<2x32xf32>,
    %803 = vector.extract_strided_slice %517 {offsets = [6, 96], sizes = [2, 96], strides = [1, 1]} : vector<16x192xf32> to vector<2x96xf32>
    %cst_176 = arith.constant dense<0.000000e+00> : vector<2x96xf32>
    %804 = tpu.matmul %770, %519, %cst_176 {dimension_numbers = #tpu.dot_dimension_numbers<[1], [0], [0], [1], [0, 0, 1, 1], [], []>} : vector<2x32xf32>, vector<32x96xf32>, vector<2x96xf32> -> vector<2x96xf32>
    %805 = vector.extract_strided_slice %803 {offsets = [0, 0], sizes = [2, 32], strides = [1, 1]} : vector<2x96xf32> to vector<2x32xf32>
    %806 = vector.extract_strided_slice %804 {offsets = [0, 0], sizes = [2, 32], strides = [1, 1]} : vector<2x96xf32> to vector<2x32xf32>
    %807 = arith.addf %805, %806 : vector<2x32xf32>
    %808 = arith.negf %807 : vector<2x32xf32>
    %809 = math.exp %808 : vector<2x32xf32>
    %cst_177 = arith.constant 1.000000e+00 : f32
    %810 = vector.broadcast %cst_177 : f32 to vector<2x32xf32>
    %811 = arith.addf %810, %809 : vector<2x32xf32>
    %812 = arith.divf %810, %811 : vector<2x32xf32>
    %813 = vector.extract_strided_slice %803 {offsets = [0, 32], sizes = [2, 32], strides = [1, 1]} : vector<2x96xf32> to vector<2x32xf32>
    %814 = vector.extract_strided_slice %804 {offsets = [0, 32], sizes = [2, 32], strides = [1, 1]} : vector<2x96xf32> to vector<2x32xf32>
    %815 = arith.addf %813, %814 : vector<2x32xf32>
    %816 = arith.negf %815 : vector<2x32xf32>
    %817 = math.exp %816 : vector<2x32xf32>
    %cst_178 = arith.constant 1.000000e+00 : f32
    %818 = vector.broadcast %cst_178 : f32 to vector<2x32xf32>
    %819 = arith.addf %818, %817 : vector<2x32xf32>
    %820 = arith.divf %818, %819 : vector<2x32xf32>
    %821 = vector.extract_strided_slice %803 {offsets = [0, 64], sizes = [2, 32], strides = [1, 1]} : vector<2x96xf32> to vector<2x32xf32>
    %822 = vector.extract_strided_slice %804 {offsets = [0, 64], sizes = [2, 32], strides = [1, 1]} : vector<2x96xf32> to vector<2x32xf32>
    %823 = vector.broadcast %521 : vector<1x32xf32> to vector<2x32xf32>
    %824 = arith.addf %822, %823 : vector<2x32xf32>
    %825 = arith.mulf %812, %824 : vector<2x32xf32>
    %826 = arith.addf %821, %825 : vector<2x32xf32>
    %827 = math.tanh %826 : vector<2x32xf32>
    %cst_179 = arith.constant 1.000000e+00 : f32
    %828 = vector.broadcast %cst_179 : f32 to vector<2x32xf32>
    %829 = arith.subf %828, %820 : vector<2x32xf32>
    %830 = arith.mulf %829, %827 : vector<2x32xf32>
    %831 = arith.mulf %820, %770 : vector<2x32xf32>
    %832 = arith.addf %830, %831 : vector<2x32xf32>
    %c6_180 = arith.constant 6 : index
    %c32_181 = arith.constant 32 : index
    %833 = vector.load %arg21[%c6_180, %c32_181] : memref<16x64xf32, #tpu.memory_space<vmem>>, vector<2x32xf32>
    tpu.vector_store %arg21[%c6_180, %c32_181], %832 {strides = array<i32>} : memref<16x64xf32, #tpu.memory_space<vmem>>, vector<2x32xf32>,
    %834 = vector.extract_strided_slice %517 {offsets = [10, 0], sizes = [2, 96], strides = [1, 1]} : vector<16x192xf32> to vector<2x96xf32>
    %cst_182 = arith.constant dense<0.000000e+00> : vector<2x96xf32>
    %835 = tpu.matmul %801, %518, %cst_182 {dimension_numbers = #tpu.dot_dimension_numbers<[1], [0], [0], [1], [0, 0, 1, 1], [], []>} : vector<2x32xf32>, vector<32x96xf32>, vector<2x96xf32> -> vector<2x96xf32>
    %836 = vector.extract_strided_slice %834 {offsets = [0, 0], sizes = [2, 32], strides = [1, 1]} : vector<2x96xf32> to vector<2x32xf32>
    %837 = vector.extract_strided_slice %835 {offsets = [0, 0], sizes = [2, 32], strides = [1, 1]} : vector<2x96xf32> to vector<2x32xf32>
    %838 = arith.addf %836, %837 : vector<2x32xf32>
    %839 = arith.negf %838 : vector<2x32xf32>
    %840 = math.exp %839 : vector<2x32xf32>
    %cst_183 = arith.constant 1.000000e+00 : f32
    %841 = vector.broadcast %cst_183 : f32 to vector<2x32xf32>
    %842 = arith.addf %841, %840 : vector<2x32xf32>
    %843 = arith.divf %841, %842 : vector<2x32xf32>
    %844 = vector.extract_strided_slice %834 {offsets = [0, 32], sizes = [2, 32], strides = [1, 1]} : vector<2x96xf32> to vector<2x32xf32>
    %845 = vector.extract_strided_slice %835 {offsets = [0, 32], sizes = [2, 32], strides = [1, 1]} : vector<2x96xf32> to vector<2x32xf32>
    %846 = arith.addf %844, %845 : vector<2x32xf32>
    %847 = arith.negf %846 : vector<2x32xf32>
    %848 = math.exp %847 : vector<2x32xf32>
    %cst_184 = arith.constant 1.000000e+00 : f32
    %849 = vector.broadcast %cst_184 : f32 to vector<2x32xf32>
    %850 = arith.addf %849, %848 : vector<2x32xf32>
    %851 = arith.divf %849, %850 : vector<2x32xf32>
    %852 = vector.extract_strided_slice %834 {offsets = [0, 64], sizes = [2, 32], strides = [1, 1]} : vector<2x96xf32> to vector<2x32xf32>
    %853 = vector.extract_strided_slice %835 {offsets = [0, 64], sizes = [2, 32], strides = [1, 1]} : vector<2x96xf32> to vector<2x32xf32>
    %854 = vector.broadcast %520 : vector<1x32xf32> to vector<2x32xf32>
    %855 = arith.addf %853, %854 : vector<2x32xf32>
    %856 = arith.mulf %843, %855 : vector<2x32xf32>
    %857 = arith.addf %852, %856 : vector<2x32xf32>
    %858 = math.tanh %857 : vector<2x32xf32>
    %cst_185 = arith.constant 1.000000e+00 : f32
    %859 = vector.broadcast %cst_185 : f32 to vector<2x32xf32>
    %860 = arith.subf %859, %851 : vector<2x32xf32>
    %861 = arith.mulf %860, %858 : vector<2x32xf32>
    %862 = arith.mulf %851, %801 : vector<2x32xf32>
    %863 = arith.addf %861, %862 : vector<2x32xf32>
    %c10_186 = arith.constant 10 : index
    %c0_187 = arith.constant 0 : index
    %864 = vector.load %arg21[%c10_186, %c0_187] : memref<16x64xf32, #tpu.memory_space<vmem>>, vector<2x32xf32>
    tpu.vector_store %arg21[%c10_186, %c0_187], %863 {strides = array<i32>} : memref<16x64xf32, #tpu.memory_space<vmem>>, vector<2x32xf32>,
    %865 = vector.extract_strided_slice %517 {offsets = [4, 96], sizes = [2, 96], strides = [1, 1]} : vector<16x192xf32> to vector<2x96xf32>
    %cst_188 = arith.constant dense<0.000000e+00> : vector<2x96xf32>
    %866 = tpu.matmul %832, %519, %cst_188 {dimension_numbers = #tpu.dot_dimension_numbers<[1], [0], [0], [1], [0, 0, 1, 1], [], []>} : vector<2x32xf32>, vector<32x96xf32>, vector<2x96xf32> -> vector<2x96xf32>
    %867 = vector.extract_strided_slice %865 {offsets = [0, 0], sizes = [2, 32], strides = [1, 1]} : vector<2x96xf32> to vector<2x32xf32>
    %868 = vector.extract_strided_slice %866 {offsets = [0, 0], sizes = [2, 32], strides = [1, 1]} : vector<2x96xf32> to vector<2x32xf32>
    %869 = arith.addf %867, %868 : vector<2x32xf32>
    %870 = arith.negf %869 : vector<2x32xf32>
    %871 = math.exp %870 : vector<2x32xf32>
    %cst_189 = arith.constant 1.000000e+00 : f32
    %872 = vector.broadcast %cst_189 : f32 to vector<2x32xf32>
    %873 = arith.addf %872, %871 : vector<2x32xf32>
    %874 = arith.divf %872, %873 : vector<2x32xf32>
    %875 = vector.extract_strided_slice %865 {offsets = [0, 32], sizes = [2, 32], strides = [1, 1]} : vector<2x96xf32> to vector<2x32xf32>
    %876 = vector.extract_strided_slice %866 {offsets = [0, 32], sizes = [2, 32], strides = [1, 1]} : vector<2x96xf32> to vector<2x32xf32>
    %877 = arith.addf %875, %876 : vector<2x32xf32>
    %878 = arith.negf %877 : vector<2x32xf32>
    %879 = math.exp %878 : vector<2x32xf32>
    %cst_190 = arith.constant 1.000000e+00 : f32
    %880 = vector.broadcast %cst_190 : f32 to vector<2x32xf32>
    %881 = arith.addf %880, %879 : vector<2x32xf32>
    %882 = arith.divf %880, %881 : vector<2x32xf32>
    %883 = vector.extract_strided_slice %865 {offsets = [0, 64], sizes = [2, 32], strides = [1, 1]} : vector<2x96xf32> to vector<2x32xf32>
    %884 = vector.extract_strided_slice %866 {offsets = [0, 64], sizes = [2, 32], strides = [1, 1]} : vector<2x96xf32> to vector<2x32xf32>
    %885 = vector.broadcast %521 : vector<1x32xf32> to vector<2x32xf32>
    %886 = arith.addf %884, %885 : vector<2x32xf32>
    %887 = arith.mulf %874, %886 : vector<2x32xf32>
    %888 = arith.addf %883, %887 : vector<2x32xf32>
    %889 = math.tanh %888 : vector<2x32xf32>
    %cst_191 = arith.constant 1.000000e+00 : f32
    %890 = vector.broadcast %cst_191 : f32 to vector<2x32xf32>
    %891 = arith.subf %890, %882 : vector<2x32xf32>
    %892 = arith.mulf %891, %889 : vector<2x32xf32>
    %893 = arith.mulf %882, %832 : vector<2x32xf32>
    %894 = arith.addf %892, %893 : vector<2x32xf32>
    %c4_192 = arith.constant 4 : index
    %c32_193 = arith.constant 32 : index
    %895 = vector.load %arg21[%c4_192, %c32_193] : memref<16x64xf32, #tpu.memory_space<vmem>>, vector<2x32xf32>
    tpu.vector_store %arg21[%c4_192, %c32_193], %894 {strides = array<i32>} : memref<16x64xf32, #tpu.memory_space<vmem>>, vector<2x32xf32>,
    %896 = vector.extract_strided_slice %517 {offsets = [12, 0], sizes = [2, 96], strides = [1, 1]} : vector<16x192xf32> to vector<2x96xf32>
    %cst_194 = arith.constant dense<0.000000e+00> : vector<2x96xf32>
    %897 = tpu.matmul %863, %518, %cst_194 {dimension_numbers = #tpu.dot_dimension_numbers<[1], [0], [0], [1], [0, 0, 1, 1], [], []>} : vector<2x32xf32>, vector<32x96xf32>, vector<2x96xf32> -> vector<2x96xf32>
    %898 = vector.extract_strided_slice %896 {offsets = [0, 0], sizes = [2, 32], strides = [1, 1]} : vector<2x96xf32> to vector<2x32xf32>
    %899 = vector.extract_strided_slice %897 {offsets = [0, 0], sizes = [2, 32], strides = [1, 1]} : vector<2x96xf32> to vector<2x32xf32>
    %900 = arith.addf %898, %899 : vector<2x32xf32>
    %901 = arith.negf %900 : vector<2x32xf32>
    %902 = math.exp %901 : vector<2x32xf32>
    %cst_195 = arith.constant 1.000000e+00 : f32
    %903 = vector.broadcast %cst_195 : f32 to vector<2x32xf32>
    %904 = arith.addf %903, %902 : vector<2x32xf32>
    %905 = arith.divf %903, %904 : vector<2x32xf32>
    %906 = vector.extract_strided_slice %896 {offsets = [0, 32], sizes = [2, 32], strides = [1, 1]} : vector<2x96xf32> to vector<2x32xf32>
    %907 = vector.extract_strided_slice %897 {offsets = [0, 32], sizes = [2, 32], strides = [1, 1]} : vector<2x96xf32> to vector<2x32xf32>
    %908 = arith.addf %906, %907 : vector<2x32xf32>
    %909 = arith.negf %908 : vector<2x32xf32>
    %910 = math.exp %909 : vector<2x32xf32>
    %cst_196 = arith.constant 1.000000e+00 : f32
    %911 = vector.broadcast %cst_196 : f32 to vector<2x32xf32>
    %912 = arith.addf %911, %910 : vector<2x32xf32>
    %913 = arith.divf %911, %912 : vector<2x32xf32>
    %914 = vector.extract_strided_slice %896 {offsets = [0, 64], sizes = [2, 32], strides = [1, 1]} : vector<2x96xf32> to vector<2x32xf32>
    %915 = vector.extract_strided_slice %897 {offsets = [0, 64], sizes = [2, 32], strides = [1, 1]} : vector<2x96xf32> to vector<2x32xf32>
    %916 = vector.broadcast %520 : vector<1x32xf32> to vector<2x32xf32>
    %917 = arith.addf %915, %916 : vector<2x32xf32>
    %918 = arith.mulf %905, %917 : vector<2x32xf32>
    %919 = arith.addf %914, %918 : vector<2x32xf32>
    %920 = math.tanh %919 : vector<2x32xf32>
    %cst_197 = arith.constant 1.000000e+00 : f32
    %921 = vector.broadcast %cst_197 : f32 to vector<2x32xf32>
    %922 = arith.subf %921, %913 : vector<2x32xf32>
    %923 = arith.mulf %922, %920 : vector<2x32xf32>
    %924 = arith.mulf %913, %863 : vector<2x32xf32>
    %925 = arith.addf %923, %924 : vector<2x32xf32>
    %c12_198 = arith.constant 12 : index
    %c0_199 = arith.constant 0 : index
    %926 = vector.load %arg21[%c12_198, %c0_199] : memref<16x64xf32, #tpu.memory_space<vmem>>, vector<2x32xf32>
    tpu.vector_store %arg21[%c12_198, %c0_199], %925 {strides = array<i32>} : memref<16x64xf32, #tpu.memory_space<vmem>>, vector<2x32xf32>,
    %927 = vector.extract_strided_slice %517 {offsets = [2, 96], sizes = [2, 96], strides = [1, 1]} : vector<16x192xf32> to vector<2x96xf32>
    %cst_200 = arith.constant dense<0.000000e+00> : vector<2x96xf32>
    %928 = tpu.matmul %894, %519, %cst_200 {dimension_numbers = #tpu.dot_dimension_numbers<[1], [0], [0], [1], [0, 0, 1, 1], [], []>} : vector<2x32xf32>, vector<32x96xf32>, vector<2x96xf32> -> vector<2x96xf32>
    %929 = vector.extract_strided_slice %927 {offsets = [0, 0], sizes = [2, 32], strides = [1, 1]} : vector<2x96xf32> to vector<2x32xf32>
    %930 = vector.extract_strided_slice %928 {offsets = [0, 0], sizes = [2, 32], strides = [1, 1]} : vector<2x96xf32> to vector<2x32xf32>
    %931 = arith.addf %929, %930 : vector<2x32xf32>
    %932 = arith.negf %931 : vector<2x32xf32>
    %933 = math.exp %932 : vector<2x32xf32>
    %cst_201 = arith.constant 1.000000e+00 : f32
    %934 = vector.broadcast %cst_201 : f32 to vector<2x32xf32>
    %935 = arith.addf %934, %933 : vector<2x32xf32>
    %936 = arith.divf %934, %935 : vector<2x32xf32>
    %937 = vector.extract_strided_slice %927 {offsets = [0, 32], sizes = [2, 32], strides = [1, 1]} : vector<2x96xf32> to vector<2x32xf32>
    %938 = vector.extract_strided_slice %928 {offsets = [0, 32], sizes = [2, 32], strides = [1, 1]} : vector<2x96xf32> to vector<2x32xf32>
    %939 = arith.addf %937, %938 : vector<2x32xf32>
    %940 = arith.negf %939 : vector<2x32xf32>
    %941 = math.exp %940 : vector<2x32xf32>
    %cst_202 = arith.constant 1.000000e+00 : f32
    %942 = vector.broadcast %cst_202 : f32 to vector<2x32xf32>
    %943 = arith.addf %942, %941 : vector<2x32xf32>
    %944 = arith.divf %942, %943 : vector<2x32xf32>
    %945 = vector.extract_strided_slice %927 {offsets = [0, 64], sizes = [2, 32], strides = [1, 1]} : vector<2x96xf32> to vector<2x32xf32>
    %946 = vector.extract_strided_slice %928 {offsets = [0, 64], sizes = [2, 32], strides = [1, 1]} : vector<2x96xf32> to vector<2x32xf32>
    %947 = vector.broadcast %521 : vector<1x32xf32> to vector<2x32xf32>
    %948 = arith.addf %946, %947 : vector<2x32xf32>
    %949 = arith.mulf %936, %948 : vector<2x32xf32>
    %950 = arith.addf %945, %949 : vector<2x32xf32>
    %951 = math.tanh %950 : vector<2x32xf32>
    %cst_203 = arith.constant 1.000000e+00 : f32
    %952 = vector.broadcast %cst_203 : f32 to vector<2x32xf32>
    %953 = arith.subf %952, %944 : vector<2x32xf32>
    %954 = arith.mulf %953, %951 : vector<2x32xf32>
    %955 = arith.mulf %944, %894 : vector<2x32xf32>
    %956 = arith.addf %954, %955 : vector<2x32xf32>
    %c2_204 = arith.constant 2 : index
    %c32_205 = arith.constant 32 : index
    %957 = vector.load %arg21[%c2_204, %c32_205] : memref<16x64xf32, #tpu.memory_space<vmem>>, vector<2x32xf32>
    tpu.vector_store %arg21[%c2_204, %c32_205], %956 {strides = array<i32>} : memref<16x64xf32, #tpu.memory_space<vmem>>, vector<2x32xf32>,
    %958 = vector.extract_strided_slice %517 {offsets = [14, 0], sizes = [2, 96], strides = [1, 1]} : vector<16x192xf32> to vector<2x96xf32>
    %cst_206 = arith.constant dense<0.000000e+00> : vector<2x96xf32>
    %959 = tpu.matmul %925, %518, %cst_206 {dimension_numbers = #tpu.dot_dimension_numbers<[1], [0], [0], [1], [0, 0, 1, 1], [], []>} : vector<2x32xf32>, vector<32x96xf32>, vector<2x96xf32> -> vector<2x96xf32>
    %960 = vector.extract_strided_slice %958 {offsets = [0, 0], sizes = [2, 32], strides = [1, 1]} : vector<2x96xf32> to vector<2x32xf32>
    %961 = vector.extract_strided_slice %959 {offsets = [0, 0], sizes = [2, 32], strides = [1, 1]} : vector<2x96xf32> to vector<2x32xf32>
    %962 = arith.addf %960, %961 : vector<2x32xf32>
    %963 = arith.negf %962 : vector<2x32xf32>
    %964 = math.exp %963 : vector<2x32xf32>
    %cst_207 = arith.constant 1.000000e+00 : f32
    %965 = vector.broadcast %cst_207 : f32 to vector<2x32xf32>
    %966 = arith.addf %965, %964 : vector<2x32xf32>
    %967 = arith.divf %965, %966 : vector<2x32xf32>
    %968 = vector.extract_strided_slice %958 {offsets = [0, 32], sizes = [2, 32], strides = [1, 1]} : vector<2x96xf32> to vector<2x32xf32>
    %969 = vector.extract_strided_slice %959 {offsets = [0, 32], sizes = [2, 32], strides = [1, 1]} : vector<2x96xf32> to vector<2x32xf32>
    %970 = arith.addf %968, %969 : vector<2x32xf32>
    %971 = arith.negf %970 : vector<2x32xf32>
    %972 = math.exp %971 : vector<2x32xf32>
    %cst_208 = arith.constant 1.000000e+00 : f32
    %973 = vector.broadcast %cst_208 : f32 to vector<2x32xf32>
    %974 = arith.addf %973, %972 : vector<2x32xf32>
    %975 = arith.divf %973, %974 : vector<2x32xf32>
    %976 = vector.extract_strided_slice %958 {offsets = [0, 64], sizes = [2, 32], strides = [1, 1]} : vector<2x96xf32> to vector<2x32xf32>
    %977 = vector.extract_strided_slice %959 {offsets = [0, 64], sizes = [2, 32], strides = [1, 1]} : vector<2x96xf32> to vector<2x32xf32>
    %978 = vector.broadcast %520 : vector<1x32xf32> to vector<2x32xf32>
    %979 = arith.addf %977, %978 : vector<2x32xf32>
    %980 = arith.mulf %967, %979 : vector<2x32xf32>
    %981 = arith.addf %976, %980 : vector<2x32xf32>
    %982 = math.tanh %981 : vector<2x32xf32>
    %cst_209 = arith.constant 1.000000e+00 : f32
    %983 = vector.broadcast %cst_209 : f32 to vector<2x32xf32>
    %984 = arith.subf %983, %975 : vector<2x32xf32>
    %985 = arith.mulf %984, %982 : vector<2x32xf32>
    %986 = arith.mulf %975, %925 : vector<2x32xf32>
    %987 = arith.addf %985, %986 : vector<2x32xf32>
    %c14_210 = arith.constant 14 : index
    %c0_211 = arith.constant 0 : index
    %988 = vector.load %arg21[%c14_210, %c0_211] : memref<16x64xf32, #tpu.memory_space<vmem>>, vector<2x32xf32>
    tpu.vector_store %arg21[%c14_210, %c0_211], %987 {strides = array<i32>} : memref<16x64xf32, #tpu.memory_space<vmem>>, vector<2x32xf32>,
    %989 = vector.extract_strided_slice %517 {offsets = [0, 96], sizes = [2, 96], strides = [1, 1]} : vector<16x192xf32> to vector<2x96xf32>
    %cst_212 = arith.constant dense<0.000000e+00> : vector<2x96xf32>
    %990 = tpu.matmul %956, %519, %cst_212 {dimension_numbers = #tpu.dot_dimension_numbers<[1], [0], [0], [1], [0, 0, 1, 1], [], []>} : vector<2x32xf32>, vector<32x96xf32>, vector<2x96xf32> -> vector<2x96xf32>
    %991 = vector.extract_strided_slice %989 {offsets = [0, 0], sizes = [2, 32], strides = [1, 1]} : vector<2x96xf32> to vector<2x32xf32>
    %992 = vector.extract_strided_slice %990 {offsets = [0, 0], sizes = [2, 32], strides = [1, 1]} : vector<2x96xf32> to vector<2x32xf32>
    %993 = arith.addf %991, %992 : vector<2x32xf32>
    %994 = arith.negf %993 : vector<2x32xf32>
    %995 = math.exp %994 : vector<2x32xf32>
    %cst_213 = arith.constant 1.000000e+00 : f32
    %996 = vector.broadcast %cst_213 : f32 to vector<2x32xf32>
    %997 = arith.addf %996, %995 : vector<2x32xf32>
    %998 = arith.divf %996, %997 : vector<2x32xf32>
    %999 = vector.extract_strided_slice %989 {offsets = [0, 32], sizes = [2, 32], strides = [1, 1]} : vector<2x96xf32> to vector<2x32xf32>
    %1000 = vector.extract_strided_slice %990 {offsets = [0, 32], sizes = [2, 32], strides = [1, 1]} : vector<2x96xf32> to vector<2x32xf32>
    %1001 = arith.addf %999, %1000 : vector<2x32xf32>
    %1002 = arith.negf %1001 : vector<2x32xf32>
    %1003 = math.exp %1002 : vector<2x32xf32>
    %cst_214 = arith.constant 1.000000e+00 : f32
    %1004 = vector.broadcast %cst_214 : f32 to vector<2x32xf32>
    %1005 = arith.addf %1004, %1003 : vector<2x32xf32>
    %1006 = arith.divf %1004, %1005 : vector<2x32xf32>
    %1007 = vector.extract_strided_slice %989 {offsets = [0, 64], sizes = [2, 32], strides = [1, 1]} : vector<2x96xf32> to vector<2x32xf32>
    %1008 = vector.extract_strided_slice %990 {offsets = [0, 64], sizes = [2, 32], strides = [1, 1]} : vector<2x96xf32> to vector<2x32xf32>
    %1009 = vector.broadcast %521 : vector<1x32xf32> to vector<2x32xf32>
    %1010 = arith.addf %1008, %1009 : vector<2x32xf32>
    %1011 = arith.mulf %998, %1010 : vector<2x32xf32>
    %1012 = arith.addf %1007, %1011 : vector<2x32xf32>
    %1013 = math.tanh %1012 : vector<2x32xf32>
    %cst_215 = arith.constant 1.000000e+00 : f32
    %1014 = vector.broadcast %cst_215 : f32 to vector<2x32xf32>
    %1015 = arith.subf %1014, %1006 : vector<2x32xf32>
    %1016 = arith.mulf %1015, %1013 : vector<2x32xf32>
    %1017 = arith.mulf %1006, %956 : vector<2x32xf32>
    %1018 = arith.addf %1016, %1017 : vector<2x32xf32>
    %c0_216 = arith.constant 0 : index
    %c32_217 = arith.constant 32 : index
    %1019 = vector.load %arg21[%c0_216, %c32_217] : memref<16x64xf32, #tpu.memory_space<vmem>>, vector<2x32xf32>
    tpu.vector_store %arg21[%c0_216, %c32_217], %1018 {strides = array<i32>} : memref<16x64xf32, #tpu.memory_space<vmem>>, vector<2x32xf32>,
    %c0_218 = arith.constant 0 : index
    %c0_219 = arith.constant 0 : index
    %1020 = vector.load %arg21[%c0_218, %c0_219] : memref<16x64xf32, #tpu.memory_space<vmem>>, vector<16x64xf32>
    %1021 = vector.extract_strided_slice %1020 {offsets = [0, 0], sizes = [16, 32], strides = [1, 1]} : vector<16x64xf32> to vector<16x32xf32>
    %1022 = vector.extract_strided_slice %1020 {offsets = [0, 32], sizes = [16, 32], strides = [1, 1]} : vector<16x64xf32> to vector<16x32xf32>
    %1023 = arith.addf %1021, %1022 : vector<16x32xf32>
    %cst_220 = arith.constant 0.000000e+00 : f32
    %1024 = vector.broadcast %cst_220 : f32 to vector<16x32xf32>
    %1025 = arith.maximumf %1023, %1024 : vector<16x32xf32>
    %c0_221 = arith.constant 0 : index
    %c0_222 = arith.constant 0 : index
    %1026 = vector.load %arg13[%c0_221, %c0_222] : memref<32x64xf32, #tpu.memory_space<vmem>>, vector<32x64xf32>
    %cst_223 = arith.constant dense<0.000000e+00> : vector<16x64xf32>
    %1027 = tpu.matmul %1025, %1026, %cst_223 {dimension_numbers = #tpu.dot_dimension_numbers<[1], [0], [0], [1], [0, 0, 1, 1], [], []>} : vector<16x32xf32>, vector<32x64xf32>, vector<16x64xf32> -> vector<16x64xf32>
    %c0_224 = arith.constant 0 : index
    %c0_225 = arith.constant 0 : index
    %1028 = vector.load %arg14[%c0_224, %c0_225] : memref<1x64xf32, #tpu.memory_space<vmem>>, vector<1x64xf32>
    %1029 = vector.broadcast %1028 : vector<1x64xf32> to vector<16x64xf32>
    %1030 = arith.addf %1027, %1029 : vector<16x64xf32>
    %cst_226 = arith.constant 0.000000e+00 : f32
    %1031 = vector.broadcast %cst_226 : f32 to vector<16x64xf32>
    %1032 = arith.maximumf %1030, %1031 : vector<16x64xf32>
    %c0_227 = arith.constant 0 : index
    %c0_228 = arith.constant 0 : index
    %1033 = vector.load %arg15[%c0_227, %c0_228] : memref<64x32xf32, #tpu.memory_space<vmem>>, vector<64x32xf32>
    %cst_229 = arith.constant dense<0.000000e+00> : vector<16x32xf32>
    %1034 = tpu.matmul %1032, %1033, %cst_229 {dimension_numbers = #tpu.dot_dimension_numbers<[1], [0], [0], [1], [0, 0, 1, 1], [], []>} : vector<16x64xf32>, vector<64x32xf32>, vector<16x32xf32> -> vector<16x32xf32>
    %c0_230 = arith.constant 0 : index
    %c0_231 = arith.constant 0 : index
    %1035 = vector.load %arg16[%c0_230, %c0_231] : memref<1x32xf32, #tpu.memory_space<vmem>>, vector<1x32xf32>
    %1036 = vector.broadcast %1035 : vector<1x32xf32> to vector<16x32xf32>
    %1037 = arith.addf %1034, %1036 : vector<16x32xf32>
    %cst_232 = arith.constant 0.000000e+00 : f32
    %1038 = vector.broadcast %cst_232 : f32 to vector<16x32xf32>
    %1039 = arith.maximumf %1037, %1038 : vector<16x32xf32>
    %c0_233 = arith.constant 0 : index
    %c0_234 = arith.constant 0 : index
    %1040 = vector.load %arg17[%c0_233, %c0_234] : memref<32x4xf32, #tpu.memory_space<vmem>>, vector<32x4xf32>
    %cst_235 = arith.constant dense<0.000000e+00> : vector<16x4xf32>
    %1041 = tpu.matmul %1039, %1040, %cst_235 {dimension_numbers = #tpu.dot_dimension_numbers<[1], [0], [0], [1], [0, 0, 1, 1], [], []>} : vector<16x32xf32>, vector<32x4xf32>, vector<16x4xf32> -> vector<16x4xf32>
    %c0_236 = arith.constant 0 : index
    %c0_237 = arith.constant 0 : index
    %1042 = vector.load %arg18[%c0_236, %c0_237] : memref<1x4xf32, #tpu.memory_space<vmem>>, vector<1x4xf32>
    %1043 = vector.broadcast %1042 : vector<1x4xf32> to vector<16x4xf32>
    %1044 = arith.addf %1041, %1043 : vector<16x4xf32>
    %1045 = vector.extract_strided_slice %1044 {offsets = [0, 0], sizes = [2, 4], strides = [1, 1]} : vector<16x4xf32> to vector<2x4xf32>
    %c0_238 = arith.constant 0 : index
    %c0_239 = arith.constant 0 : index
    %1046 = vector.load %arg19[%c0_238, %c0_239] : memref<2x32xf32, #tpu.memory_space<vmem>>, vector<2x4xf32>
    tpu.vector_store %arg19[%c0_238, %c0_239], %1045 {strides = array<i32>} : memref<2x32xf32, #tpu.memory_space<vmem>>, vector<2x4xf32>,
    %1047 = vector.extract_strided_slice %1044 {offsets = [2, 0], sizes = [2, 4], strides = [1, 1]} : vector<16x4xf32> to vector<2x4xf32>
    %c0_240 = arith.constant 0 : index
    %c4_241 = arith.constant 4 : index
    %1048 = vector.load %arg19[%c0_240, %c4_241] : memref<2x32xf32, #tpu.memory_space<vmem>>, vector<2x4xf32>
    tpu.vector_store %arg19[%c0_240, %c4_241], %1047 {strides = array<i32>} : memref<2x32xf32, #tpu.memory_space<vmem>>, vector<2x4xf32>,
    %1049 = vector.extract_strided_slice %1044 {offsets = [4, 0], sizes = [2, 4], strides = [1, 1]} : vector<16x4xf32> to vector<2x4xf32>
    %c0_242 = arith.constant 0 : index
    %c8_243 = arith.constant 8 : index
    %1050 = vector.load %arg19[%c0_242, %c8_243] : memref<2x32xf32, #tpu.memory_space<vmem>>, vector<2x4xf32>
    tpu.vector_store %arg19[%c0_242, %c8_243], %1049 {strides = array<i32>} : memref<2x32xf32, #tpu.memory_space<vmem>>, vector<2x4xf32>,
    %1051 = vector.extract_strided_slice %1044 {offsets = [6, 0], sizes = [2, 4], strides = [1, 1]} : vector<16x4xf32> to vector<2x4xf32>
    %c0_244 = arith.constant 0 : index
    %c12_245 = arith.constant 12 : index
    %1052 = vector.load %arg19[%c0_244, %c12_245] : memref<2x32xf32, #tpu.memory_space<vmem>>, vector<2x4xf32>
    tpu.vector_store %arg19[%c0_244, %c12_245], %1051 {strides = array<i32>} : memref<2x32xf32, #tpu.memory_space<vmem>>, vector<2x4xf32>,
    %1053 = vector.extract_strided_slice %1044 {offsets = [8, 0], sizes = [2, 4], strides = [1, 1]} : vector<16x4xf32> to vector<2x4xf32>
    %c0_246 = arith.constant 0 : index
    %c16 = arith.constant 16 : index
    %1054 = vector.load %arg19[%c0_246, %c16] : memref<2x32xf32, #tpu.memory_space<vmem>>, vector<2x4xf32>
    tpu.vector_store %arg19[%c0_246, %c16], %1053 {strides = array<i32>} : memref<2x32xf32, #tpu.memory_space<vmem>>, vector<2x4xf32>,
    %1055 = vector.extract_strided_slice %1044 {offsets = [10, 0], sizes = [2, 4], strides = [1, 1]} : vector<16x4xf32> to vector<2x4xf32>
    %c0_247 = arith.constant 0 : index
    %c20 = arith.constant 20 : index
    %1056 = vector.load %arg19[%c0_247, %c20] : memref<2x32xf32, #tpu.memory_space<vmem>>, vector<2x4xf32>
    tpu.vector_store %arg19[%c0_247, %c20], %1055 {strides = array<i32>} : memref<2x32xf32, #tpu.memory_space<vmem>>, vector<2x4xf32>,
    %1057 = vector.extract_strided_slice %1044 {offsets = [12, 0], sizes = [2, 4], strides = [1, 1]} : vector<16x4xf32> to vector<2x4xf32>
    %c0_248 = arith.constant 0 : index
    %c24 = arith.constant 24 : index
    %1058 = vector.load %arg19[%c0_248, %c24] : memref<2x32xf32, #tpu.memory_space<vmem>>, vector<2x4xf32>
    tpu.vector_store %arg19[%c0_248, %c24], %1057 {strides = array<i32>} : memref<2x32xf32, #tpu.memory_space<vmem>>, vector<2x4xf32>,
    %1059 = vector.extract_strided_slice %1044 {offsets = [14, 0], sizes = [2, 4], strides = [1, 1]} : vector<16x4xf32> to vector<2x4xf32>
    %c0_249 = arith.constant 0 : index
    %c28 = arith.constant 28 : index
    %1060 = vector.load %arg19[%c0_249, %c28] : memref<2x32xf32, #tpu.memory_space<vmem>>, vector<2x4xf32>
    tpu.vector_store %arg19[%c0_249, %c28], %1059 {strides = array<i32>} : memref<2x32xf32, #tpu.memory_space<vmem>>, vector<2x4xf32>,
    return
  }
}

</mosaic_0001>

<llo_original>
// kernel: pqrnn_forward.1
$region0: #{pqrnn_forward.1}
  #allocation0 [shape = 'u32[]', space=smem, size = 0x4, offset = 0x4, fixed_abs, tag = 'smem constant byte address 0x4 - core index']
  #allocation1 [shape = 'u32[144,128]{1,0:T(1,128)}', space=vmem, size = 0x12000, scoped, tag = 'internal scratch']
  #allocation2 [shape = 'f32[16,64]{1,0:T(8,128)}', space=vmem, size = 0x2000, scoped, tag = 'scratch operand']
  #allocation3 [shape = 'f32[16,64]{1,0:T(8,128)}', space=vmem, size = 0x2000, scoped, tag = 'scratch operand']
  %s0 = inlined_call_operand.vmem [shape: f32[16,64], index: 0, kind: input, shape index: {}]
  %s1 = inlined_call_operand.vmem [shape: f32[64,192], index: 1, kind: input, shape index: {}]
  %s2 = inlined_call_operand.vmem [shape: f32[1,192], index: 2, kind: input, shape index: {}]
  %s3 = inlined_call_operand.hbm [shape: f32[32,96], index: 3, kind: input, shape index: {}]
  %s4 = inlined_call_operand.hbm [shape: f32[32,96], index: 4, kind: input, shape index: {}]
  %s5 = inlined_call_operand.hbm [shape: f32[1,32], index: 5, kind: input, shape index: {}]
  %s6 = inlined_call_operand.hbm [shape: f32[1,32], index: 6, kind: input, shape index: {}]
  %s7 = inlined_call_operand.hbm [shape: f32[64,192], index: 7, kind: input, shape index: {}]
  %s8 = inlined_call_operand.vmem [shape: f32[1,192], index: 8, kind: input, shape index: {}]
  %s9 = inlined_call_operand.vmem [shape: f32[32,96], index: 9, kind: input, shape index: {}]
  %s10 = inlined_call_operand.hbm [shape: f32[32,96], index: 10, kind: input, shape index: {}]
  %s11 = inlined_call_operand.vmem [shape: f32[1,32], index: 11, kind: input, shape index: {}]
  %s12 = inlined_call_operand.vmem [shape: f32[1,32], index: 12, kind: input, shape index: {}]
  %s13 = inlined_call_operand.hbm [shape: f32[32,64], index: 13, kind: input, shape index: {}]
  %s14 = inlined_call_operand.vmem [shape: f32[1,64], index: 14, kind: input, shape index: {}]
  %s15 = inlined_call_operand.vmem [shape: f32[64,32], index: 15, kind: input, shape index: {}]
  %s16 = inlined_call_operand.vmem [shape: f32[1,32], index: 16, kind: input, shape index: {}]
  %s17 = inlined_call_operand.vmem [shape: f32[32,4], index: 17, kind: input, shape index: {}]
  %s18 = inlined_call_operand.vmem [shape: f32[1,4], index: 18, kind: input, shape index: {}]
  %s19 = inlined_call_operand.vmem [shape: f32[2,32], index: 19, kind: output, shape index: {}]
  %s20 = sld [smem:[#allocation0]]
  $region114: #{pqrnn_forward.1} parent=0
    _
  %s22 = ssub.s32 1, %s20
  %s23 = scalar_select 0, %s22, %s20
  $region1: #{pqrnn_forward.1} parent=0
    #allocation4 [shape = 'u8[16384]{0}', space=vmem, size = 0x4000, scoped, tag = 'input window, operand 3, single buffered']
    #allocation5 [shape = 's32[1]{0}', space=sflag, size = 0x4, scoped, tag = 'scoped memory for pqrnn_forward.1']
    #allocation6 [shape = 'u8[16384]{0}', space=vmem, size = 0x4000, scoped, tag = 'input window, operand 4, single buffered']
    #allocation7 [shape = 's32[1]{0}', space=sflag, size = 0x4, scoped, tag = 'scoped memory for pqrnn_forward.1']
    #allocation8 [shape = 'u8[512]{0}', space=vmem, size = 0x400, scoped, tag = 'input window, operand 5, single buffered']
    #allocation9 [shape = 'u8[512]{0}', space=vmem, size = 0x400, scoped, tag = 'input window, operand 6, single buffered']
    #allocation10 [shape = 's32[1]{0}', space=sflag, size = 0x4, scoped, tag = 'scoped memory for pqrnn_forward.1']
    #allocation11 [shape = 'u8[65536]{0}', space=vmem, size = 0x10000, scoped, tag = 'input window, operand 7, single buffered']
    #allocation12 [shape = 'u8[16384]{0}', space=vmem, size = 0x4000, scoped, tag = 'input window, operand 10, single buffered']
    #allocation13 [shape = 's32[1]{0}', space=sflag, size = 0x4, scoped, tag = 'scoped memory for pqrnn_forward.1']
    #allocation14 [shape = 'u8[16384]{0}', space=vmem, size = 0x4000, scoped, tag = 'input window, operand 13, single buffered']
    %24 = vsyncpa [#allocation5], 0
    %25 = vsyncpa [#allocation7], 0
    %26 = vsyncpa [#allocation10], 0
    %27 = vsyncpa [#allocation13], 0
    // Predicated region
    $region2: #{pqrnn_forward.1} parent=1 // pred_check
      _
    $region3: #{pqrnn_forward.1} parent=1 // pred_check_branch
      %29 = sbr.rel (0) target = $region5
    $region4: #{pqrnn_forward.1} parent=1 // pred_region
      _
    $region5: #{pqrnn_forward.1} parent=1 // pred_fallthru
      _
    // Predicated region
    $region6: #{pqrnn_forward.1} parent=1 // pred_check
      _
    $region7: #{pqrnn_forward.1} parent=1 // pred_check_branch
      %31 = sbr.rel (0) target = $region9
    $region8: #{pqrnn_forward.1} parent=1 // pred_region
      _
    $region9: #{pqrnn_forward.1} parent=1 // pred_fallthru
      _
    // Predicated region
    $region10: #{pqrnn_forward.1} parent=1 // pred_check
      _
    $region11: #{pqrnn_forward.1} parent=1 // pred_check_branch
      %33 = sbr.rel (0) target = $region13
    $region12: #{pqrnn_forward.1} parent=1 // pred_region
      _
    $region13: #{pqrnn_forward.1} parent=1 // pred_fallthru
      _
    // Predicated region
    $region14: #{pqrnn_forward.1} parent=1 // pred_check
      _
    $region15: #{pqrnn_forward.1} parent=1 // pred_check_branch
      %35 = sbr.rel (0) target = $region17
    $region16: #{pqrnn_forward.1} parent=1 // pred_region
      %s37 = ssub.s32 512, 512
      %38 = vsyncadd [#allocation5], %s37
      %s39 = sshll.u32 [#allocation4], 4
      %s40 = int_to_ptr.vmem [resolvable:$true] %s39
      %45 = dma.hbm_to_vmem [thread:$0]  %s3, 512, %s40, [#allocation5], 128, 128, 8
    $region17: #{pqrnn_forward.1} parent=1 // pred_fallthru
      _
    // Predicated region
    $region18: #{pqrnn_forward.1} parent=1 // pred_check
      _
    $region19: #{pqrnn_forward.1} parent=1 // pred_check_branch
      %47 = sbr.rel (0) target = $region21
    $region20: #{pqrnn_forward.1} parent=1 // pred_region
      %s49 = ssub.s32 512, 512
      %50 = vsyncadd [#allocation7], %s49
      %s51 = sshll.u32 [#allocation6], 4
      %s52 = int_to_ptr.vmem [resolvable:$true] %s51
      %57 = dma.hbm_to_vmem [thread:$0]  %s4, 512, %s52, [#allocation7], 128, 128, 8
    $region21: #{pqrnn_forward.1} parent=1 // pred_fallthru
      _
    // Predicated region
    $region22: #{pqrnn_forward.1} parent=1 // pred_check
      _
    $region23: #{pqrnn_forward.1} parent=1 // pred_check_branch
      %59 = sbr.rel (0) target = $region25
    $region24: #{pqrnn_forward.1} parent=1 // pred_region
      %s61 = ssub.s32 16, 16
      %62 = vsyncadd [#allocation7], %s61
      %s64 = sshll.u32 [#allocation8], 4
      %s65 = int_to_ptr.vmem [resolvable:$true] %s64
      %67 = dma.hbm_to_vmem [thread:$0]  %s5, 16, %s65, [#allocation7]
    $region25: #{pqrnn_forward.1} parent=1 // pred_fallthru
      _
    // Predicated region
    $region26: #{pqrnn_forward.1} parent=1 // pred_check
      _
    $region27: #{pqrnn_forward.1} parent=1 // pred_check_branch
      %69 = sbr.rel (0) target = $region29
    $region28: #{pqrnn_forward.1} parent=1 // pred_region
      %s71 = ssub.s32 16, 16
      %72 = vsyncadd [#allocation10], %s71
      %s74 = sshll.u32 [#allocation9], 4
      %s75 = int_to_ptr.vmem [resolvable:$true] %s74
      %77 = dma.hbm_to_vmem [thread:$0]  %s6, 16, %s75, [#allocation10]
    $region29: #{pqrnn_forward.1} parent=1 // pred_fallthru
      _
    // Predicated region
    $region30: #{pqrnn_forward.1} parent=1 // pred_check
      _
    $region31: #{pqrnn_forward.1} parent=1 // pred_check_branch
      %79 = sbr.rel (0) target = $region33
    $region32: #{pqrnn_forward.1} parent=1 // pred_region
      %s81 = ssub.s32 2048, 2048
      %82 = vsyncadd [#allocation10], %s81
      %s83 = sshll.u32 [#allocation11], 4
      %s84 = int_to_ptr.vmem [resolvable:$true] %s83
      %89 = dma.hbm_to_vmem [thread:$0]  %s7, 2048, %s84, [#allocation10], 256, 256, 16
    $region33: #{pqrnn_forward.1} parent=1 // pred_fallthru
      _
    // Predicated region
    $region34: #{pqrnn_forward.1} parent=1 // pred_check
      _
    $region35: #{pqrnn_forward.1} parent=1 // pred_check_branch
      %91 = sbr.rel (0) target = $region37
    $region36: #{pqrnn_forward.1} parent=1 // pred_region
      _
    $region37: #{pqrnn_forward.1} parent=1 // pred_fallthru
      _
    // Predicated region
    $region38: #{pqrnn_forward.1} parent=1 // pred_check
      _
    $region39: #{pqrnn_forward.1} parent=1 // pred_check_branch
      %93 = sbr.rel (0) target = $region41
    $region40: #{pqrnn_forward.1} parent=1 // pred_region
      _
    $region41: #{pqrnn_forward.1} parent=1 // pred_fallthru
      _
    // Predicated region
    $region42: #{pqrnn_forward.1} parent=1 // pred_check
      _
    $region43: #{pqrnn_forward.1} parent=1 // pred_check_branch
      %95 = sbr.rel (0) target = $region45
    $region44: #{pqrnn_forward.1} parent=1 // pred_region
      %s97 = ssub.s32 512, 512
      %98 = vsyncadd [#allocation13], %s97
      %s99 = sshll.u32 [#allocation12], 4
      %s100 = int_to_ptr.vmem [resolvable:$true] %s99
      %105 = dma.hbm_to_vmem [thread:$0]  %s10, 512, %s100, [#allocation13], 128, 128, 8
    $region45: #{pqrnn_forward.1} parent=1 // pred_fallthru
      _
    // Predicated region
    $region46: #{pqrnn_forward.1} parent=1 // pred_check
      _
    $region47: #{pqrnn_forward.1} parent=1 // pred_check_branch
      %107 = sbr.rel (0) target = $region49
    $region48: #{pqrnn_forward.1} parent=1 // pred_region
      _
    $region49: #{pqrnn_forward.1} parent=1 // pred_fallthru
      _
    // Predicated region
    $region50: #{pqrnn_forward.1} parent=1 // pred_check
      _
    $region51: #{pqrnn_forward.1} parent=1 // pred_check_branch
      %109 = sbr.rel (0) target = $region53
    $region52: #{pqrnn_forward.1} parent=1 // pred_region
      _
    $region53: #{pqrnn_forward.1} parent=1 // pred_fallthru
      _
    // Predicated region
    $region54: #{pqrnn_forward.1} parent=1 // pred_check
      _
    $region55: #{pqrnn_forward.1} parent=1 // pred_check_branch
      %111 = sbr.rel (0) target = $region57
    $region56: #{pqrnn_forward.1} parent=1 // pred_region
      %s113 = ssub.s32 512, 512
      %114 = vsyncadd [#allocation13], %s113
      %s115 = sshll.u32 [#allocation14], 4
      %s116 = int_to_ptr.vmem [resolvable:$true] %s115
      %121 = dma.hbm_to_vmem [thread:$0]  %s13, 512, %s116, [#allocation13], 128, 128, 8
    $region57: #{pqrnn_forward.1} parent=1 // pred_fallthru
      _
    // Predicated region
    $region58: #{pqrnn_forward.1} parent=1 // pred_check
      _
    $region59: #{pqrnn_forward.1} parent=1 // pred_check_branch
      %123 = sbr.rel (0) target = $region61
    $region60: #{pqrnn_forward.1} parent=1 // pred_region
      _
    $region61: #{pqrnn_forward.1} parent=1 // pred_fallthru
      _
    // Predicated region
    $region62: #{pqrnn_forward.1} parent=1 // pred_check
      _
    $region63: #{pqrnn_forward.1} parent=1 // pred_check_branch
      %125 = sbr.rel (0) target = $region65
    $region64: #{pqrnn_forward.1} parent=1 // pred_region
      _
    $region65: #{pqrnn_forward.1} parent=1 // pred_fallthru
      _
    // Predicated region
    $region66: #{pqrnn_forward.1} parent=1 // pred_check
      _
    $region67: #{pqrnn_forward.1} parent=1 // pred_check_branch
      %127 = sbr.rel (0) target = $region69
    $region68: #{pqrnn_forward.1} parent=1 // pred_region
      _
    $region69: #{pqrnn_forward.1} parent=1 // pred_fallthru
      _
    // Predicated region
    $region70: #{pqrnn_forward.1} parent=1 // pred_check
      _
    $region71: #{pqrnn_forward.1} parent=1 // pred_check_branch
      %129 = sbr.rel (0) target = $region73
    $region72: #{pqrnn_forward.1} parent=1 // pred_region
      _
    $region73: #{pqrnn_forward.1} parent=1 // pred_fallthru
      _
    // Predicated region
    $region74: #{pqrnn_forward.1} parent=1 // pred_check
      _
    $region75: #{pqrnn_forward.1} parent=1 // pred_check_branch
      %131 = sbr.rel (0) target = $region77
    $region76: #{pqrnn_forward.1} parent=1 // pred_region
      _
    $region77: #{pqrnn_forward.1} parent=1 // pred_fallthru
      _
    // Predicated region
    $region78: #{pqrnn_forward.1} parent=1 // pred_check
      _
    $region79: #{pqrnn_forward.1} parent=1 // pred_check_branch
      %133 = sbr.rel (0) target = $region81
    $region80: #{pqrnn_forward.1} parent=1 // pred_region
      %134 = dma.done [#allocation5], 512
    $region81: #{pqrnn_forward.1} parent=1 // pred_fallthru
      _
    // Predicated region
    $region82: #{pqrnn_forward.1} parent=1 // pred_check
      _
    $region83: #{pqrnn_forward.1} parent=1 // pred_check_branch
      %136 = sbr.rel (0) target = $region85
    $region84: #{pqrnn_forward.1} parent=1 // pred_region
      %137 = dma.done [#allocation7], 512
    $region85: #{pqrnn_forward.1} parent=1 // pred_fallthru
      _
    // Predicated region
    $region86: #{pqrnn_forward.1} parent=1 // pred_check
      _
    $region87: #{pqrnn_forward.1} parent=1 // pred_check_branch
      %139 = sbr.rel (0) target = $region89
    $region88: #{pqrnn_forward.1} parent=1 // pred_region
      %140 = dma.done [#allocation7], 16
    $region89: #{pqrnn_forward.1} parent=1 // pred_fallthru
      _
    // Predicated region
    $region90: #{pqrnn_forward.1} parent=1 // pred_check
      _
    $region91: #{pqrnn_forward.1} parent=1 // pred_check_branch
      %142 = sbr.rel (0) target = $region93
    $region92: #{pqrnn_forward.1} parent=1 // pred_region
      %143 = dma.done [#allocation10], 16
    $region93: #{pqrnn_forward.1} parent=1 // pred_fallthru
      _
    // Predicated region
    $region94: #{pqrnn_forward.1} parent=1 // pred_check
      _
    $region95: #{pqrnn_forward.1} parent=1 // pred_check_branch
      %145 = sbr.rel (0) target = $region97
    $region96: #{pqrnn_forward.1} parent=1 // pred_region
      %146 = dma.done [#allocation10], 2048
    $region97: #{pqrnn_forward.1} parent=1 // pred_fallthru
      _
    // Predicated region
    $region98: #{pqrnn_forward.1} parent=1 // pred_check
      _
    $region99: #{pqrnn_forward.1} parent=1 // pred_check_branch
      %148 = sbr.rel (0) target = $region101
    $region100: #{pqrnn_forward.1} parent=1 // pred_region
      %149 = dma.done [#allocation13], 512
    $region101: #{pqrnn_forward.1} parent=1 // pred_fallthru
      _
    // Predicated region
    $region102: #{pqrnn_forward.1} parent=1 // pred_check
      _
    $region103: #{pqrnn_forward.1} parent=1 // pred_check_branch
      %151 = sbr.rel (0) target = $region105
    $region104: #{pqrnn_forward.1} parent=1 // pred_region
      %152 = dma.done [#allocation13], 512
    $region105: #{pqrnn_forward.1} parent=1 // pred_fallthru
      _
    %v153 = vld [vmem:[%s0] sm:$0xff]
    %v154 = vld [vmem:[%s0 + $0x8] sm:$0xff]
    %v155 = vmax.f32 %v153, -1.0
    %v156 = vmax.f32 %v154, -1.0
    %v157 = vmin.f32 %v155, 1.0
    %v158 = vmin.f32 %v156, 1.0
    %v159 = vld [vmem:[%s1] sm:$0xff]
    %v160 = vld [vmem:[%s1 + $0x8] sm:$0xff]
    %v161 = vld [vmem:[%s1 + $0x10] sm:$0xff]
    %v162 = vld [vmem:[%s1 + $0x18] sm:$0xff]
    %v163 = vld [vmem:[%s1 + $0x20] sm:$0xff]
    %v164 = vld [vmem:[%s1 + $0x28] sm:$0xff]
    %v165 = vld [vmem:[%s1 + $0x30] sm:$0xff]
    %v166 = vld [vmem:[%s1 + $0x38] sm:$0xff]
    %v167 = vld [vmem:[%s1 + $0x40] sm:$0xff]
    %v168 = vld [vmem:[%s1 + $0x48] sm:$0xff]
    %v169 = vld [vmem:[%s1 + $0x50] sm:$0xff]
    %v170 = vld [vmem:[%s1 + $0x58] sm:$0xff]
    %v171 = vld [vmem:[%s1 + $0x60] sm:$0xff]
    %v172 = vld [vmem:[%s1 + $0x68] sm:$0xff]
    %v173 = vld [vmem:[%s1 + $0x70] sm:$0xff]
    %v174 = vld [vmem:[%s1 + $0x78] sm:$0xff]
    %v175 = vld [vmem:[%s2] sm:$0x3]
    %v177 = vlaneseq
    %v178 = vshrl.u32 %v177, 7
    %v179 = vsub.s32 0, %v178
    %v180 = vrot.slane %v175, %v179
    %v181 = vlaneseq
    %v182 = vshrl.u32 %v181, 7
    %v183 = vsub.s32 1, %v182
    %v184 = vrot.slane %v175, %v183
    %vm187 = vcmask 523264
    %v189 = vsel %vm187, %v157, 0
    %v192 = vsel %vm187, %v158, 0
    %194 = vmatprep.subr.mxu0 %v160
    %195 = vmatpush1.msra.mxu0 %v159
    %196 = vmatprep.subr.mxu0 %v162
    %197 = vmatpush1.msra.mxu0 %v161
    %198 = vmatprep.subr.mxu0 %v164
    %199 = vmatpush1.msra.mxu0 %v163
    %200 = vmatprep.subr.mxu0 %v166
    %201 = vmatpush1.msra.mxu0 %v165
    %202 = vmatprep.subr.mxu0 %v168
    %203 = vmatpush1.msra.mxu0 %v167
    %204 = vmatprep.subr.mxu0 %v170
    %205 = vmatpush1.msra.mxu0 %v169
    %206 = vmatprep.subr.mxu0 %v172
    %207 = vmatpush1.msra.mxu0 %v171
    %208 = vmatprep.subr.mxu0 %v174
    %209 = vmatpush1.msra.mxu0 %v173
    %210 = vmatprep.subr.mxu0 0.0
    %211 = vmatpush1.msra.mxu0 0.0
    %212 = vmatprep.subr.mxu0 0.0
    %213 = vmatpush1.msra.mxu0 0.0
    %214 = vmatprep.subr.mxu0 0.0
    %215 = vmatpush1.msra.mxu0 0.0
    %216 = vmatprep.subr.mxu0 0.0
    %217 = vmatpush1.msra.mxu0 0.0
    %218 = vmatprep.subr.mxu0 0.0
    %219 = vmatpush1.msra.mxu0 0.0
    %220 = vmatprep.subr.mxu0 0.0
    %221 = vmatpush1.msra.mxu0 0.0
    %222 = vmatprep.subr.mxu0 0.0
    %223 = vmatpush1.msra.mxu0 0.0
    %224 = vmatprep.subr.mxu0 0.0
    %225 = vmatpush1.msra.mxu0 0.0
    %226 = vmatprep.subr.mxu0 0.0
    %227 = vmatpush1.msra.mxu0 0.0
    %228 = vmatprep.subr.mxu0 0.0
    %229 = vmatpush1.msra.mxu0 0.0
    %230 = vmatprep.subr.mxu0 0.0
    %231 = vmatpush1.msra.mxu0 0.0
    %232 = vmatprep.subr.mxu0 0.0
    %233 = vmatpush1.msra.mxu0 0.0
    %234 = vmatprep.subr.mxu0 0.0
    %235 = vmatpush1.msra.mxu0 0.0
    %236 = vmatprep.subr.mxu0 0.0
    %237 = vmatpush1.msra.mxu0 0.0
    %238 = vmatprep.subr.mxu0 0.0
    %239 = vmatpush1.msra.mxu0 0.0
    %240 = vmatprep.subr.mxu0 0.0
    %241 = vmatpush1.msra.mxu0 0.0
    %242 = vmatprep.subr.mxu0 0.0
    %243 = vmatpush1.msra.mxu0 0.0
    %244 = vmatprep.subr.mxu0 0.0
    %245 = vmatpush1.msra.mxu0 0.0
    %246 = vmatprep.subr.mxu0 0.0
    %247 = vmatpush1.msra.mxu0 0.0
    %248 = vmatprep.subr.mxu0 0.0
    %249 = vmatpush1.msra.mxu0 0.0
    %250 = vmatprep.subr.mxu0 0.0
    %251 = vmatpush1.msra.mxu0 0.0
    %252 = vmatprep.subr.mxu0 0.0
    %253 = vmatpush1.msra.mxu0 0.0
    %254 = vmatprep.subr.mxu0 0.0
    %255 = vmatpush1.msra.mxu0 0.0
    %256 = vmatprep.subr.mxu0 0.0
    %257 = vmatpush1.msra.mxu0 0.0
    %258 = vmatprep.mubr.f32.mxu0 0.0
    %259 = vmatmul.mubr.f32.gmra.mrb[0].mxu0 %v189
    %v260 = vpop.f32.mrb[0].mxu0
    %v261 = vadd.f32 %v180, %v260
    %v262 = vpop.f32.mrb[0].mxu0
    %v263 = vadd.f32 %v184, %v262
    %264 = vmatprep.mubr.f32.mxu0 0.0
    %265 = vmatmul.mubr.f32.gmra.mrb[0].mxu0 %v192
    %v266 = vpop.f32.mrb[0].mxu0
    %v267 = vadd.f32 %v180, %v266
    %v268 = vpop.f32.mrb[0].mxu0
    %v269 = vadd.f32 %v184, %v268
    %270 = vdwg.mxu0
    %v271 = vld [vmem:[#allocation4] sm:$0xff]
    %v272 = vld [vmem:[#allocation4 + $0x8] sm:$0xff]
    %v273 = vld [vmem:[#allocation4 + $0x10] sm:$0xff]
    %v274 = vld [vmem:[#allocation4 + $0x18] sm:$0xff]
    %v275 = vld [vmem:[#allocation6] sm:$0xff]
    %v276 = vld [vmem:[#allocation6 + $0x8] sm:$0xff]
    %v277 = vld [vmem:[#allocation6 + $0x10] sm:$0xff]
    %v278 = vld [vmem:[#allocation6 + $0x18] sm:$0xff]
    %v279 = vld [vmem:[#allocation8] sm:$0x1]
    %v280 = vld [vmem:[#allocation9] sm:$0x1]
    %vm281 = vcmask 261120
    %v283 = vsel %vm281, 0.0, 0
    %285 = vmatprep.subr.mxu0 0.0
    %286 = vmatpush1.msra.mxu0 %v271
    %287 = vmatprep.subr.mxu0 0.0
    %288 = vmatpush1.msra.mxu0 %v272
    %289 = vmatprep.subr.mxu0 0.0
    %290 = vmatpush1.msra.mxu0 %v273
    %291 = vmatprep.subr.mxu0 0.0
    %292 = vmatpush1.msra.mxu0 %v274
    %293 = vmatprep.subr.mxu0 0.0
    %294 = vmatpush1.msra.mxu0 0.0
    %295 = vmatprep.subr.mxu0 0.0
    %296 = vmatpush1.msra.mxu0 0.0
    %297 = vmatprep.subr.mxu0 0.0
    %298 = vmatpush1.msra.mxu0 0.0
    %299 = vmatprep.subr.mxu0 0.0
    %300 = vmatpush1.msra.mxu0 0.0
    %301 = vmatprep.subr.mxu0 0.0
    %302 = vmatpush1.msra.mxu0 0.0
    %303 = vmatprep.subr.mxu0 0.0
    %304 = vmatpush1.msra.mxu0 0.0
    %305 = vmatprep.subr.mxu0 0.0
    %306 = vmatpush1.msra.mxu0 0.0
    %307 = vmatprep.subr.mxu0 0.0
    %308 = vmatpush1.msra.mxu0 0.0
    %309 = vmatprep.subr.mxu0 0.0
    %310 = vmatpush1.msra.mxu0 0.0
    %311 = vmatprep.subr.mxu0 0.0
    %312 = vmatpush1.msra.mxu0 0.0
    %313 = vmatprep.subr.mxu0 0.0
    %314 = vmatpush1.msra.mxu0 0.0
    %315 = vmatprep.subr.mxu0 0.0
    %316 = vmatpush1.msra.mxu0 0.0
    %317 = vmatprep.subr.mxu0 0.0
    %318 = vmatpush1.msra.mxu0 0.0
    %319 = vmatprep.subr.mxu0 0.0
    %320 = vmatpush1.msra.mxu0 0.0
    %321 = vmatprep.subr.mxu0 0.0
    %322 = vmatpush1.msra.mxu0 0.0
    %323 = vmatprep.subr.mxu0 0.0
    %324 = vmatpush1.msra.mxu0 0.0
    %325 = vmatprep.subr.mxu0 0.0
    %326 = vmatpush1.msra.mxu0 0.0
    %327 = vmatprep.subr.mxu0 0.0
    %328 = vmatpush1.msra.mxu0 0.0
    %329 = vmatprep.subr.mxu0 0.0
    %330 = vmatpush1.msra.mxu0 0.0
    %331 = vmatprep.subr.mxu0 0.0
    %332 = vmatpush1.msra.mxu0 0.0
    %333 = vmatprep.subr.mxu0 0.0
    %334 = vmatpush1.msra.mxu0 0.0
    %335 = vmatprep.subr.mxu0 0.0
    %336 = vmatpush1.msra.mxu0 0.0
    %337 = vmatprep.subr.mxu0 0.0
    %338 = vmatpush1.msra.mxu0 0.0
    %339 = vmatprep.subr.mxu0 0.0
    %340 = vmatpush1.msra.mxu0 0.0
    %341 = vmatprep.subr.mxu0 0.0
    %342 = vmatpush1.msra.mxu0 0.0
    %343 = vmatprep.subr.mxu0 0.0
    %344 = vmatpush1.msra.mxu0 0.0
    %345 = vmatprep.subr.mxu0 0.0
    %346 = vmatpush1.msra.mxu0 0.0
    %347 = vmatprep.subr.mxu0 0.0
    %348 = vmatpush1.msra.mxu0 0.0
    %349 = vmatprep.mubr.f32.mxu0 0.0
    %350 = vmatmul.mubr.f32.gmra.mrb[0].mxu0 %v283
    %v351 = vpop.f32.mrb[0].mxu0
    %v352 = vadd.f32 0.0, %v351
    %v353 = vpop.f32.mrb[0].mxu0
    %354 = vdwg.mxu0
    %v355 = vadd.f32 %v261, %v352
    %v356 = vxor.u32 %v355, 2147483648
    %v357 = vmul.f32 %v356, 1.442695
    %v358 = vpow.pop %v357
    %v359 = vadd.f32 %v358, 1.0
    %v360 = vrcp.pop %v359
    %v361 = vmul.f32 1.0, %v360
    %v363 = vlaneseq
    %v364 = vshrl.u32 %v363, 7
    %v365 = vsub.s32 0, %v364
    %v366 = vrot.slane %v279, %v365
    %367 = vrot.lane.b32.xlu0 %v366, 64
    %v368 = vpop.permute.xlu0 %367
    %v370 = vadd.f32 %v352, %v368
    %372 = vrot.lane.b32.xlu0 %v370, 64
    %v373 = vpop.permute.xlu0 %372
    %v375 = vmul.f32 %v361, %v373
    %377 = vrot.lane.b32.xlu0 %v375, 64
    %v378 = vpop.permute.xlu0 %377
    %v380 = vadd.f32 %v261, %v378
    %v381 = vtanh.pop %v380
    %v382 = vsub.f32 1.0, %v361
    %384 = vrot.lane.b32.xlu0 %v381, 96
    %v385 = vpop.permute.xlu0 %384
    %v387 = vmul.f32 %v382, %v385
    %v388 = vmul.f32 %v361, 0.0
    %v389 = vadd.f32 %v387, %v388
    %391 = vrot.lane.b32.xlu0 %v389, 96
    %v392 = vpop.permute.xlu0 %391
    %vm394 = vcmask 254976
    %395 = vst.msk [vmem:[#allocation2] sm:$0x3] %vm394, %v392
    %396 = vmatprep.subr.mxu0 0.0
    %397 = vmatpush1.msra.mxu0 %v275
    %398 = vmatprep.subr.mxu0 0.0
    %399 = vmatpush1.msra.mxu0 %v276
    %400 = vmatprep.subr.mxu0 0.0
    %401 = vmatpush1.msra.mxu0 %v277
    %402 = vmatprep.subr.mxu0 0.0
    %403 = vmatpush1.msra.mxu0 %v278
    %404 = vmatprep.subr.mxu0 0.0
    %405 = vmatpush1.msra.mxu0 0.0
    %406 = vmatprep.subr.mxu0 0.0
    %407 = vmatpush1.msra.mxu0 0.0
    %408 = vmatprep.subr.mxu0 0.0
    %409 = vmatpush1.msra.mxu0 0.0
    %410 = vmatprep.subr.mxu0 0.0
    %411 = vmatpush1.msra.mxu0 0.0
    %412 = vmatprep.subr.mxu0 0.0
    %413 = vmatpush1.msra.mxu0 0.0
    %414 = vmatprep.subr.mxu0 0.0
    %415 = vmatpush1.msra.mxu0 0.0
    %416 = vmatprep.subr.mxu0 0.0
    %417 = vmatpush1.msra.mxu0 0.0
    %418 = vmatprep.subr.mxu0 0.0
    %419 = vmatpush1.msra.mxu0 0.0
    %420 = vmatprep.subr.mxu0 0.0
    %421 = vmatpush1.msra.mxu0 0.0
    %422 = vmatprep.subr.mxu0 0.0
    %423 = vmatpush1.msra.mxu0 0.0
    %424 = vmatprep.subr.mxu0 0.0
    %425 = vmatpush1.msra.mxu0 0.0
    %426 = vmatprep.subr.mxu0 0.0
    %427 = vmatpush1.msra.mxu0 0.0
    %428 = vmatprep.subr.mxu0 0.0
    %429 = vmatpush1.msra.mxu0 0.0
    %430 = vmatprep.subr.mxu0 0.0
    %431 = vmatpush1.msra.mxu0 0.0
    %432 = vmatprep.subr.mxu0 0.0
    %433 = vmatpush1.msra.mxu0 0.0
    %434 = vmatprep.subr.mxu0 0.0
    %435 = vmatpush1.msra.mxu0 0.0
    %436 = vmatprep.subr.mxu0 0.0
    %437 = vmatpush1.msra.mxu0 0.0
    %438 = vmatprep.subr.mxu0 0.0
    %439 = vmatpush1.msra.mxu0 0.0
    %440 = vmatprep.subr.mxu0 0.0
    %441 = vmatpush1.msra.mxu0 0.0
    %442 = vmatprep.subr.mxu0 0.0
    %443 = vmatpush1.msra.mxu0 0.0
    %444 = vmatprep.subr.mxu0 0.0
    %445 = vmatpush1.msra.mxu0 0.0
    %446 = vmatprep.subr.mxu0 0.0
    %447 = vmatpush1.msra.mxu0 0.0
    %448 = vmatprep.subr.mxu0 0.0
    %449 = vmatpush1.msra.mxu0 0.0
    %450 = vmatprep.subr.mxu0 0.0
    %451 = vmatpush1.msra.mxu0 0.0
    %452 = vmatprep.subr.mxu0 0.0
    %453 = vmatpush1.msra.mxu0 0.0
    %454 = vmatprep.subr.mxu0 0.0
    %455 = vmatpush1.msra.mxu0 0.0
    %456 = vmatprep.subr.mxu0 0.0
    %457 = vmatpush1.msra.mxu0 0.0
    %458 = vmatprep.subr.mxu0 0.0
    %459 = vmatpush1.msra.mxu0 0.0
    %460 = vmatprep.mubr.f32.mxu0 0.0
    %461 = vmatmul.mubr.f32.gmra.mrb[0].mxu0 %v283
    %v462 = vpop.f32.mrb[0].mxu0
    %v463 = vadd.f32 0.0, %v462
    %v464 = vpop.f32.mrb[0].mxu0
    %465 = vdwg.mxu0
    %v467 = vrot.slane %v463, 2
    %468 = vrot.lane.b32.xlu0 %v467, 96
    %v469 = vpop.permute.xlu0 %468
    %v471 = vadd.f32 %v267, %v469
    %v472 = vxor.u32 %v471, 2147483648
    %v473 = vmul.f32 %v472, 1.442695
    %v474 = vpow.pop %v473
    %v475 = vadd.f32 %v474, 1.0
    %v476 = vrcp.pop %v475
    %v477 = vmul.f32 1.0, %v476
    %v478 = vadd.f32 %v269, %v469
    %v479 = vxor.u32 %v478, 2147483648
    %v480 = vmul.f32 %v479, 1.442695
    %v481 = vpow.pop %v480
    %v482 = vadd.f32 %v481, 1.0
    %v483 = vrcp.pop %v482
    %v484 = vmul.f32 1.0, %v483
    %v486 = vlaneseq
    %v487 = vshrl.u32 %v486, 7
    %v488 = vsub.s32 0, %v487
    %v489 = vrot.slane %v280, %v488
    %490 = vrot.lane.b32.xlu0 %v489, 64
    %v491 = vpop.permute.xlu0 %490
    %v493 = vadd.f32 %v463, %v491
    %v495 = vrot.slane %v493, 2
    %496 = vrot.lane.b32.xlu0 %v495, 32
    %v497 = vpop.permute.xlu0 %496
    %v499 = vmul.f32 %v477, %v497
    %501 = vrot.lane.b32.xlu0 %v499, 64
    %v502 = vpop.permute.xlu0 %501
    %v504 = vadd.f32 %v269, %v502
    %v505 = vtanh.pop %v504
    %v506 = vsub.f32 1.0, %v484
    %508 = vrot.lane.b32.xlu0 %v505, 96
    %v509 = vpop.permute.xlu0 %508
    %v511 = vmul.f32 %v506, %v509
    %v512 = vmul.f32 %v484, 0.0
    %v513 = vadd.f32 %v511, %v512
    %515 = vrot.lane.b32.xlu0 %v513, 32
    %v516 = vpop.permute.xlu0 %515
    %vm518 = vcmask 523526
    %519 = vst.msk [vmem:[#allocation2 + $0x8] sm:$0xc0] %vm518, %v516
    %v520 = vsel %vm281, %v392, 0
    %522 = vmatprep.subr.mxu0 0.0
    %523 = vmatpush1.msra.mxu0 %v271
    %524 = vmatprep.subr.mxu0 0.0
    %525 = vmatpush1.msra.mxu0 %v272
    %526 = vmatprep.subr.mxu0 0.0
    %527 = vmatpush1.msra.mxu0 %v273
    %528 = vmatprep.subr.mxu0 0.0
    %529 = vmatpush1.msra.mxu0 %v274
    %530 = vmatprep.subr.mxu0 0.0
    %531 = vmatpush1.msra.mxu0 0.0
    %532 = vmatprep.subr.mxu0 0.0
    %533 = vmatpush1.msra.mxu0 0.0
    %534 = vmatprep.subr.mxu0 0.0
    %535 = vmatpush1.msra.mxu0 0.0
    %536 = vmatprep.subr.mxu0 0.0
    %537 = vmatpush1.msra.mxu0 0.0
    %538 = vmatprep.subr.mxu0 0.0
    %539 = vmatpush1.msra.mxu0 0.0
    %540 = vmatprep.subr.mxu0 0.0
    %541 = vmatpush1.msra.mxu0 0.0
    %542 = vmatprep.subr.mxu0 0.0
    %543 = vmatpush1.msra.mxu0 0.0
    %544 = vmatprep.subr.mxu0 0.0
    %545 = vmatpush1.msra.mxu0 0.0
    %546 = vmatprep.subr.mxu0 0.0
    %547 = vmatpush1.msra.mxu0 0.0
    %548 = vmatprep.subr.mxu0 0.0
    %549 = vmatpush1.msra.mxu0 0.0
    %550 = vmatprep.subr.mxu0 0.0
    %551 = vmatpush1.msra.mxu0 0.0
    %552 = vmatprep.subr.mxu0 0.0
    %553 = vmatpush1.msra.mxu0 0.0
    %554 = vmatprep.subr.mxu0 0.0
    %555 = vmatpush1.msra.mxu0 0.0
    %556 = vmatprep.subr.mxu0 0.0
    %557 = vmatpush1.msra.mxu0 0.0
    %558 = vmatprep.subr.mxu0 0.0
    %559 = vmatpush1.msra.mxu0 0.0
    %560 = vmatprep.subr.mxu0 0.0
    %561 = vmatpush1.msra.mxu0 0.0
    %562 = vmatprep.subr.mxu0 0.0
    %563 = vmatpush1.msra.mxu0 0.0
    %564 = vmatprep.subr.mxu0 0.0
    %565 = vmatpush1.msra.mxu0 0.0
    %566 = vmatprep.subr.mxu0 0.0
    %567 = vmatpush1.msra.mxu0 0.0
    %568 = vmatprep.subr.mxu0 0.0
    %569 = vmatpush1.msra.mxu0 0.0
    %570 = vmatprep.subr.mxu0 0.0
    %571 = vmatpush1.msra.mxu0 0.0
    %572 = vmatprep.subr.mxu0 0.0
    %573 = vmatpush1.msra.mxu0 0.0
    %574 = vmatprep.subr.mxu0 0.0
    %575 = vmatpush1.msra.mxu0 0.0
    %576 = vmatprep.subr.mxu0 0.0
    %577 = vmatpush1.msra.mxu0 0.0
    %578 = vmatprep.subr.mxu0 0.0
    %579 = vmatpush1.msra.mxu0 0.0
    %580 = vmatprep.subr.mxu0 0.0
    %581 = vmatpush1.msra.mxu0 0.0
    %582 = vmatprep.subr.mxu0 0.0
    %583 = vmatpush1.msra.mxu0 0.0
    %584 = vmatprep.subr.mxu0 0.0
    %585 = vmatpush1.msra.mxu0 0.0
    %586 = vmatprep.mubr.f32.mxu0 0.0
    %587 = vmatmul.mubr.f32.gmra.mrb[0].mxu0 %v520
    %v588 = vpop.f32.mrb[0].mxu0
    %v589 = vadd.f32 0.0, %v588
    %v590 = vpop.f32.mrb[0].mxu0
    %591 = vdwg.mxu0
    %v593 = vrot.slane %v589, 6
    %v595 = vadd.f32 %v261, %v593
    %v596 = vxor.u32 %v595, 2147483648
    %v597 = vmul.f32 %v596, 1.442695
    %v598 = vpow.pop %v597
    %v599 = vadd.f32 %v598, 1.0
    %v600 = vrcp.pop %v599
    %v601 = vmul.f32 1.0, %v600
    %v602 = vadd.f32 %v589, %v368
    %v604 = vrot.slane %v602, 6
    %605 = vrot.lane.b32.xlu0 %v604, 64
    %v606 = vpop.permute.xlu0 %605
    %v608 = vmul.f32 %v601, %v606
    %610 = vrot.lane.b32.xlu0 %v608, 64
    %v611 = vpop.permute.xlu0 %610
    %v613 = vadd.f32 %v261, %v611
    %v614 = vtanh.pop %v613
    %v615 = vsub.f32 1.0, %v601
    %617 = vrot.lane.b32.xlu0 %v614, 96
    %v618 = vpop.permute.xlu0 %617
    %v620 = vmul.f32 %v615, %v618
    %v621 = vrot.slane %v389, 6
    %v623 = vmul.f32 %v601, %v621
    %v624 = vadd.f32 %v620, %v623
    %626 = vrot.lane.b32.xlu0 %v624, 96
    %v627 = vpop.permute.xlu0 %626
    %vm629 = vcmask 257026
    %630 = vst.msk [vmem:[#allocation2] sm:$0xc] %vm629, %v627
    %v631 = vrot.slane %v513, 6
    %v632 = vsel %vm281, %v631, 0
    %634 = vmatprep.subr.mxu0 0.0
    %635 = vmatpush1.msra.mxu0 %v275
    %636 = vmatprep.subr.mxu0 0.0
    %637 = vmatpush1.msra.mxu0 %v276
    %638 = vmatprep.subr.mxu0 0.0
    %639 = vmatpush1.msra.mxu0 %v277
    %640 = vmatprep.subr.mxu0 0.0
    %641 = vmatpush1.msra.mxu0 %v278
    %642 = vmatprep.subr.mxu0 0.0
    %643 = vmatpush1.msra.mxu0 0.0
    %644 = vmatprep.subr.mxu0 0.0
    %645 = vmatpush1.msra.mxu0 0.0
    %646 = vmatprep.subr.mxu0 0.0
    %647 = vmatpush1.msra.mxu0 0.0
    %648 = vmatprep.subr.mxu0 0.0
    %649 = vmatpush1.msra.mxu0 0.0
    %650 = vmatprep.subr.mxu0 0.0
    %651 = vmatpush1.msra.mxu0 0.0
    %652 = vmatprep.subr.mxu0 0.0
    %653 = vmatpush1.msra.mxu0 0.0
    %654 = vmatprep.subr.mxu0 0.0
    %655 = vmatpush1.msra.mxu0 0.0
    %656 = vmatprep.subr.mxu0 0.0
    %657 = vmatpush1.msra.mxu0 0.0
    %658 = vmatprep.subr.mxu0 0.0
    %659 = vmatpush1.msra.mxu0 0.0
    %660 = vmatprep.subr.mxu0 0.0
    %661 = vmatpush1.msra.mxu0 0.0
    %662 = vmatprep.subr.mxu0 0.0
    %663 = vmatpush1.msra.mxu0 0.0
    %664 = vmatprep.subr.mxu0 0.0
    %665 = vmatpush1.msra.mxu0 0.0
    %666 = vmatprep.subr.mxu0 0.0
    %667 = vmatpush1.msra.mxu0 0.0
    %668 = vmatprep.subr.mxu0 0.0
    %669 = vmatpush1.msra.mxu0 0.0
    %670 = vmatprep.subr.mxu0 0.0
    %671 = vmatpush1.msra.mxu0 0.0
    %672 = vmatprep.subr.mxu0 0.0
    %673 = vmatpush1.msra.mxu0 0.0
    %674 = vmatprep.subr.mxu0 0.0
    %675 = vmatpush1.msra.mxu0 0.0
    %676 = vmatprep.subr.mxu0 0.0
    %677 = vmatpush1.msra.mxu0 0.0
    %678 = vmatprep.subr.mxu0 0.0
    %679 = vmatpush1.msra.mxu0 0.0
    %680 = vmatprep.subr.mxu0 0.0
    %681 = vmatpush1.msra.mxu0 0.0
    %682 = vmatprep.subr.mxu0 0.0
    %683 = vmatpush1.msra.mxu0 0.0
    %684 = vmatprep.subr.mxu0 0.0
    %685 = vmatpush1.msra.mxu0 0.0
    %686 = vmatprep.subr.mxu0 0.0
    %687 = vmatpush1.msra.mxu0 0.0
    %688 = vmatprep.subr.mxu0 0.0
    %689 = vmatpush1.msra.mxu0 0.0
    %690 = vmatprep.subr.mxu0 0.0
    %691 = vmatpush1.msra.mxu0 0.0
    %692 = vmatprep.subr.mxu0 0.0
    %693 = vmatpush1.msra.mxu0 0.0
    %694 = vmatprep.subr.mxu0 0.0
    %695 = vmatpush1.msra.mxu0 0.0
    %696 = vmatprep.subr.mxu0 0.0
    %697 = vmatpush1.msra.mxu0 0.0
    %698 = vmatprep.mubr.f32.mxu0 0.0
    %699 = vmatmul.mubr.f32.gmra.mrb[0].mxu0 %v632
    %v700 = vpop.f32.mrb[0].mxu0
    %v701 = vadd.f32 0.0, %v700
    %v702 = vpop.f32.mrb[0].mxu0
    %703 = vdwg.mxu0
    %v705 = vrot.slane %v701, 4
    %706 = vrot.lane.b32.xlu0 %v705, 96
    %v707 = vpop.permute.xlu0 %706
    %v709 = vadd.f32 %v267, %v707
    %v710 = vxor.u32 %v709, 2147483648
    %v711 = vmul.f32 %v710, 1.442695
    %v712 = vpow.pop %v711
    %v713 = vadd.f32 %v712, 1.0
    %v714 = vrcp.pop %v713
    %v715 = vmul.f32 1.0, %v714
    %v716 = vadd.f32 %v269, %v707
    %v717 = vxor.u32 %v716, 2147483648
    %v718 = vmul.f32 %v717, 1.442695
    %v719 = vpow.pop %v718
    %v720 = vadd.f32 %v719, 1.0
    %v721 = vrcp.pop %v720
    %v722 = vmul.f32 1.0, %v721
    %v723 = vadd.f32 %v701, %v491
    %v725 = vrot.slane %v723, 4
    %726 = vrot.lane.b32.xlu0 %v725, 32
    %v727 = vpop.permute.xlu0 %726
    %v729 = vmul.f32 %v715, %v727
    %731 = vrot.lane.b32.xlu0 %v729, 64
    %v732 = vpop.permute.xlu0 %731
    %v734 = vadd.f32 %v269, %v732
    %v735 = vtanh.pop %v734
    %v736 = vsub.f32 1.0, %v722
    %738 = vrot.lane.b32.xlu0 %v735, 96
    %v739 = vpop.permute.xlu0 %738
    %v741 = vmul.f32 %v736, %v739
    %v742 = vrot.slane %v513, 2
    %v744 = vmul.f32 %v722, %v742
    %v745 = vadd.f32 %v741, %v744
    %747 = vrot.lane.b32.xlu0 %v745, 32
    %v748 = vpop.permute.xlu0 %747
    %vm750 = vcmask 521476
    %751 = vst.msk [vmem:[#allocation2 + $0x8] sm:$0x30] %vm750, %v748
    %v752 = vrot.slane %v624, 2
    %753 = vrot.lane.b32.xlu0 %v752, 96
    %v754 = vpop.permute.xlu0 %753
    %v755 = vsel %vm281, %v754, 0
    %757 = vmatprep.subr.mxu0 0.0
    %758 = vmatpush1.msra.mxu0 %v271
    %759 = vmatprep.subr.mxu0 0.0
    %760 = vmatpush1.msra.mxu0 %v272
    %761 = vmatprep.subr.mxu0 0.0
    %762 = vmatpush1.msra.mxu0 %v273
    %763 = vmatprep.subr.mxu0 0.0
    %764 = vmatpush1.msra.mxu0 %v274
    %765 = vmatprep.subr.mxu0 0.0
    %766 = vmatpush1.msra.mxu0 0.0
    %767 = vmatprep.subr.mxu0 0.0
    %768 = vmatpush1.msra.mxu0 0.0
    %769 = vmatprep.subr.mxu0 0.0
    %770 = vmatpush1.msra.mxu0 0.0
    %771 = vmatprep.subr.mxu0 0.0
    %772 = vmatpush1.msra.mxu0 0.0
    %773 = vmatprep.subr.mxu0 0.0
    %774 = vmatpush1.msra.mxu0 0.0
    %775 = vmatprep.subr.mxu0 0.0
    %776 = vmatpush1.msra.mxu0 0.0
    %777 = vmatprep.subr.mxu0 0.0
    %778 = vmatpush1.msra.mxu0 0.0
    %779 = vmatprep.subr.mxu0 0.0
    %780 = vmatpush1.msra.mxu0 0.0
    %781 = vmatprep.subr.mxu0 0.0
    %782 = vmatpush1.msra.mxu0 0.0
    %783 = vmatprep.subr.mxu0 0.0
    %784 = vmatpush1.msra.mxu0 0.0
    %785 = vmatprep.subr.mxu0 0.0
    %786 = vmatpush1.msra.mxu0 0.0
    %787 = vmatprep.subr.mxu0 0.0
    %788 = vmatpush1.msra.mxu0 0.0
    %789 = vmatprep.subr.mxu0 0.0
    %790 = vmatpush1.msra.mxu0 0.0
    %791 = vmatprep.subr.mxu0 0.0
    %792 = vmatpush1.msra.mxu0 0.0
    %793 = vmatprep.subr.mxu0 0.0
    %794 = vmatpush1.msra.mxu0 0.0
    %795 = vmatprep.subr.mxu0 0.0
    %796 = vmatpush1.msra.mxu0 0.0
    %797 = vmatprep.subr.mxu0 0.0
    %798 = vmatpush1.msra.mxu0 0.0
    %799 = vmatprep.subr.mxu0 0.0
    %800 = vmatpush1.msra.mxu0 0.0
    %801 = vmatprep.subr.mxu0 0.0
    %802 = vmatpush1.msra.mxu0 0.0
    %803 = vmatprep.subr.mxu0 0.0
    %804 = vmatpush1.msra.mxu0 0.0
    %805 = vmatprep.subr.mxu0 0.0
    %806 = vmatpush1.msra.mxu0 0.0
    %807 = vmatprep.subr.mxu0 0.0
    %808 = vmatpush1.msra.mxu0 0.0
    %809 = vmatprep.subr.mxu0 0.0
    %810 = vmatpush1.msra.mxu0 0.0
    %811 = vmatprep.subr.mxu0 0.0
    %812 = vmatpush1.msra.mxu0 0.0
    %813 = vmatprep.subr.mxu0 0.0
    %814 = vmatpush1.msra.mxu0 0.0
    %815 = vmatprep.subr.mxu0 0.0
    %816 = vmatpush1.msra.mxu0 0.0
    %817 = vmatprep.subr.mxu0 0.0
    %818 = vmatpush1.msra.mxu0 0.0
    %819 = vmatprep.subr.mxu0 0.0
    %820 = vmatpush1.msra.mxu0 0.0
    %821 = vmatprep.mubr.f32.mxu0 0.0
    %822 = vmatmul.mubr.f32.gmra.mrb[0].mxu0 %v755
    %v823 = vpop.f32.mrb[0].mxu0
    %v824 = vadd.f32 0.0, %v823
    %v825 = vpop.f32.mrb[0].mxu0
    %826 = vdwg.mxu0
    %v828 = vrot.slane %v824, 4
    %v830 = vadd.f32 %v261, %v828
    %v831 = vxor.u32 %v830, 2147483648
    %v832 = vmul.f32 %v831, 1.442695
    %v833 = vpow.pop %v832
    %v834 = vadd.f32 %v833, 1.0
    %v835 = vrcp.pop %v834
    %v836 = vmul.f32 1.0, %v835
    %v837 = vadd.f32 %v824, %v368
    %v839 = vrot.slane %v837, 4
    %840 = vrot.lane.b32.xlu0 %v839, 64
    %v841 = vpop.permute.xlu0 %840
    %v843 = vmul.f32 %v836, %v841
    %845 = vrot.lane.b32.xlu0 %v843, 64
    %v846 = vpop.permute.xlu0 %845
    %v848 = vadd.f32 %v261, %v846
    %v849 = vtanh.pop %v848
    %v850 = vsub.f32 1.0, %v836
    %852 = vrot.lane.b32.xlu0 %v849, 96
    %v853 = vpop.permute.xlu0 %852
    %v855 = vmul.f32 %v850, %v853
    %v856 = vrot.slane %v624, 6
    %v858 = vmul.f32 %v836, %v856
    %v859 = vadd.f32 %v855, %v858
    %861 = vrot.lane.b32.xlu0 %v859, 96
    %v862 = vpop.permute.xlu0 %861
    %vm864 = vcmask 259076
    %865 = vst.msk [vmem:[#allocation2] sm:$0x30] %vm864, %v862
    %v866 = vrot.slane %v745, 4
    %v867 = vsel %vm281, %v866, 0
    %869 = vmatprep.subr.mxu0 0.0
    %870 = vmatpush1.msra.mxu0 %v275
    %871 = vmatprep.subr.mxu0 0.0
    %872 = vmatpush1.msra.mxu0 %v276
    %873 = vmatprep.subr.mxu0 0.0
    %874 = vmatpush1.msra.mxu0 %v277
    %875 = vmatprep.subr.mxu0 0.0
    %876 = vmatpush1.msra.mxu0 %v278
    %877 = vmatprep.subr.mxu0 0.0
    %878 = vmatpush1.msra.mxu0 0.0
    %879 = vmatprep.subr.mxu0 0.0
    %880 = vmatpush1.msra.mxu0 0.0
    %881 = vmatprep.subr.mxu0 0.0
    %882 = vmatpush1.msra.mxu0 0.0
    %883 = vmatprep.subr.mxu0 0.0
    %884 = vmatpush1.msra.mxu0 0.0
    %885 = vmatprep.subr.mxu0 0.0
    %886 = vmatpush1.msra.mxu0 0.0
    %887 = vmatprep.subr.mxu0 0.0
    %888 = vmatpush1.msra.mxu0 0.0
    %889 = vmatprep.subr.mxu0 0.0
    %890 = vmatpush1.msra.mxu0 0.0
    %891 = vmatprep.subr.mxu0 0.0
    %892 = vmatpush1.msra.mxu0 0.0
    %893 = vmatprep.subr.mxu0 0.0
    %894 = vmatpush1.msra.mxu0 0.0
    %895 = vmatprep.subr.mxu0 0.0
    %896 = vmatpush1.msra.mxu0 0.0
    %897 = vmatprep.subr.mxu0 0.0
    %898 = vmatpush1.msra.mxu0 0.0
    %899 = vmatprep.subr.mxu0 0.0
    %900 = vmatpush1.msra.mxu0 0.0
    %901 = vmatprep.subr.mxu0 0.0
    %902 = vmatpush1.msra.mxu0 0.0
    %903 = vmatprep.subr.mxu0 0.0
    %904 = vmatpush1.msra.mxu0 0.0
    %905 = vmatprep.subr.mxu0 0.0
    %906 = vmatpush1.msra.mxu0 0.0
    %907 = vmatprep.subr.mxu0 0.0
    %908 = vmatpush1.msra.mxu0 0.0
    %909 = vmatprep.subr.mxu0 0.0
    %910 = vmatpush1.msra.mxu0 0.0
    %911 = vmatprep.subr.mxu0 0.0
    %912 = vmatpush1.msra.mxu0 0.0
    %913 = vmatprep.subr.mxu0 0.0
    %914 = vmatpush1.msra.mxu0 0.0
    %915 = vmatprep.subr.mxu0 0.0
    %916 = vmatpush1.msra.mxu0 0.0
    %917 = vmatprep.subr.mxu0 0.0
    %918 = vmatpush1.msra.mxu0 0.0
    %919 = vmatprep.subr.mxu0 0.0
    %920 = vmatpush1.msra.mxu0 0.0
    %921 = vmatprep.subr.mxu0 0.0
    %922 = vmatpush1.msra.mxu0 0.0
    %923 = vmatprep.subr.mxu0 0.0
    %924 = vmatpush1.msra.mxu0 0.0
    %925 = vmatprep.subr.mxu0 0.0
    %926 = vmatpush1.msra.mxu0 0.0
    %927 = vmatprep.subr.mxu0 0.0
    %928 = vmatpush1.msra.mxu0 0.0
    %929 = vmatprep.subr.mxu0 0.0
    %930 = vmatpush1.msra.mxu0 0.0
    %931 = vmatprep.subr.mxu0 0.0
    %932 = vmatpush1.msra.mxu0 0.0
    %933 = vmatprep.mubr.f32.mxu0 0.0
    %934 = vmatmul.mubr.f32.gmra.mrb[0].mxu0 %v867
    %v935 = vpop.f32.mrb[0].mxu0
    %v936 = vadd.f32 0.0, %v935
    %v937 = vpop.f32.mrb[0].mxu0
    %938 = vdwg.mxu0
    %v940 = vrot.slane %v936, 6
    %941 = vrot.lane.b32.xlu0 %v940, 96
    %v942 = vpop.permute.xlu0 %941
    %v944 = vadd.f32 %v267, %v942
    %v945 = vxor.u32 %v944, 2147483648
    %v946 = vmul.f32 %v945, 1.442695
    %v947 = vpow.pop %v946
    %v948 = vadd.f32 %v947, 1.0
    %v949 = vrcp.pop %v948
    %v950 = vmul.f32 1.0, %v949
    %v951 = vadd.f32 %v269, %v942
    %v952 = vxor.u32 %v951, 2147483648
    %v953 = vmul.f32 %v952, 1.442695
    %v954 = vpow.pop %v953
    %v955 = vadd.f32 %v954, 1.0
    %v956 = vrcp.pop %v955
    %v957 = vmul.f32 1.0, %v956
    %v958 = vadd.f32 %v936, %v491
    %v960 = vrot.slane %v958, 6
    %961 = vrot.lane.b32.xlu0 %v960, 32
    %v962 = vpop.permute.xlu0 %961
    %v964 = vmul.f32 %v950, %v962
    %966 = vrot.lane.b32.xlu0 %v964, 64
    %v967 = vpop.permute.xlu0 %966
    %v969 = vadd.f32 %v269, %v967
    %v970 = vtanh.pop %v969
    %v971 = vsub.f32 1.0, %v957
    %973 = vrot.lane.b32.xlu0 %v970, 96
    %v974 = vpop.permute.xlu0 %973
    %v976 = vmul.f32 %v971, %v974
    %v977 = vrot.slane %v745, 2
    %v979 = vmul.f32 %v957, %v977
    %v980 = vadd.f32 %v976, %v979
    %982 = vrot.lane.b32.xlu0 %v980, 32
    %v983 = vpop.permute.xlu0 %982
    %vm985 = vcmask 519426
    %986 = vst.msk [vmem:[#allocation2 + $0x8] sm:$0xc] %vm985, %v983
    %v987 = vrot.slane %v859, 4
    %988 = vrot.lane.b32.xlu0 %v987, 96
    %v989 = vpop.permute.xlu0 %988
    %v990 = vsel %vm281, %v989, 0
    %992 = vmatprep.subr.mxu0 0.0
    %993 = vmatpush1.msra.mxu0 %v271
    %994 = vmatprep.subr.mxu0 0.0
    %995 = vmatpush1.msra.mxu0 %v272
    %996 = vmatprep.subr.mxu0 0.0
    %997 = vmatpush1.msra.mxu0 %v273
    %998 = vmatprep.subr.mxu0 0.0
    %999 = vmatpush1.msra.mxu0 %v274
    %1000 = vmatprep.subr.mxu0 0.0
    %1001 = vmatpush1.msra.mxu0 0.0
    %1002 = vmatprep.subr.mxu0 0.0
    %1003 = vmatpush1.msra.mxu0 0.0
    %1004 = vmatprep.subr.mxu0 0.0
    %1005 = vmatpush1.msra.mxu0 0.0
    %1006 = vmatprep.subr.mxu0 0.0
    %1007 = vmatpush1.msra.mxu0 0.0
    %1008 = vmatprep.subr.mxu0 0.0
    %1009 = vmatpush1.msra.mxu0 0.0
    %1010 = vmatprep.subr.mxu0 0.0
    %1011 = vmatpush1.msra.mxu0 0.0
    %1012 = vmatprep.subr.mxu0 0.0
    %1013 = vmatpush1.msra.mxu0 0.0
    %1014 = vmatprep.subr.mxu0 0.0
    %1015 = vmatpush1.msra.mxu0 0.0
    %1016 = vmatprep.subr.mxu0 0.0
    %1017 = vmatpush1.msra.mxu0 0.0
    %1018 = vmatprep.subr.mxu0 0.0
    %1019 = vmatpush1.msra.mxu0 0.0
    %1020 = vmatprep.subr.mxu0 0.0
    %1021 = vmatpush1.msra.mxu0 0.0
    %1022 = vmatprep.subr.mxu0 0.0
    %1023 = vmatpush1.msra.mxu0 0.0
    %1024 = vmatprep.subr.mxu0 0.0
    %1025 = vmatpush1.msra.mxu0 0.0
    %1026 = vmatprep.subr.mxu0 0.0
    %1027 = vmatpush1.msra.mxu0 0.0
    %1028 = vmatprep.subr.mxu0 0.0
    %1029 = vmatpush1.msra.mxu0 0.0
    %1030 = vmatprep.subr.mxu0 0.0
    %1031 = vmatpush1.msra.mxu0 0.0
    %1032 = vmatprep.subr.mxu0 0.0
    %1033 = vmatpush1.msra.mxu0 0.0
    %1034 = vmatprep.subr.mxu0 0.0
    %1035 = vmatpush1.msra.mxu0 0.0
    %1036 = vmatprep.subr.mxu0 0.0
    %1037 = vmatpush1.msra.mxu0 0.0
    %1038 = vmatprep.subr.mxu0 0.0
    %1039 = vmatpush1.msra.mxu0 0.0
    %1040 = vmatprep.subr.mxu0 0.0
    %1041 = vmatpush1.msra.mxu0 0.0
    %1042 = vmatprep.subr.mxu0 0.0
    %1043 = vmatpush1.msra.mxu0 0.0
    %1044 = vmatprep.subr.mxu0 0.0
    %1045 = vmatpush1.msra.mxu0 0.0
    %1046 = vmatprep.subr.mxu0 0.0
    %1047 = vmatpush1.msra.mxu0 0.0
    %1048 = vmatprep.subr.mxu0 0.0
    %1049 = vmatpush1.msra.mxu0 0.0
    %1050 = vmatprep.subr.mxu0 0.0
    %1051 = vmatpush1.msra.mxu0 0.0
    %1052 = vmatprep.subr.mxu0 0.0
    %1053 = vmatpush1.msra.mxu0 0.0
    %1054 = vmatprep.subr.mxu0 0.0
    %1055 = vmatpush1.msra.mxu0 0.0
    %1056 = vmatprep.mubr.f32.mxu0 0.0
    %1057 = vmatmul.mubr.f32.gmra.mrb[0].mxu0 %v990
    %v1058 = vpop.f32.mrb[0].mxu0
    %v1059 = vadd.f32 0.0, %v1058
    %v1060 = vpop.f32.mrb[0].mxu0
    %1061 = vdwg.mxu0
    %v1063 = vrot.slane %v1059, 2
    %v1065 = vadd.f32 %v261, %v1063
    %v1066 = vxor.u32 %v1065, 2147483648
    %v1067 = vmul.f32 %v1066, 1.442695
    %v1068 = vpow.pop %v1067
    %v1069 = vadd.f32 %v1068, 1.0
    %v1070 = vrcp.pop %v1069
    %v1071 = vmul.f32 1.0, %v1070
    %v1072 = vadd.f32 %v1059, %v368
    %v1074 = vrot.slane %v1072, 2
    %1075 = vrot.lane.b32.xlu0 %v1074, 64
    %v1076 = vpop.permute.xlu0 %1075
    %v1078 = vmul.f32 %v1071, %v1076
    %1080 = vrot.lane.b32.xlu0 %v1078, 64
    %v1081 = vpop.permute.xlu0 %1080
    %v1083 = vadd.f32 %v261, %v1081
    %v1084 = vtanh.pop %v1083
    %v1085 = vsub.f32 1.0, %v1071
    %1087 = vrot.lane.b32.xlu0 %v1084, 96
    %v1088 = vpop.permute.xlu0 %1087
    %v1090 = vmul.f32 %v1085, %v1088
    %v1091 = vrot.slane %v859, 6
    %v1093 = vmul.f32 %v1071, %v1091
    %v1094 = vadd.f32 %v1090, %v1093
    %1096 = vrot.lane.b32.xlu0 %v1094, 96
    %v1097 = vpop.permute.xlu0 %1096
    %vm1099 = vcmask 261126
    %1100 = vst.msk [vmem:[#allocation2] sm:$0xc0] %vm1099, %v1097
    %v1101 = vrot.slane %v980, 2
    %v1102 = vsel %vm281, %v1101, 0
    %1104 = vmatprep.subr.mxu0 0.0
    %1105 = vmatpush1.msra.mxu0 %v275
    %1106 = vmatprep.subr.mxu0 0.0
    %1107 = vmatpush1.msra.mxu0 %v276
    %1108 = vmatprep.subr.mxu0 0.0
    %1109 = vmatpush1.msra.mxu0 %v277
    %1110 = vmatprep.subr.mxu0 0.0
    %1111 = vmatpush1.msra.mxu0 %v278
    %1112 = vmatprep.subr.mxu0 0.0
    %1113 = vmatpush1.msra.mxu0 0.0
    %1114 = vmatprep.subr.mxu0 0.0
    %1115 = vmatpush1.msra.mxu0 0.0
    %1116 = vmatprep.subr.mxu0 0.0
    %1117 = vmatpush1.msra.mxu0 0.0
    %1118 = vmatprep.subr.mxu0 0.0
    %1119 = vmatpush1.msra.mxu0 0.0
    %1120 = vmatprep.subr.mxu0 0.0
    %1121 = vmatpush1.msra.mxu0 0.0
    %1122 = vmatprep.subr.mxu0 0.0
    %1123 = vmatpush1.msra.mxu0 0.0
    %1124 = vmatprep.subr.mxu0 0.0
    %1125 = vmatpush1.msra.mxu0 0.0
    %1126 = vmatprep.subr.mxu0 0.0
    %1127 = vmatpush1.msra.mxu0 0.0
    %1128 = vmatprep.subr.mxu0 0.0
    %1129 = vmatpush1.msra.mxu0 0.0
    %1130 = vmatprep.subr.mxu0 0.0
    %1131 = vmatpush1.msra.mxu0 0.0
    %1132 = vmatprep.subr.mxu0 0.0
    %1133 = vmatpush1.msra.mxu0 0.0
    %1134 = vmatprep.subr.mxu0 0.0
    %1135 = vmatpush1.msra.mxu0 0.0
    %1136 = vmatprep.subr.mxu0 0.0
    %1137 = vmatpush1.msra.mxu0 0.0
    %1138 = vmatprep.subr.mxu0 0.0
    %1139 = vmatpush1.msra.mxu0 0.0
    %1140 = vmatprep.subr.mxu0 0.0
    %1141 = vmatpush1.msra.mxu0 0.0
    %1142 = vmatprep.subr.mxu0 0.0
    %1143 = vmatpush1.msra.mxu0 0.0
    %1144 = vmatprep.subr.mxu0 0.0
    %1145 = vmatpush1.msra.mxu0 0.0
    %1146 = vmatprep.subr.mxu0 0.0
    %1147 = vmatpush1.msra.mxu0 0.0
    %1148 = vmatprep.subr.mxu0 0.0
    %1149 = vmatpush1.msra.mxu0 0.0
    %1150 = vmatprep.subr.mxu0 0.0
    %1151 = vmatpush1.msra.mxu0 0.0
    %1152 = vmatprep.subr.mxu0 0.0
    %1153 = vmatpush1.msra.mxu0 0.0
    %1154 = vmatprep.subr.mxu0 0.0
    %1155 = vmatpush1.msra.mxu0 0.0
    %1156 = vmatprep.subr.mxu0 0.0
    %1157 = vmatpush1.msra.mxu0 0.0
    %1158 = vmatprep.subr.mxu0 0.0
    %1159 = vmatpush1.msra.mxu0 0.0
    %1160 = vmatprep.subr.mxu0 0.0
    %1161 = vmatpush1.msra.mxu0 0.0
    %1162 = vmatprep.subr.mxu0 0.0
    %1163 = vmatpush1.msra.mxu0 0.0
    %1164 = vmatprep.subr.mxu0 0.0
    %1165 = vmatpush1.msra.mxu0 0.0
    %1166 = vmatprep.subr.mxu0 0.0
    %1167 = vmatpush1.msra.mxu0 0.0
    %1168 = vmatprep.mubr.f32.mxu0 0.0
    %1169 = vmatmul.mubr.f32.gmra.mrb[0].mxu0 %v1102
    %v1170 = vpop.f32.mrb[0].mxu0
    %v1171 = vadd.f32 0.0, %v1170
    %v1172 = vpop.f32.mrb[0].mxu0
    %1173 = vdwg.mxu0
    %1175 = vrot.lane.b32.xlu0 %v1171, 96
    %v1176 = vpop.permute.xlu0 %1175
    %v1178 = vadd.f32 %v267, %v1176
    %v1179 = vxor.u32 %v1178, 2147483648
    %v1180 = vmul.f32 %v1179, 1.442695
    %v1181 = vpow.pop %v1180
    %v1182 = vadd.f32 %v1181, 1.0
    %v1183 = vrcp.pop %v1182
    %v1184 = vmul.f32 1.0, %v1183
    %v1185 = vadd.f32 %v269, %v1176
    %v1186 = vxor.u32 %v1185, 2147483648
    %v1187 = vmul.f32 %v1186, 1.442695
    %v1188 = vpow.pop %v1187
    %v1189 = vadd.f32 %v1188, 1.0
    %v1190 = vrcp.pop %v1189
    %v1191 = vmul.f32 1.0, %v1190
    %v1192 = vadd.f32 %v1171, %v491
    %1194 = vrot.lane.b32.xlu0 %v1192, 32
    %v1195 = vpop.permute.xlu0 %1194
    %v1197 = vmul.f32 %v1184, %v1195
    %1199 = vrot.lane.b32.xlu0 %v1197, 64
    %v1200 = vpop.permute.xlu0 %1199
    %v1202 = vadd.f32 %v269, %v1200
    %v1203 = vtanh.pop %v1202
    %v1204 = vsub.f32 1.0, %v1191
    %1206 = vrot.lane.b32.xlu0 %v1203, 96
    %v1207 = vpop.permute.xlu0 %1206
    %v1209 = vmul.f32 %v1204, %v1207
    %v1211 = vmul.f32 %v1191, %v1101
    %v1212 = vadd.f32 %v1209, %v1211
    %1214 = vrot.lane.b32.xlu0 %v1212, 32
    %v1215 = vpop.permute.xlu0 %1214
    %vm1217 = vcmask 517376
    %1218 = vst.msk [vmem:[#allocation2 + $0x8] sm:$0x3] %vm1217, %v1215
    %v1219 = vrot.slane %v1094, 6
    %1220 = vrot.lane.b32.xlu0 %v1219, 96
    %v1221 = vpop.permute.xlu0 %1220
    %v1222 = vsel %vm281, %v1221, 0
    %1224 = vmatprep.subr.mxu0 0.0
    %1225 = vmatpush1.msra.mxu0 %v271
    %1226 = vmatprep.subr.mxu0 0.0
    %1227 = vmatpush1.msra.mxu0 %v272
    %1228 = vmatprep.subr.mxu0 0.0
    %1229 = vmatpush1.msra.mxu0 %v273
    %1230 = vmatprep.subr.mxu0 0.0
    %1231 = vmatpush1.msra.mxu0 %v274
    %1232 = vmatprep.subr.mxu0 0.0
    %1233 = vmatpush1.msra.mxu0 0.0
    %1234 = vmatprep.subr.mxu0 0.0
    %1235 = vmatpush1.msra.mxu0 0.0
    %1236 = vmatprep.subr.mxu0 0.0
    %1237 = vmatpush1.msra.mxu0 0.0
    %1238 = vmatprep.subr.mxu0 0.0
    %1239 = vmatpush1.msra.mxu0 0.0
    %1240 = vmatprep.subr.mxu0 0.0
    %1241 = vmatpush1.msra.mxu0 0.0
    %1242 = vmatprep.subr.mxu0 0.0
    %1243 = vmatpush1.msra.mxu0 0.0
    %1244 = vmatprep.subr.mxu0 0.0
    %1245 = vmatpush1.msra.mxu0 0.0
    %1246 = vmatprep.subr.mxu0 0.0
    %1247 = vmatpush1.msra.mxu0 0.0
    %1248 = vmatprep.subr.mxu0 0.0
    %1249 = vmatpush1.msra.mxu0 0.0
    %1250 = vmatprep.subr.mxu0 0.0
    %1251 = vmatpush1.msra.mxu0 0.0
    %1252 = vmatprep.subr.mxu0 0.0
    %1253 = vmatpush1.msra.mxu0 0.0
    %1254 = vmatprep.subr.mxu0 0.0
    %1255 = vmatpush1.msra.mxu0 0.0
    %1256 = vmatprep.subr.mxu0 0.0
    %1257 = vmatpush1.msra.mxu0 0.0
    %1258 = vmatprep.subr.mxu0 0.0
    %1259 = vmatpush1.msra.mxu0 0.0
    %1260 = vmatprep.subr.mxu0 0.0
    %1261 = vmatpush1.msra.mxu0 0.0
    %1262 = vmatprep.subr.mxu0 0.0
    %1263 = vmatpush1.msra.mxu0 0.0
    %1264 = vmatprep.subr.mxu0 0.0
    %1265 = vmatpush1.msra.mxu0 0.0
    %1266 = vmatprep.subr.mxu0 0.0
    %1267 = vmatpush1.msra.mxu0 0.0
    %1268 = vmatprep.subr.mxu0 0.0
    %1269 = vmatpush1.msra.mxu0 0.0
    %1270 = vmatprep.subr.mxu0 0.0
    %1271 = vmatpush1.msra.mxu0 0.0
    %1272 = vmatprep.subr.mxu0 0.0
    %1273 = vmatpush1.msra.mxu0 0.0
    %1274 = vmatprep.subr.mxu0 0.0
    %1275 = vmatpush1.msra.mxu0 0.0
    %1276 = vmatprep.subr.mxu0 0.0
    %1277 = vmatpush1.msra.mxu0 0.0
    %1278 = vmatprep.subr.mxu0 0.0
    %1279 = vmatpush1.msra.mxu0 0.0
    %1280 = vmatprep.subr.mxu0 0.0
    %1281 = vmatpush1.msra.mxu0 0.0
    %1282 = vmatprep.subr.mxu0 0.0
    %1283 = vmatpush1.msra.mxu0 0.0
    %1284 = vmatprep.subr.mxu0 0.0
    %1285 = vmatpush1.msra.mxu0 0.0
    %1286 = vmatprep.subr.mxu0 0.0
    %1287 = vmatpush1.msra.mxu0 0.0
    %1288 = vmatprep.mubr.f32.mxu0 0.0
    %1289 = vmatmul.mubr.f32.gmra.mrb[0].mxu0 %v1222
    %v1290 = vpop.f32.mrb[0].mxu0
    %v1291 = vadd.f32 0.0, %v1290
    %v1292 = vpop.f32.mrb[0].mxu0
    %1293 = vdwg.mxu0
    %v1294 = vadd.f32 %v267, %v1291
    %v1295 = vxor.u32 %v1294, 2147483648
    %v1296 = vmul.f32 %v1295, 1.442695
    %v1297 = vpow.pop %v1296
    %v1298 = vadd.f32 %v1297, 1.0
    %v1299 = vrcp.pop %v1298
    %v1300 = vmul.f32 1.0, %v1299
    %v1301 = vadd.f32 %v1291, %v368
    %1303 = vrot.lane.b32.xlu0 %v1301, 64
    %v1304 = vpop.permute.xlu0 %1303
    %v1306 = vmul.f32 %v1300, %v1304
    %1308 = vrot.lane.b32.xlu0 %v1306, 64
    %v1309 = vpop.permute.xlu0 %1308
    %v1311 = vadd.f32 %v267, %v1309
    %v1312 = vtanh.pop %v1311
    %v1313 = vsub.f32 1.0, %v1300
    %1315 = vrot.lane.b32.xlu0 %v1312, 96
    %v1316 = vpop.permute.xlu0 %1315
    %v1318 = vmul.f32 %v1313, %v1316
    %v1320 = vmul.f32 %v1300, %v1219
    %v1321 = vadd.f32 %v1318, %v1320
    %1323 = vrot.lane.b32.xlu0 %v1321, 96
    %v1324 = vpop.permute.xlu0 %1323
    %1326 = vst.msk [vmem:[#allocation2 + $0x8] sm:$0x3] %vm394, %v1324
    %v1327 = vsel %vm281, %v1212, 0
    %1329 = vmatprep.subr.mxu0 0.0
    %1330 = vmatpush1.msra.mxu0 %v275
    %1331 = vmatprep.subr.mxu0 0.0
    %1332 = vmatpush1.msra.mxu0 %v276
    %1333 = vmatprep.subr.mxu0 0.0
    %1334 = vmatpush1.msra.mxu0 %v277
    %1335 = vmatprep.subr.mxu0 0.0
    %1336 = vmatpush1.msra.mxu0 %v278
    %1337 = vmatprep.subr.mxu0 0.0
    %1338 = vmatpush1.msra.mxu0 0.0
    %1339 = vmatprep.subr.mxu0 0.0
    %1340 = vmatpush1.msra.mxu0 0.0
    %1341 = vmatprep.subr.mxu0 0.0
    %1342 = vmatpush1.msra.mxu0 0.0
    %1343 = vmatprep.subr.mxu0 0.0
    %1344 = vmatpush1.msra.mxu0 0.0
    %1345 = vmatprep.subr.mxu0 0.0
    %1346 = vmatpush1.msra.mxu0 0.0
    %1347 = vmatprep.subr.mxu0 0.0
    %1348 = vmatpush1.msra.mxu0 0.0
    %1349 = vmatprep.subr.mxu0 0.0
    %1350 = vmatpush1.msra.mxu0 0.0
    %1351 = vmatprep.subr.mxu0 0.0
    %1352 = vmatpush1.msra.mxu0 0.0
    %1353 = vmatprep.subr.mxu0 0.0
    %1354 = vmatpush1.msra.mxu0 0.0
    %1355 = vmatprep.subr.mxu0 0.0
    %1356 = vmatpush1.msra.mxu0 0.0
    %1357 = vmatprep.subr.mxu0 0.0
    %1358 = vmatpush1.msra.mxu0 0.0
    %1359 = vmatprep.subr.mxu0 0.0
    %1360 = vmatpush1.msra.mxu0 0.0
    %1361 = vmatprep.subr.mxu0 0.0
    %1362 = vmatpush1.msra.mxu0 0.0
    %1363 = vmatprep.subr.mxu0 0.0
    %1364 = vmatpush1.msra.mxu0 0.0
    %1365 = vmatprep.subr.mxu0 0.0
    %1366 = vmatpush1.msra.mxu0 0.0
    %1367 = vmatprep.subr.mxu0 0.0
    %1368 = vmatpush1.msra.mxu0 0.0
    %1369 = vmatprep.subr.mxu0 0.0
    %1370 = vmatpush1.msra.mxu0 0.0
    %1371 = vmatprep.subr.mxu0 0.0
    %1372 = vmatpush1.msra.mxu0 0.0
    %1373 = vmatprep.subr.mxu0 0.0
    %1374 = vmatpush1.msra.mxu0 0.0
    %1375 = vmatprep.subr.mxu0 0.0
    %1376 = vmatpush1.msra.mxu0 0.0
    %1377 = vmatprep.subr.mxu0 0.0
    %1378 = vmatpush1.msra.mxu0 0.0
    %1379 = vmatprep.subr.mxu0 0.0
    %1380 = vmatpush1.msra.mxu0 0.0
    %1381 = vmatprep.subr.mxu0 0.0
    %1382 = vmatpush1.msra.mxu0 0.0
    %1383 = vmatprep.subr.mxu0 0.0
    %1384 = vmatpush1.msra.mxu0 0.0
    %1385 = vmatprep.subr.mxu0 0.0
    %1386 = vmatpush1.msra.mxu0 0.0
    %1387 = vmatprep.subr.mxu0 0.0
    %1388 = vmatpush1.msra.mxu0 0.0
    %1389 = vmatprep.subr.mxu0 0.0
    %1390 = vmatpush1.msra.mxu0 0.0
    %1391 = vmatprep.subr.mxu0 0.0
    %1392 = vmatpush1.msra.mxu0 0.0
    %1393 = vmatprep.mubr.f32.mxu0 0.0
    %1394 = vmatmul.mubr.f32.gmra.mrb[0].mxu0 %v1327
    %v1395 = vpop.f32.mrb[0].mxu0
    %v1396 = vadd.f32 0.0, %v1395
    %v1397 = vpop.f32.mrb[0].mxu0
    %1398 = vdwg.mxu0
    %v1400 = vrot.slane %v1396, 2
    %1401 = vrot.lane.b32.xlu0 %v1400, 96
    %v1402 = vpop.permute.xlu0 %1401
    %v1404 = vadd.f32 %v261, %v1402
    %v1405 = vxor.u32 %v1404, 2147483648
    %v1406 = vmul.f32 %v1405, 1.442695
    %v1407 = vpow.pop %v1406
    %v1408 = vadd.f32 %v1407, 1.0
    %v1409 = vrcp.pop %v1408
    %v1410 = vmul.f32 1.0, %v1409
    %v1411 = vadd.f32 %v263, %v1402
    %v1412 = vxor.u32 %v1411, 2147483648
    %v1413 = vmul.f32 %v1412, 1.442695
    %v1414 = vpow.pop %v1413
    %v1415 = vadd.f32 %v1414, 1.0
    %v1416 = vrcp.pop %v1415
    %v1417 = vmul.f32 1.0, %v1416
    %v1418 = vadd.f32 %v1396, %v491
    %v1420 = vrot.slane %v1418, 2
    %1421 = vrot.lane.b32.xlu0 %v1420, 32
    %v1422 = vpop.permute.xlu0 %1421
    %v1424 = vmul.f32 %v1410, %v1422
    %1426 = vrot.lane.b32.xlu0 %v1424, 64
    %v1427 = vpop.permute.xlu0 %1426
    %v1429 = vadd.f32 %v263, %v1427
    %v1430 = vtanh.pop %v1429
    %v1431 = vsub.f32 1.0, %v1417
    %1433 = vrot.lane.b32.xlu0 %v1430, 96
    %v1434 = vpop.permute.xlu0 %1433
    %v1436 = vmul.f32 %v1431, %v1434
    %v1437 = vrot.slane %v1212, 2
    %v1439 = vmul.f32 %v1417, %v1437
    %v1440 = vadd.f32 %v1436, %v1439
    %1442 = vrot.lane.b32.xlu0 %v1440, 32
    %v1443 = vpop.permute.xlu0 %1442
    %1445 = vst.msk [vmem:[#allocation2] sm:$0xc0] %vm518, %v1443
    %v1446 = vsel %vm281, %v1324, 0
    %1448 = vmatprep.subr.mxu0 0.0
    %1449 = vmatpush1.msra.mxu0 %v271
    %1450 = vmatprep.subr.mxu0 0.0
    %1451 = vmatpush1.msra.mxu0 %v272
    %1452 = vmatprep.subr.mxu0 0.0
    %1453 = vmatpush1.msra.mxu0 %v273
    %1454 = vmatprep.subr.mxu0 0.0
    %1455 = vmatpush1.msra.mxu0 %v274
    %1456 = vmatprep.subr.mxu0 0.0
    %1457 = vmatpush1.msra.mxu0 0.0
    %1458 = vmatprep.subr.mxu0 0.0
    %1459 = vmatpush1.msra.mxu0 0.0
    %1460 = vmatprep.subr.mxu0 0.0
    %1461 = vmatpush1.msra.mxu0 0.0
    %1462 = vmatprep.subr.mxu0 0.0
    %1463 = vmatpush1.msra.mxu0 0.0
    %1464 = vmatprep.subr.mxu0 0.0
    %1465 = vmatpush1.msra.mxu0 0.0
    %1466 = vmatprep.subr.mxu0 0.0
    %1467 = vmatpush1.msra.mxu0 0.0
    %1468 = vmatprep.subr.mxu0 0.0
    %1469 = vmatpush1.msra.mxu0 0.0
    %1470 = vmatprep.subr.mxu0 0.0
    %1471 = vmatpush1.msra.mxu0 0.0
    %1472 = vmatprep.subr.mxu0 0.0
    %1473 = vmatpush1.msra.mxu0 0.0
    %1474 = vmatprep.subr.mxu0 0.0
    %1475 = vmatpush1.msra.mxu0 0.0
    %1476 = vmatprep.subr.mxu0 0.0
    %1477 = vmatpush1.msra.mxu0 0.0
    %1478 = vmatprep.subr.mxu0 0.0
    %1479 = vmatpush1.msra.mxu0 0.0
    %1480 = vmatprep.subr.mxu0 0.0
    %1481 = vmatpush1.msra.mxu0 0.0
    %1482 = vmatprep.subr.mxu0 0.0
    %1483 = vmatpush1.msra.mxu0 0.0
    %1484 = vmatprep.subr.mxu0 0.0
    %1485 = vmatpush1.msra.mxu0 0.0
    %1486 = vmatprep.subr.mxu0 0.0
    %1487 = vmatpush1.msra.mxu0 0.0
    %1488 = vmatprep.subr.mxu0 0.0
    %1489 = vmatpush1.msra.mxu0 0.0
    %1490 = vmatprep.subr.mxu0 0.0
    %1491 = vmatpush1.msra.mxu0 0.0
    %1492 = vmatprep.subr.mxu0 0.0
    %1493 = vmatpush1.msra.mxu0 0.0
    %1494 = vmatprep.subr.mxu0 0.0
    %1495 = vmatpush1.msra.mxu0 0.0
    %1496 = vmatprep.subr.mxu0 0.0
    %1497 = vmatpush1.msra.mxu0 0.0
    %1498 = vmatprep.subr.mxu0 0.0
    %1499 = vmatpush1.msra.mxu0 0.0
    %1500 = vmatprep.subr.mxu0 0.0
    %1501 = vmatpush1.msra.mxu0 0.0
    %1502 = vmatprep.subr.mxu0 0.0
    %1503 = vmatpush1.msra.mxu0 0.0
    %1504 = vmatprep.subr.mxu0 0.0
    %1505 = vmatpush1.msra.mxu0 0.0
    %1506 = vmatprep.subr.mxu0 0.0
    %1507 = vmatpush1.msra.mxu0 0.0
    %1508 = vmatprep.subr.mxu0 0.0
    %1509 = vmatpush1.msra.mxu0 0.0
    %1510 = vmatprep.subr.mxu0 0.0
    %1511 = vmatpush1.msra.mxu0 0.0
    %1512 = vmatprep.mubr.f32.mxu0 0.0
    %1513 = vmatmul.mubr.f32.gmra.mrb[0].mxu0 %v1446
    %v1514 = vpop.f32.mrb[0].mxu0
    %v1515 = vadd.f32 0.0, %v1514
    %v1516 = vpop.f32.mrb[0].mxu0
    %1517 = vdwg.mxu0
    %v1519 = vrot.slane %v1515, 6
    %v1521 = vadd.f32 %v267, %v1519
    %v1522 = vxor.u32 %v1521, 2147483648
    %v1523 = vmul.f32 %v1522, 1.442695
    %v1524 = vpow.pop %v1523
    %v1525 = vadd.f32 %v1524, 1.0
    %v1526 = vrcp.pop %v1525
    %v1527 = vmul.f32 1.0, %v1526
    %v1528 = vadd.f32 %v1515, %v368
    %v1530 = vrot.slane %v1528, 6
    %1531 = vrot.lane.b32.xlu0 %v1530, 64
    %v1532 = vpop.permute.xlu0 %1531
    %v1534 = vmul.f32 %v1527, %v1532
    %1536 = vrot.lane.b32.xlu0 %v1534, 64
    %v1537 = vpop.permute.xlu0 %1536
    %v1539 = vadd.f32 %v267, %v1537
    %v1540 = vtanh.pop %v1539
    %v1541 = vsub.f32 1.0, %v1527
    %1543 = vrot.lane.b32.xlu0 %v1540, 96
    %v1544 = vpop.permute.xlu0 %1543
    %v1546 = vmul.f32 %v1541, %v1544
    %v1547 = vrot.slane %v1321, 6
    %v1549 = vmul.f32 %v1527, %v1547
    %v1550 = vadd.f32 %v1546, %v1549
    %1552 = vrot.lane.b32.xlu0 %v1550, 96
    %v1553 = vpop.permute.xlu0 %1552
    %1555 = vst.msk [vmem:[#allocation2 + $0x8] sm:$0xc] %vm629, %v1553
    %v1556 = vrot.slane %v1440, 6
    %v1557 = vsel %vm281, %v1556, 0
    %1559 = vmatprep.subr.mxu0 0.0
    %1560 = vmatpush1.msra.mxu0 %v275
    %1561 = vmatprep.subr.mxu0 0.0
    %1562 = vmatpush1.msra.mxu0 %v276
    %1563 = vmatprep.subr.mxu0 0.0
    %1564 = vmatpush1.msra.mxu0 %v277
    %1565 = vmatprep.subr.mxu0 0.0
    %1566 = vmatpush1.msra.mxu0 %v278
    %1567 = vmatprep.subr.mxu0 0.0
    %1568 = vmatpush1.msra.mxu0 0.0
    %1569 = vmatprep.subr.mxu0 0.0
    %1570 = vmatpush1.msra.mxu0 0.0
    %1571 = vmatprep.subr.mxu0 0.0
    %1572 = vmatpush1.msra.mxu0 0.0
    %1573 = vmatprep.subr.mxu0 0.0
    %1574 = vmatpush1.msra.mxu0 0.0
    %1575 = vmatprep.subr.mxu0 0.0
    %1576 = vmatpush1.msra.mxu0 0.0
    %1577 = vmatprep.subr.mxu0 0.0
    %1578 = vmatpush1.msra.mxu0 0.0
    %1579 = vmatprep.subr.mxu0 0.0
    %1580 = vmatpush1.msra.mxu0 0.0
    %1581 = vmatprep.subr.mxu0 0.0
    %1582 = vmatpush1.msra.mxu0 0.0
    %1583 = vmatprep.subr.mxu0 0.0
    %1584 = vmatpush1.msra.mxu0 0.0
    %1585 = vmatprep.subr.mxu0 0.0
    %1586 = vmatpush1.msra.mxu0 0.0
    %1587 = vmatprep.subr.mxu0 0.0
    %1588 = vmatpush1.msra.mxu0 0.0
    %1589 = vmatprep.subr.mxu0 0.0
    %1590 = vmatpush1.msra.mxu0 0.0
    %1591 = vmatprep.subr.mxu0 0.0
    %1592 = vmatpush1.msra.mxu0 0.0
    %1593 = vmatprep.subr.mxu0 0.0
    %1594 = vmatpush1.msra.mxu0 0.0
    %1595 = vmatprep.subr.mxu0 0.0
    %1596 = vmatpush1.msra.mxu0 0.0
    %1597 = vmatprep.subr.mxu0 0.0
    %1598 = vmatpush1.msra.mxu0 0.0
    %1599 = vmatprep.subr.mxu0 0.0
    %1600 = vmatpush1.msra.mxu0 0.0
    %1601 = vmatprep.subr.mxu0 0.0
    %1602 = vmatpush1.msra.mxu0 0.0
    %1603 = vmatprep.subr.mxu0 0.0
    %1604 = vmatpush1.msra.mxu0 0.0
    %1605 = vmatprep.subr.mxu0 0.0
    %1606 = vmatpush1.msra.mxu0 0.0
    %1607 = vmatprep.subr.mxu0 0.0
    %1608 = vmatpush1.msra.mxu0 0.0
    %1609 = vmatprep.subr.mxu0 0.0
    %1610 = vmatpush1.msra.mxu0 0.0
    %1611 = vmatprep.subr.mxu0 0.0
    %1612 = vmatpush1.msra.mxu0 0.0
    %1613 = vmatprep.subr.mxu0 0.0
    %1614 = vmatpush1.msra.mxu0 0.0
    %1615 = vmatprep.subr.mxu0 0.0
    %1616 = vmatpush1.msra.mxu0 0.0
    %1617 = vmatprep.subr.mxu0 0.0
    %1618 = vmatpush1.msra.mxu0 0.0
    %1619 = vmatprep.subr.mxu0 0.0
    %1620 = vmatpush1.msra.mxu0 0.0
    %1621 = vmatprep.subr.mxu0 0.0
    %1622 = vmatpush1.msra.mxu0 0.0
    %1623 = vmatprep.mubr.f32.mxu0 0.0
    %1624 = vmatmul.mubr.f32.gmra.mrb[0].mxu0 %v1557
    %v1625 = vpop.f32.mrb[0].mxu0
    %v1626 = vadd.f32 0.0, %v1625
    %v1627 = vpop.f32.mrb[0].mxu0
    %1628 = vdwg.mxu0
    %v1630 = vrot.slane %v1626, 4
    %1631 = vrot.lane.b32.xlu0 %v1630, 96
    %v1632 = vpop.permute.xlu0 %1631
    %v1634 = vadd.f32 %v261, %v1632
    %v1635 = vxor.u32 %v1634, 2147483648
    %v1636 = vmul.f32 %v1635, 1.442695
    %v1637 = vpow.pop %v1636
    %v1638 = vadd.f32 %v1637, 1.0
    %v1639 = vrcp.pop %v1638
    %v1640 = vmul.f32 1.0, %v1639
    %v1641 = vadd.f32 %v263, %v1632
    %v1642 = vxor.u32 %v1641, 2147483648
    %v1643 = vmul.f32 %v1642, 1.442695
    %v1644 = vpow.pop %v1643
    %v1645 = vadd.f32 %v1644, 1.0
    %v1646 = vrcp.pop %v1645
    %v1647 = vmul.f32 1.0, %v1646
    %v1648 = vadd.f32 %v1626, %v491
    %v1650 = vrot.slane %v1648, 4
    %1651 = vrot.lane.b32.xlu0 %v1650, 32
    %v1652 = vpop.permute.xlu0 %1651
    %v1654 = vmul.f32 %v1640, %v1652
    %1656 = vrot.lane.b32.xlu0 %v1654, 64
    %v1657 = vpop.permute.xlu0 %1656
    %v1659 = vadd.f32 %v263, %v1657
    %v1660 = vtanh.pop %v1659
    %v1661 = vsub.f32 1.0, %v1647
    %1663 = vrot.lane.b32.xlu0 %v1660, 96
    %v1664 = vpop.permute.xlu0 %1663
    %v1666 = vmul.f32 %v1661, %v1664
    %v1667 = vrot.slane %v1440, 2
    %v1669 = vmul.f32 %v1647, %v1667
    %v1670 = vadd.f32 %v1666, %v1669
    %1672 = vrot.lane.b32.xlu0 %v1670, 32
    %v1673 = vpop.permute.xlu0 %1672
    %1675 = vst.msk [vmem:[#allocation2] sm:$0x30] %vm750, %v1673
    %v1676 = vrot.slane %v1550, 2
    %1677 = vrot.lane.b32.xlu0 %v1676, 96
    %v1678 = vpop.permute.xlu0 %1677
    %v1679 = vsel %vm281, %v1678, 0
    %1681 = vmatprep.subr.mxu0 0.0
    %1682 = vmatpush1.msra.mxu0 %v271
    %1683 = vmatprep.subr.mxu0 0.0
    %1684 = vmatpush1.msra.mxu0 %v272
    %1685 = vmatprep.subr.mxu0 0.0
    %1686 = vmatpush1.msra.mxu0 %v273
    %1687 = vmatprep.subr.mxu0 0.0
    %1688 = vmatpush1.msra.mxu0 %v274
    %1689 = vmatprep.subr.mxu0 0.0
    %1690 = vmatpush1.msra.mxu0 0.0
    %1691 = vmatprep.subr.mxu0 0.0
    %1692 = vmatpush1.msra.mxu0 0.0
    %1693 = vmatprep.subr.mxu0 0.0
    %1694 = vmatpush1.msra.mxu0 0.0
    %1695 = vmatprep.subr.mxu0 0.0
    %1696 = vmatpush1.msra.mxu0 0.0
    %1697 = vmatprep.subr.mxu0 0.0
    %1698 = vmatpush1.msra.mxu0 0.0
    %1699 = vmatprep.subr.mxu0 0.0
    %1700 = vmatpush1.msra.mxu0 0.0
    %1701 = vmatprep.subr.mxu0 0.0
    %1702 = vmatpush1.msra.mxu0 0.0
    %1703 = vmatprep.subr.mxu0 0.0
    %1704 = vmatpush1.msra.mxu0 0.0
    %1705 = vmatprep.subr.mxu0 0.0
    %1706 = vmatpush1.msra.mxu0 0.0
    %1707 = vmatprep.subr.mxu0 0.0
    %1708 = vmatpush1.msra.mxu0 0.0
    %1709 = vmatprep.subr.mxu0 0.0
    %1710 = vmatpush1.msra.mxu0 0.0
    %1711 = vmatprep.subr.mxu0 0.0
    %1712 = vmatpush1.msra.mxu0 0.0
    %1713 = vmatprep.subr.mxu0 0.0
    %1714 = vmatpush1.msra.mxu0 0.0
    %1715 = vmatprep.subr.mxu0 0.0
    %1716 = vmatpush1.msra.mxu0 0.0
    %1717 = vmatprep.subr.mxu0 0.0
    %1718 = vmatpush1.msra.mxu0 0.0
    %1719 = vmatprep.subr.mxu0 0.0
    %1720 = vmatpush1.msra.mxu0 0.0
    %1721 = vmatprep.subr.mxu0 0.0
    %1722 = vmatpush1.msra.mxu0 0.0
    %1723 = vmatprep.subr.mxu0 0.0
    %1724 = vmatpush1.msra.mxu0 0.0
    %1725 = vmatprep.subr.mxu0 0.0
    %1726 = vmatpush1.msra.mxu0 0.0
    %1727 = vmatprep.subr.mxu0 0.0
    %1728 = vmatpush1.msra.mxu0 0.0
    %1729 = vmatprep.subr.mxu0 0.0
    %1730 = vmatpush1.msra.mxu0 0.0
    %1731 = vmatprep.subr.mxu0 0.0
    %1732 = vmatpush1.msra.mxu0 0.0
    %1733 = vmatprep.subr.mxu0 0.0
    %1734 = vmatpush1.msra.mxu0 0.0
    %1735 = vmatprep.subr.mxu0 0.0
    %1736 = vmatpush1.msra.mxu0 0.0
    %1737 = vmatprep.subr.mxu0 0.0
    %1738 = vmatpush1.msra.mxu0 0.0
    %1739 = vmatprep.subr.mxu0 0.0
    %1740 = vmatpush1.msra.mxu0 0.0
    %1741 = vmatprep.subr.mxu0 0.0
    %1742 = vmatpush1.msra.mxu0 0.0
    %1743 = vmatprep.subr.mxu0 0.0
    %1744 = vmatpush1.msra.mxu0 0.0
    %1745 = vmatprep.mubr.f32.mxu0 0.0
    %1746 = vmatmul.mubr.f32.gmra.mrb[0].mxu0 %v1679
    %v1747 = vpop.f32.mrb[0].mxu0
    %v1748 = vadd.f32 0.0, %v1747
    %v1749 = vpop.f32.mrb[0].mxu0
    %1750 = vdwg.mxu0
    %v1752 = vrot.slane %v1748, 4
    %v1754 = vadd.f32 %v267, %v1752
    %v1755 = vxor.u32 %v1754, 2147483648
    %v1756 = vmul.f32 %v1755, 1.442695
    %v1757 = vpow.pop %v1756
    %v1758 = vadd.f32 %v1757, 1.0
    %v1759 = vrcp.pop %v1758
    %v1760 = vmul.f32 1.0, %v1759
    %v1761 = vadd.f32 %v1748, %v368
    %v1763 = vrot.slane %v1761, 4
    %1764 = vrot.lane.b32.xlu0 %v1763, 64
    %v1765 = vpop.permute.xlu0 %1764
    %v1767 = vmul.f32 %v1760, %v1765
    %1769 = vrot.lane.b32.xlu0 %v1767, 64
    %v1770 = vpop.permute.xlu0 %1769
    %v1772 = vadd.f32 %v267, %v1770
    %v1773 = vtanh.pop %v1772
    %v1774 = vsub.f32 1.0, %v1760
    %1776 = vrot.lane.b32.xlu0 %v1773, 96
    %v1777 = vpop.permute.xlu0 %1776
    %v1779 = vmul.f32 %v1774, %v1777
    %v1780 = vrot.slane %v1550, 6
    %v1782 = vmul.f32 %v1760, %v1780
    %v1783 = vadd.f32 %v1779, %v1782
    %1785 = vrot.lane.b32.xlu0 %v1783, 96
    %v1786 = vpop.permute.xlu0 %1785
    %1788 = vst.msk [vmem:[#allocation2 + $0x8] sm:$0x30] %vm864, %v1786
    %v1789 = vrot.slane %v1670, 4
    %v1790 = vsel %vm281, %v1789, 0
    %1792 = vmatprep.subr.mxu0 0.0
    %1793 = vmatpush1.msra.mxu0 %v275
    %1794 = vmatprep.subr.mxu0 0.0
    %1795 = vmatpush1.msra.mxu0 %v276
    %1796 = vmatprep.subr.mxu0 0.0
    %1797 = vmatpush1.msra.mxu0 %v277
    %1798 = vmatprep.subr.mxu0 0.0
    %1799 = vmatpush1.msra.mxu0 %v278
    %1800 = vmatprep.subr.mxu0 0.0
    %1801 = vmatpush1.msra.mxu0 0.0
    %1802 = vmatprep.subr.mxu0 0.0
    %1803 = vmatpush1.msra.mxu0 0.0
    %1804 = vmatprep.subr.mxu0 0.0
    %1805 = vmatpush1.msra.mxu0 0.0
    %1806 = vmatprep.subr.mxu0 0.0
    %1807 = vmatpush1.msra.mxu0 0.0
    %1808 = vmatprep.subr.mxu0 0.0
    %1809 = vmatpush1.msra.mxu0 0.0
    %1810 = vmatprep.subr.mxu0 0.0
    %1811 = vmatpush1.msra.mxu0 0.0
    %1812 = vmatprep.subr.mxu0 0.0
    %1813 = vmatpush1.msra.mxu0 0.0
    %1814 = vmatprep.subr.mxu0 0.0
    %1815 = vmatpush1.msra.mxu0 0.0
    %1816 = vmatprep.subr.mxu0 0.0
    %1817 = vmatpush1.msra.mxu0 0.0
    %1818 = vmatprep.subr.mxu0 0.0
    %1819 = vmatpush1.msra.mxu0 0.0
    %1820 = vmatprep.subr.mxu0 0.0
    %1821 = vmatpush1.msra.mxu0 0.0
    %1822 = vmatprep.subr.mxu0 0.0
    %1823 = vmatpush1.msra.mxu0 0.0
    %1824 = vmatprep.subr.mxu0 0.0
    %1825 = vmatpush1.msra.mxu0 0.0
    %1826 = vmatprep.subr.mxu0 0.0
    %1827 = vmatpush1.msra.mxu0 0.0
    %1828 = vmatprep.subr.mxu0 0.0
    %1829 = vmatpush1.msra.mxu0 0.0
    %1830 = vmatprep.subr.mxu0 0.0
    %1831 = vmatpush1.msra.mxu0 0.0
    %1832 = vmatprep.subr.mxu0 0.0
    %1833 = vmatpush1.msra.mxu0 0.0
    %1834 = vmatprep.subr.mxu0 0.0
    %1835 = vmatpush1.msra.mxu0 0.0
    %1836 = vmatprep.subr.mxu0 0.0
    %1837 = vmatpush1.msra.mxu0 0.0
    %1838 = vmatprep.subr.mxu0 0.0
    %1839 = vmatpush1.msra.mxu0 0.0
    %1840 = vmatprep.subr.mxu0 0.0
    %1841 = vmatpush1.msra.mxu0 0.0
    %1842 = vmatprep.subr.mxu0 0.0
    %1843 = vmatpush1.msra.mxu0 0.0
    %1844 = vmatprep.subr.mxu0 0.0
    %1845 = vmatpush1.msra.mxu0 0.0
    %1846 = vmatprep.subr.mxu0 0.0
    %1847 = vmatpush1.msra.mxu0 0.0
    %1848 = vmatprep.subr.mxu0 0.0
    %1849 = vmatpush1.msra.mxu0 0.0
    %1850 = vmatprep.subr.mxu0 0.0
    %1851 = vmatpush1.msra.mxu0 0.0
    %1852 = vmatprep.subr.mxu0 0.0
    %1853 = vmatpush1.msra.mxu0 0.0
    %1854 = vmatprep.subr.mxu0 0.0
    %1855 = vmatpush1.msra.mxu0 0.0
    %1856 = vmatprep.mubr.f32.mxu0 0.0
    %1857 = vmatmul.mubr.f32.gmra.mrb[0].mxu0 %v1790
    %v1858 = vpop.f32.mrb[0].mxu0
    %v1859 = vadd.f32 0.0, %v1858
    %v1860 = vpop.f32.mrb[0].mxu0
    %1861 = vdwg.mxu0
    %v1863 = vrot.slane %v1859, 6
    %1864 = vrot.lane.b32.xlu0 %v1863, 96
    %v1865 = vpop.permute.xlu0 %1864
    %v1867 = vadd.f32 %v261, %v1865
    %v1868 = vxor.u32 %v1867, 2147483648
    %v1869 = vmul.f32 %v1868, 1.442695
    %v1870 = vpow.pop %v1869
    %v1871 = vadd.f32 %v1870, 1.0
    %v1872 = vrcp.pop %v1871
    %v1873 = vmul.f32 1.0, %v1872
    %v1874 = vadd.f32 %v263, %v1865
    %v1875 = vxor.u32 %v1874, 2147483648
    %v1876 = vmul.f32 %v1875, 1.442695
    %v1877 = vpow.pop %v1876
    %v1878 = vadd.f32 %v1877, 1.0
    %v1879 = vrcp.pop %v1878
    %v1880 = vmul.f32 1.0, %v1879
    %v1881 = vadd.f32 %v1859, %v491
    %v1883 = vrot.slane %v1881, 6
    %1884 = vrot.lane.b32.xlu0 %v1883, 32
    %v1885 = vpop.permute.xlu0 %1884
    %v1887 = vmul.f32 %v1873, %v1885
    %1889 = vrot.lane.b32.xlu0 %v1887, 64
    %v1890 = vpop.permute.xlu0 %1889
    %v1892 = vadd.f32 %v263, %v1890
    %v1893 = vtanh.pop %v1892
    %v1894 = vsub.f32 1.0, %v1880
    %1896 = vrot.lane.b32.xlu0 %v1893, 96
    %v1897 = vpop.permute.xlu0 %1896
    %v1899 = vmul.f32 %v1894, %v1897
    %v1900 = vrot.slane %v1670, 2
    %v1902 = vmul.f32 %v1880, %v1900
    %v1903 = vadd.f32 %v1899, %v1902
    %1905 = vrot.lane.b32.xlu0 %v1903, 32
    %v1906 = vpop.permute.xlu0 %1905
    %1908 = vst.msk [vmem:[#allocation2] sm:$0xc] %vm985, %v1906
    %v1909 = vrot.slane %v1783, 4
    %1910 = vrot.lane.b32.xlu0 %v1909, 96
    %v1911 = vpop.permute.xlu0 %1910
    %v1912 = vsel %vm281, %v1911, 0
    %1914 = vmatprep.subr.mxu0 0.0
    %1915 = vmatpush1.msra.mxu0 %v271
    %1916 = vmatprep.subr.mxu0 0.0
    %1917 = vmatpush1.msra.mxu0 %v272
    %1918 = vmatprep.subr.mxu0 0.0
    %1919 = vmatpush1.msra.mxu0 %v273
    %1920 = vmatprep.subr.mxu0 0.0
    %1921 = vmatpush1.msra.mxu0 %v274
    %1922 = vmatprep.subr.mxu0 0.0
    %1923 = vmatpush1.msra.mxu0 0.0
    %1924 = vmatprep.subr.mxu0 0.0
    %1925 = vmatpush1.msra.mxu0 0.0
    %1926 = vmatprep.subr.mxu0 0.0
    %1927 = vmatpush1.msra.mxu0 0.0
    %1928 = vmatprep.subr.mxu0 0.0
    %1929 = vmatpush1.msra.mxu0 0.0
    %1930 = vmatprep.subr.mxu0 0.0
    %1931 = vmatpush1.msra.mxu0 0.0
    %1932 = vmatprep.subr.mxu0 0.0
    %1933 = vmatpush1.msra.mxu0 0.0
    %1934 = vmatprep.subr.mxu0 0.0
    %1935 = vmatpush1.msra.mxu0 0.0
    %1936 = vmatprep.subr.mxu0 0.0
    %1937 = vmatpush1.msra.mxu0 0.0
    %1938 = vmatprep.subr.mxu0 0.0
    %1939 = vmatpush1.msra.mxu0 0.0
    %1940 = vmatprep.subr.mxu0 0.0
    %1941 = vmatpush1.msra.mxu0 0.0
    %1942 = vmatprep.subr.mxu0 0.0
    %1943 = vmatpush1.msra.mxu0 0.0
    %1944 = vmatprep.subr.mxu0 0.0
    %1945 = vmatpush1.msra.mxu0 0.0
    %1946 = vmatprep.subr.mxu0 0.0
    %1947 = vmatpush1.msra.mxu0 0.0
    %1948 = vmatprep.subr.mxu0 0.0
    %1949 = vmatpush1.msra.mxu0 0.0
    %1950 = vmatprep.subr.mxu0 0.0
    %1951 = vmatpush1.msra.mxu0 0.0
    %1952 = vmatprep.subr.mxu0 0.0
    %1953 = vmatpush1.msra.mxu0 0.0
    %1954 = vmatprep.subr.mxu0 0.0
    %1955 = vmatpush1.msra.mxu0 0.0
    %1956 = vmatprep.subr.mxu0 0.0
    %1957 = vmatpush1.msra.mxu0 0.0
    %1958 = vmatprep.subr.mxu0 0.0
    %1959 = vmatpush1.msra.mxu0 0.0
    %1960 = vmatprep.subr.mxu0 0.0
    %1961 = vmatpush1.msra.mxu0 0.0
    %1962 = vmatprep.subr.mxu0 0.0
    %1963 = vmatpush1.msra.mxu0 0.0
    %1964 = vmatprep.subr.mxu0 0.0
    %1965 = vmatpush1.msra.mxu0 0.0
    %1966 = vmatprep.subr.mxu0 0.0
    %1967 = vmatpush1.msra.mxu0 0.0
    %1968 = vmatprep.subr.mxu0 0.0
    %1969 = vmatpush1.msra.mxu0 0.0
    %1970 = vmatprep.subr.mxu0 0.0
    %1971 = vmatpush1.msra.mxu0 0.0
    %1972 = vmatprep.subr.mxu0 0.0
    %1973 = vmatpush1.msra.mxu0 0.0
    %1974 = vmatprep.subr.mxu0 0.0
    %1975 = vmatpush1.msra.mxu0 0.0
    %1976 = vmatprep.subr.mxu0 0.0
    %1977 = vmatpush1.msra.mxu0 0.0
    %1978 = vmatprep.mubr.f32.mxu0 0.0
    %1979 = vmatmul.mubr.f32.gmra.mrb[0].mxu0 %v1912
    %v1980 = vpop.f32.mrb[0].mxu0
    %v1981 = vadd.f32 0.0, %v1980
    %v1982 = vpop.f32.mrb[0].mxu0
    %1983 = vdwg.mxu0
    %v1985 = vrot.slane %v1981, 2
    %v1987 = vadd.f32 %v267, %v1985
    %v1988 = vxor.u32 %v1987, 2147483648
    %v1989 = vmul.f32 %v1988, 1.442695
    %v1990 = vpow.pop %v1989
    %v1991 = vadd.f32 %v1990, 1.0
    %v1992 = vrcp.pop %v1991
    %v1993 = vmul.f32 1.0, %v1992
    %v1994 = vadd.f32 %v1981, %v368
    %v1996 = vrot.slane %v1994, 2
    %1997 = vrot.lane.b32.xlu0 %v1996, 64
    %v1998 = vpop.permute.xlu0 %1997
    %v2000 = vmul.f32 %v1993, %v1998
    %2002 = vrot.lane.b32.xlu0 %v2000, 64
    %v2003 = vpop.permute.xlu0 %2002
    %v2005 = vadd.f32 %v267, %v2003
    %v2006 = vtanh.pop %v2005
    %v2007 = vsub.f32 1.0, %v1993
    %2009 = vrot.lane.b32.xlu0 %v2006, 96
    %v2010 = vpop.permute.xlu0 %2009
    %v2012 = vmul.f32 %v2007, %v2010
    %v2013 = vrot.slane %v1783, 6
    %v2015 = vmul.f32 %v1993, %v2013
    %v2016 = vadd.f32 %v2012, %v2015
    %2018 = vrot.lane.b32.xlu0 %v2016, 96
    %v2019 = vpop.permute.xlu0 %2018
    %2021 = vst.msk [vmem:[#allocation2 + $0x8] sm:$0xc0] %vm1099, %v2019
    %v2022 = vrot.slane %v1903, 2
    %v2023 = vsel %vm281, %v2022, 0
    %2025 = vmatprep.subr.mxu0 0.0
    %2026 = vmatpush1.msra.mxu0 %v275
    %2027 = vmatprep.subr.mxu0 0.0
    %2028 = vmatpush1.msra.mxu0 %v276
    %2029 = vmatprep.subr.mxu0 0.0
    %2030 = vmatpush1.msra.mxu0 %v277
    %2031 = vmatprep.subr.mxu0 0.0
    %2032 = vmatpush1.msra.mxu0 %v278
    %2033 = vmatprep.subr.mxu0 0.0
    %2034 = vmatpush1.msra.mxu0 0.0
    %2035 = vmatprep.subr.mxu0 0.0
    %2036 = vmatpush1.msra.mxu0 0.0
    %2037 = vmatprep.subr.mxu0 0.0
    %2038 = vmatpush1.msra.mxu0 0.0
    %2039 = vmatprep.subr.mxu0 0.0
    %2040 = vmatpush1.msra.mxu0 0.0
    %2041 = vmatprep.subr.mxu0 0.0
    %2042 = vmatpush1.msra.mxu0 0.0
    %2043 = vmatprep.subr.mxu0 0.0
    %2044 = vmatpush1.msra.mxu0 0.0
    %2045 = vmatprep.subr.mxu0 0.0
    %2046 = vmatpush1.msra.mxu0 0.0
    %2047 = vmatprep.subr.mxu0 0.0
    %2048 = vmatpush1.msra.mxu0 0.0
    %2049 = vmatprep.subr.mxu0 0.0
    %2050 = vmatpush1.msra.mxu0 0.0
    %2051 = vmatprep.subr.mxu0 0.0
    %2052 = vmatpush1.msra.mxu0 0.0
    %2053 = vmatprep.subr.mxu0 0.0
    %2054 = vmatpush1.msra.mxu0 0.0
    %2055 = vmatprep.subr.mxu0 0.0
    %2056 = vmatpush1.msra.mxu0 0.0
    %2057 = vmatprep.subr.mxu0 0.0
    %2058 = vmatpush1.msra.mxu0 0.0
    %2059 = vmatprep.subr.mxu0 0.0
    %2060 = vmatpush1.msra.mxu0 0.0
    %2061 = vmatprep.subr.mxu0 0.0
    %2062 = vmatpush1.msra.mxu0 0.0
    %2063 = vmatprep.subr.mxu0 0.0
    %2064 = vmatpush1.msra.mxu0 0.0
    %2065 = vmatprep.subr.mxu0 0.0
    %2066 = vmatpush1.msra.mxu0 0.0
    %2067 = vmatprep.subr.mxu0 0.0
    %2068 = vmatpush1.msra.mxu0 0.0
    %2069 = vmatprep.subr.mxu0 0.0
    %2070 = vmatpush1.msra.mxu0 0.0
    %2071 = vmatprep.subr.mxu0 0.0
    %2072 = vmatpush1.msra.mxu0 0.0
    %2073 = vmatprep.subr.mxu0 0.0
    %2074 = vmatpush1.msra.mxu0 0.0
    %2075 = vmatprep.subr.mxu0 0.0
    %2076 = vmatpush1.msra.mxu0 0.0
    %2077 = vmatprep.subr.mxu0 0.0
    %2078 = vmatpush1.msra.mxu0 0.0
    %2079 = vmatprep.subr.mxu0 0.0
    %2080 = vmatpush1.msra.mxu0 0.0
    %2081 = vmatprep.subr.mxu0 0.0
    %2082 = vmatpush1.msra.mxu0 0.0
    %2083 = vmatprep.subr.mxu0 0.0
    %2084 = vmatpush1.msra.mxu0 0.0
    %2085 = vmatprep.subr.mxu0 0.0
    %2086 = vmatpush1.msra.mxu0 0.0
    %2087 = vmatprep.subr.mxu0 0.0
    %2088 = vmatpush1.msra.mxu0 0.0
    %2089 = vmatprep.mubr.f32.mxu0 0.0
    %2090 = vmatmul.mubr.f32.gmra.mrb[0].mxu0 %v2023
    %v2091 = vpop.f32.mrb[0].mxu0
    %v2092 = vadd.f32 0.0, %v2091
    %v2093 = vpop.f32.mrb[0].mxu0
    %2094 = vdwg.mxu0
    %2096 = vrot.lane.b32.xlu0 %v2092, 96
    %v2097 = vpop.permute.xlu0 %2096
    %v2099 = vadd.f32 %v261, %v2097
    %v2100 = vxor.u32 %v2099, 2147483648
    %v2101 = vmul.f32 %v2100, 1.442695
    %v2102 = vpow.pop %v2101
    %v2103 = vadd.f32 %v2102, 1.0
    %v2104 = vrcp.pop %v2103
    %v2105 = vmul.f32 1.0, %v2104
    %v2106 = vadd.f32 %v263, %v2097
    %v2107 = vxor.u32 %v2106, 2147483648
    %v2108 = vmul.f32 %v2107, 1.442695
    %v2109 = vpow.pop %v2108
    %v2110 = vadd.f32 %v2109, 1.0
    %v2111 = vrcp.pop %v2110
    %v2112 = vmul.f32 1.0, %v2111
    %v2113 = vadd.f32 %v2092, %v491
    %2115 = vrot.lane.b32.xlu0 %v2113, 32
    %v2116 = vpop.permute.xlu0 %2115
    %v2118 = vmul.f32 %v2105, %v2116
    %2120 = vrot.lane.b32.xlu0 %v2118, 64
    %v2121 = vpop.permute.xlu0 %2120
    %v2123 = vadd.f32 %v263, %v2121
    %v2124 = vtanh.pop %v2123
    %v2125 = vsub.f32 1.0, %v2112
    %2127 = vrot.lane.b32.xlu0 %v2124, 96
    %v2128 = vpop.permute.xlu0 %2127
    %v2130 = vmul.f32 %v2125, %v2128
    %v2132 = vmul.f32 %v2112, %v2022
    %v2133 = vadd.f32 %v2130, %v2132
    %2135 = vrot.lane.b32.xlu0 %v2133, 32
    %v2136 = vpop.permute.xlu0 %2135
    %2138 = vst.msk [vmem:[#allocation2] sm:$0x3] %vm1217, %v2136
    %v2139 = vld [vmem:[#allocation2] sm:$0xff]
    %v2140 = vld [vmem:[#allocation2 + $0x8] sm:$0xff]
    %v2141 = vld [vmem:[#allocation11] sm:$0xff]
    %v2142 = vld [vmem:[#allocation11 + $0x8] sm:$0xff]
    %v2143 = vld [vmem:[#allocation11 + $0x10] sm:$0xff]
    %v2144 = vld [vmem:[#allocation11 + $0x18] sm:$0xff]
    %v2145 = vld [vmem:[#allocation11 + $0x20] sm:$0xff]
    %v2146 = vld [vmem:[#allocation11 + $0x28] sm:$0xff]
    %v2147 = vld [vmem:[#allocation11 + $0x30] sm:$0xff]
    %v2148 = vld [vmem:[#allocation11 + $0x38] sm:$0xff]
    %v2149 = vld [vmem:[#allocation11 + $0x40] sm:$0xff]
    %v2150 = vld [vmem:[#allocation11 + $0x48] sm:$0xff]
    %v2151 = vld [vmem:[#allocation11 + $0x50] sm:$0xff]
    %v2152 = vld [vmem:[#allocation11 + $0x58] sm:$0xff]
    %v2153 = vld [vmem:[#allocation11 + $0x60] sm:$0xff]
    %v2154 = vld [vmem:[#allocation11 + $0x68] sm:$0xff]
    %v2155 = vld [vmem:[#allocation11 + $0x70] sm:$0xff]
    %v2156 = vld [vmem:[#allocation11 + $0x78] sm:$0xff]
    %v2157 = vld [vmem:[%s8] sm:$0x3]
    %v2159 = vlaneseq
    %v2160 = vshrl.u32 %v2159, 7
    %v2161 = vsub.s32 0, %v2160
    %v2162 = vrot.slane %v2157, %v2161
    %v2163 = vlaneseq
    %v2164 = vshrl.u32 %v2163, 7
    %v2165 = vsub.s32 1, %v2164
    %v2166 = vrot.slane %v2157, %v2165
    %v2170 = vsel %vm187, %v2139, 0
    %v2173 = vsel %vm187, %v2140, 0
    %2175 = vmatprep.subr.mxu0 %v2142
    %2176 = vmatpush1.msra.mxu0 %v2141
    %2177 = vmatprep.subr.mxu0 %v2144
    %2178 = vmatpush1.msra.mxu0 %v2143
    %2179 = vmatprep.subr.mxu0 %v2146
    %2180 = vmatpush1.msra.mxu0 %v2145
    %2181 = vmatprep.subr.mxu0 %v2148
    %2182 = vmatpush1.msra.mxu0 %v2147
    %2183 = vmatprep.subr.mxu0 %v2150
    %2184 = vmatpush1.msra.mxu0 %v2149
    %2185 = vmatprep.subr.mxu0 %v2152
    %2186 = vmatpush1.msra.mxu0 %v2151
    %2187 = vmatprep.subr.mxu0 %v2154
    %2188 = vmatpush1.msra.mxu0 %v2153
    %2189 = vmatprep.subr.mxu0 %v2156
    %2190 = vmatpush1.msra.mxu0 %v2155
    %2191 = vmatprep.subr.mxu0 0.0
    %2192 = vmatpush1.msra.mxu0 0.0
    %2193 = vmatprep.subr.mxu0 0.0
    %2194 = vmatpush1.msra.mxu0 0.0
    %2195 = vmatprep.subr.mxu0 0.0
    %2196 = vmatpush1.msra.mxu0 0.0
    %2197 = vmatprep.subr.mxu0 0.0
    %2198 = vmatpush1.msra.mxu0 0.0
    %2199 = vmatprep.subr.mxu0 0.0
    %2200 = vmatpush1.msra.mxu0 0.0
    %2201 = vmatprep.subr.mxu0 0.0
    %2202 = vmatpush1.msra.mxu0 0.0
    %2203 = vmatprep.subr.mxu0 0.0
    %2204 = vmatpush1.msra.mxu0 0.0
    %2205 = vmatprep.subr.mxu0 0.0
    %2206 = vmatpush1.msra.mxu0 0.0
    %2207 = vmatprep.subr.mxu0 0.0
    %2208 = vmatpush1.msra.mxu0 0.0
    %2209 = vmatprep.subr.mxu0 0.0
    %2210 = vmatpush1.msra.mxu0 0.0
    %2211 = vmatprep.subr.mxu0 0.0
    %2212 = vmatpush1.msra.mxu0 0.0
    %2213 = vmatprep.subr.mxu0 0.0
    %2214 = vmatpush1.msra.mxu0 0.0
    %2215 = vmatprep.subr.mxu0 0.0
    %2216 = vmatpush1.msra.mxu0 0.0
    %2217 = vmatprep.subr.mxu0 0.0
    %2218 = vmatpush1.msra.mxu0 0.0
    %2219 = vmatprep.subr.mxu0 0.0
    %2220 = vmatpush1.msra.mxu0 0.0
    %2221 = vmatprep.subr.mxu0 0.0
    %2222 = vmatpush1.msra.mxu0 0.0
    %2223 = vmatprep.subr.mxu0 0.0
    %2224 = vmatpush1.msra.mxu0 0.0
    %2225 = vmatprep.subr.mxu0 0.0
    %2226 = vmatpush1.msra.mxu0 0.0
    %2227 = vmatprep.subr.mxu0 0.0
    %2228 = vmatpush1.msra.mxu0 0.0
    %2229 = vmatprep.subr.mxu0 0.0
    %2230 = vmatpush1.msra.mxu0 0.0
    %2231 = vmatprep.subr.mxu0 0.0
    %2232 = vmatpush1.msra.mxu0 0.0
    %2233 = vmatprep.subr.mxu0 0.0
    %2234 = vmatpush1.msra.mxu0 0.0
    %2235 = vmatprep.subr.mxu0 0.0
    %2236 = vmatpush1.msra.mxu0 0.0
    %2237 = vmatprep.subr.mxu0 0.0
    %2238 = vmatpush1.msra.mxu0 0.0
    %2239 = vmatprep.mubr.f32.mxu0 0.0
    %2240 = vmatmul.mubr.f32.gmra.mrb[0].mxu0 %v2170
    %v2241 = vpop.f32.mrb[0].mxu0
    %v2242 = vadd.f32 %v2162, %v2241
    %v2243 = vpop.f32.mrb[0].mxu0
    %v2244 = vadd.f32 %v2166, %v2243
    %2245 = vmatprep.mubr.f32.mxu0 0.0
    %2246 = vmatmul.mubr.f32.gmra.mrb[0].mxu0 %v2173
    %v2247 = vpop.f32.mrb[0].mxu0
    %v2248 = vadd.f32 %v2162, %v2247
    %v2249 = vpop.f32.mrb[0].mxu0
    %v2250 = vadd.f32 %v2166, %v2249
    %2251 = vdwg.mxu0
    %v2252 = vld [vmem:[%s9] sm:$0xff]
    %v2253 = vld [vmem:[%s9 + $0x8] sm:$0xff]
    %v2254 = vld [vmem:[%s9 + $0x10] sm:$0xff]
    %v2255 = vld [vmem:[%s9 + $0x18] sm:$0xff]
    %v2256 = vld [vmem:[#allocation12] sm:$0xff]
    %v2257 = vld [vmem:[#allocation12 + $0x8] sm:$0xff]
    %v2258 = vld [vmem:[#allocation12 + $0x10] sm:$0xff]
    %v2259 = vld [vmem:[#allocation12 + $0x18] sm:$0xff]
    %v2260 = vld [vmem:[%s11] sm:$0x1]
    %v2261 = vld [vmem:[%s12] sm:$0x1]
    %2262 = vmatprep.subr.mxu0 0.0
    %2263 = vmatpush1.msra.mxu0 %v2252
    %2264 = vmatprep.subr.mxu0 0.0
    %2265 = vmatpush1.msra.mxu0 %v2253
    %2266 = vmatprep.subr.mxu0 0.0
    %2267 = vmatpush1.msra.mxu0 %v2254
    %2268 = vmatprep.subr.mxu0 0.0
    %2269 = vmatpush1.msra.mxu0 %v2255
    %2270 = vmatprep.subr.mxu0 0.0
    %2271 = vmatpush1.msra.mxu0 0.0
    %2272 = vmatprep.subr.mxu0 0.0
    %2273 = vmatpush1.msra.mxu0 0.0
    %2274 = vmatprep.subr.mxu0 0.0
    %2275 = vmatpush1.msra.mxu0 0.0
    %2276 = vmatprep.subr.mxu0 0.0
    %2277 = vmatpush1.msra.mxu0 0.0
    %2278 = vmatprep.subr.mxu0 0.0
    %2279 = vmatpush1.msra.mxu0 0.0
    %2280 = vmatprep.subr.mxu0 0.0
    %2281 = vmatpush1.msra.mxu0 0.0
    %2282 = vmatprep.subr.mxu0 0.0
    %2283 = vmatpush1.msra.mxu0 0.0
    %2284 = vmatprep.subr.mxu0 0.0
    %2285 = vmatpush1.msra.mxu0 0.0
    %2286 = vmatprep.subr.mxu0 0.0
    %2287 = vmatpush1.msra.mxu0 0.0
    %2288 = vmatprep.subr.mxu0 0.0
    %2289 = vmatpush1.msra.mxu0 0.0
    %2290 = vmatprep.subr.mxu0 0.0
    %2291 = vmatpush1.msra.mxu0 0.0
    %2292 = vmatprep.subr.mxu0 0.0
    %2293 = vmatpush1.msra.mxu0 0.0
    %2294 = vmatprep.subr.mxu0 0.0
    %2295 = vmatpush1.msra.mxu0 0.0
    %2296 = vmatprep.subr.mxu0 0.0
    %2297 = vmatpush1.msra.mxu0 0.0
    %2298 = vmatprep.subr.mxu0 0.0
    %2299 = vmatpush1.msra.mxu0 0.0
    %2300 = vmatprep.subr.mxu0 0.0
    %2301 = vmatpush1.msra.mxu0 0.0
    %2302 = vmatprep.subr.mxu0 0.0
    %2303 = vmatpush1.msra.mxu0 0.0
    %2304 = vmatprep.subr.mxu0 0.0
    %2305 = vmatpush1.msra.mxu0 0.0
    %2306 = vmatprep.subr.mxu0 0.0
    %2307 = vmatpush1.msra.mxu0 0.0
    %2308 = vmatprep.subr.mxu0 0.0
    %2309 = vmatpush1.msra.mxu0 0.0
    %2310 = vmatprep.subr.mxu0 0.0
    %2311 = vmatpush1.msra.mxu0 0.0
    %2312 = vmatprep.subr.mxu0 0.0
    %2313 = vmatpush1.msra.mxu0 0.0
    %2314 = vmatprep.subr.mxu0 0.0
    %2315 = vmatpush1.msra.mxu0 0.0
    %2316 = vmatprep.subr.mxu0 0.0
    %2317 = vmatpush1.msra.mxu0 0.0
    %2318 = vmatprep.subr.mxu0 0.0
    %2319 = vmatpush1.msra.mxu0 0.0
    %2320 = vmatprep.subr.mxu0 0.0
    %2321 = vmatpush1.msra.mxu0 0.0
    %2322 = vmatprep.subr.mxu0 0.0
    %2323 = vmatpush1.msra.mxu0 0.0
    %2324 = vmatprep.subr.mxu0 0.0
    %2325 = vmatpush1.msra.mxu0 0.0
    %2326 = vmatprep.mubr.f32.mxu0 0.0
    %2327 = vmatmul.mubr.f32.gmra.mrb[0].mxu0 %v283
    %v2328 = vpop.f32.mrb[0].mxu0
    %v2329 = vadd.f32 0.0, %v2328
    %v2330 = vpop.f32.mrb[0].mxu0
    %2331 = vdwg.mxu0
    %v2332 = vadd.f32 %v2242, %v2329
    %v2333 = vxor.u32 %v2332, 2147483648
    %v2334 = vmul.f32 %v2333, 1.442695
    %v2335 = vpow.pop %v2334
    %v2336 = vadd.f32 %v2335, 1.0
    %v2337 = vrcp.pop %v2336
    %v2338 = vmul.f32 1.0, %v2337
    %v2340 = vlaneseq
    %v2341 = vshrl.u32 %v2340, 7
    %v2342 = vsub.s32 0, %v2341
    %v2343 = vrot.slane %v2260, %v2342
    %2344 = vrot.lane.b32.xlu0 %v2343, 64
    %v2345 = vpop.permute.xlu0 %2344
    %v2347 = vadd.f32 %v2329, %v2345
    %2349 = vrot.lane.b32.xlu0 %v2347, 64
    %v2350 = vpop.permute.xlu0 %2349
    %v2352 = vmul.f32 %v2338, %v2350
    %2354 = vrot.lane.b32.xlu0 %v2352, 64
    %v2355 = vpop.permute.xlu0 %2354
    %v2357 = vadd.f32 %v2242, %v2355
    %v2358 = vtanh.pop %v2357
    %v2359 = vsub.f32 1.0, %v2338
    %2361 = vrot.lane.b32.xlu0 %v2358, 96
    %v2362 = vpop.permute.xlu0 %2361
    %v2364 = vmul.f32 %v2359, %v2362
    %v2365 = vmul.f32 %v2338, 0.0
    %v2366 = vadd.f32 %v2364, %v2365
    %2368 = vrot.lane.b32.xlu0 %v2366, 96
    %v2369 = vpop.permute.xlu0 %2368
    %2371 = vst.msk [vmem:[#allocation3] sm:$0x3] %vm394, %v2369
    %2372 = vmatprep.subr.mxu0 0.0
    %2373 = vmatpush1.msra.mxu0 %v2256
    %2374 = vmatprep.subr.mxu0 0.0
    %2375 = vmatpush1.msra.mxu0 %v2257
    %2376 = vmatprep.subr.mxu0 0.0
    %2377 = vmatpush1.msra.mxu0 %v2258
    %2378 = vmatprep.subr.mxu0 0.0
    %2379 = vmatpush1.msra.mxu0 %v2259
    %2380 = vmatprep.subr.mxu0 0.0
    %2381 = vmatpush1.msra.mxu0 0.0
    %2382 = vmatprep.subr.mxu0 0.0
    %2383 = vmatpush1.msra.mxu0 0.0
    %2384 = vmatprep.subr.mxu0 0.0
    %2385 = vmatpush1.msra.mxu0 0.0
    %2386 = vmatprep.subr.mxu0 0.0
    %2387 = vmatpush1.msra.mxu0 0.0
    %2388 = vmatprep.subr.mxu0 0.0
    %2389 = vmatpush1.msra.mxu0 0.0
    %2390 = vmatprep.subr.mxu0 0.0
    %2391 = vmatpush1.msra.mxu0 0.0
    %2392 = vmatprep.subr.mxu0 0.0
    %2393 = vmatpush1.msra.mxu0 0.0
    %2394 = vmatprep.subr.mxu0 0.0
    %2395 = vmatpush1.msra.mxu0 0.0
    %2396 = vmatprep.subr.mxu0 0.0
    %2397 = vmatpush1.msra.mxu0 0.0
    %2398 = vmatprep.subr.mxu0 0.0
    %2399 = vmatpush1.msra.mxu0 0.0
    %2400 = vmatprep.subr.mxu0 0.0
    %2401 = vmatpush1.msra.mxu0 0.0
    %2402 = vmatprep.subr.mxu0 0.0
    %2403 = vmatpush1.msra.mxu0 0.0
    %2404 = vmatprep.subr.mxu0 0.0
    %2405 = vmatpush1.msra.mxu0 0.0
    %2406 = vmatprep.subr.mxu0 0.0
    %2407 = vmatpush1.msra.mxu0 0.0
    %2408 = vmatprep.subr.mxu0 0.0
    %2409 = vmatpush1.msra.mxu0 0.0
    %2410 = vmatprep.subr.mxu0 0.0
    %2411 = vmatpush1.msra.mxu0 0.0
    %2412 = vmatprep.subr.mxu0 0.0
    %2413 = vmatpush1.msra.mxu0 0.0
    %2414 = vmatprep.subr.mxu0 0.0
    %2415 = vmatpush1.msra.mxu0 0.0
    %2416 = vmatprep.subr.mxu0 0.0
    %2417 = vmatpush1.msra.mxu0 0.0
    %2418 = vmatprep.subr.mxu0 0.0
    %2419 = vmatpush1.msra.mxu0 0.0
    %2420 = vmatprep.subr.mxu0 0.0
    %2421 = vmatpush1.msra.mxu0 0.0
    %2422 = vmatprep.subr.mxu0 0.0
    %2423 = vmatpush1.msra.mxu0 0.0
    %2424 = vmatprep.subr.mxu0 0.0
    %2425 = vmatpush1.msra.mxu0 0.0
    %2426 = vmatprep.subr.mxu0 0.0
    %2427 = vmatpush1.msra.mxu0 0.0
    %2428 = vmatprep.subr.mxu0 0.0
    %2429 = vmatpush1.msra.mxu0 0.0
    %2430 = vmatprep.subr.mxu0 0.0
    %2431 = vmatpush1.msra.mxu0 0.0
    %2432 = vmatprep.subr.mxu0 0.0
    %2433 = vmatpush1.msra.mxu0 0.0
    %2434 = vmatprep.subr.mxu0 0.0
    %2435 = vmatpush1.msra.mxu0 0.0
    %2436 = vmatprep.mubr.f32.mxu0 0.0
    %2437 = vmatmul.mubr.f32.gmra.mrb[0].mxu0 %v283
    %v2438 = vpop.f32.mrb[0].mxu0
    %v2439 = vadd.f32 0.0, %v2438
    %v2440 = vpop.f32.mrb[0].mxu0
    %2441 = vdwg.mxu0
    %v2443 = vrot.slane %v2439, 2
    %2444 = vrot.lane.b32.xlu0 %v2443, 96
    %v2445 = vpop.permute.xlu0 %2444
    %v2447 = vadd.f32 %v2248, %v2445
    %v2448 = vxor.u32 %v2447, 2147483648
    %v2449 = vmul.f32 %v2448, 1.442695
    %v2450 = vpow.pop %v2449
    %v2451 = vadd.f32 %v2450, 1.0
    %v2452 = vrcp.pop %v2451
    %v2453 = vmul.f32 1.0, %v2452
    %v2454 = vadd.f32 %v2250, %v2445
    %v2455 = vxor.u32 %v2454, 2147483648
    %v2456 = vmul.f32 %v2455, 1.442695
    %v2457 = vpow.pop %v2456
    %v2458 = vadd.f32 %v2457, 1.0
    %v2459 = vrcp.pop %v2458
    %v2460 = vmul.f32 1.0, %v2459
    %v2462 = vlaneseq
    %v2463 = vshrl.u32 %v2462, 7
    %v2464 = vsub.s32 0, %v2463
    %v2465 = vrot.slane %v2261, %v2464
    %2466 = vrot.lane.b32.xlu0 %v2465, 64
    %v2467 = vpop.permute.xlu0 %2466
    %v2469 = vadd.f32 %v2439, %v2467
    %v2471 = vrot.slane %v2469, 2
    %2472 = vrot.lane.b32.xlu0 %v2471, 32
    %v2473 = vpop.permute.xlu0 %2472
    %v2475 = vmul.f32 %v2453, %v2473
    %2477 = vrot.lane.b32.xlu0 %v2475, 64
    %v2478 = vpop.permute.xlu0 %2477
    %v2480 = vadd.f32 %v2250, %v2478
    %v2481 = vtanh.pop %v2480
    %v2482 = vsub.f32 1.0, %v2460
    %2484 = vrot.lane.b32.xlu0 %v2481, 96
    %v2485 = vpop.permute.xlu0 %2484
    %v2487 = vmul.f32 %v2482, %v2485
    %v2488 = vmul.f32 %v2460, 0.0
    %v2489 = vadd.f32 %v2487, %v2488
    %2491 = vrot.lane.b32.xlu0 %v2489, 32
    %v2492 = vpop.permute.xlu0 %2491
    %2494 = vst.msk [vmem:[#allocation3 + $0x8] sm:$0xc0] %vm518, %v2492
    %v2495 = vsel %vm281, %v2369, 0
    %2497 = vmatprep.subr.mxu0 0.0
    %2498 = vmatpush1.msra.mxu0 %v2252
    %2499 = vmatprep.subr.mxu0 0.0
    %2500 = vmatpush1.msra.mxu0 %v2253
    %2501 = vmatprep.subr.mxu0 0.0
    %2502 = vmatpush1.msra.mxu0 %v2254
    %2503 = vmatprep.subr.mxu0 0.0
    %2504 = vmatpush1.msra.mxu0 %v2255
    %2505 = vmatprep.subr.mxu0 0.0
    %2506 = vmatpush1.msra.mxu0 0.0
    %2507 = vmatprep.subr.mxu0 0.0
    %2508 = vmatpush1.msra.mxu0 0.0
    %2509 = vmatprep.subr.mxu0 0.0
    %2510 = vmatpush1.msra.mxu0 0.0
    %2511 = vmatprep.subr.mxu0 0.0
    %2512 = vmatpush1.msra.mxu0 0.0
    %2513 = vmatprep.subr.mxu0 0.0
    %2514 = vmatpush1.msra.mxu0 0.0
    %2515 = vmatprep.subr.mxu0 0.0
    %2516 = vmatpush1.msra.mxu0 0.0
    %2517 = vmatprep.subr.mxu0 0.0
    %2518 = vmatpush1.msra.mxu0 0.0
    %2519 = vmatprep.subr.mxu0 0.0
    %2520 = vmatpush1.msra.mxu0 0.0
    %2521 = vmatprep.subr.mxu0 0.0
    %2522 = vmatpush1.msra.mxu0 0.0
    %2523 = vmatprep.subr.mxu0 0.0
    %2524 = vmatpush1.msra.mxu0 0.0
    %2525 = vmatprep.subr.mxu0 0.0
    %2526 = vmatpush1.msra.mxu0 0.0
    %2527 = vmatprep.subr.mxu0 0.0
    %2528 = vmatpush1.msra.mxu0 0.0
    %2529 = vmatprep.subr.mxu0 0.0
    %2530 = vmatpush1.msra.mxu0 0.0
    %2531 = vmatprep.subr.mxu0 0.0
    %2532 = vmatpush1.msra.mxu0 0.0
    %2533 = vmatprep.subr.mxu0 0.0
    %2534 = vmatpush1.msra.mxu0 0.0
    %2535 = vmatprep.subr.mxu0 0.0
    %2536 = vmatpush1.msra.mxu0 0.0
    %2537 = vmatprep.subr.mxu0 0.0
    %2538 = vmatpush1.msra.mxu0 0.0
    %2539 = vmatprep.subr.mxu0 0.0
    %2540 = vmatpush1.msra.mxu0 0.0
    %2541 = vmatprep.subr.mxu0 0.0
    %2542 = vmatpush1.msra.mxu0 0.0
    %2543 = vmatprep.subr.mxu0 0.0
    %2544 = vmatpush1.msra.mxu0 0.0
    %2545 = vmatprep.subr.mxu0 0.0
    %2546 = vmatpush1.msra.mxu0 0.0
    %2547 = vmatprep.subr.mxu0 0.0
    %2548 = vmatpush1.msra.mxu0 0.0
    %2549 = vmatprep.subr.mxu0 0.0
    %2550 = vmatpush1.msra.mxu0 0.0
    %2551 = vmatprep.subr.mxu0 0.0
    %2552 = vmatpush1.msra.mxu0 0.0
    %2553 = vmatprep.subr.mxu0 0.0
    %2554 = vmatpush1.msra.mxu0 0.0
    %2555 = vmatprep.subr.mxu0 0.0
    %2556 = vmatpush1.msra.mxu0 0.0
    %2557 = vmatprep.subr.mxu0 0.0
    %2558 = vmatpush1.msra.mxu0 0.0
    %2559 = vmatprep.subr.mxu0 0.0
    %2560 = vmatpush1.msra.mxu0 0.0
    %2561 = vmatprep.mubr.f32.mxu0 0.0
    %2562 = vmatmul.mubr.f32.gmra.mrb[0].mxu0 %v2495
    %v2563 = vpop.f32.mrb[0].mxu0
    %v2564 = vadd.f32 0.0, %v2563
    %v2565 = vpop.f32.mrb[0].mxu0
    %2566 = vdwg.mxu0
    %v2568 = vrot.slane %v2564, 6
    %v2570 = vadd.f32 %v2242, %v2568
    %v2571 = vxor.u32 %v2570, 2147483648
    %v2572 = vmul.f32 %v2571, 1.442695
    %v2573 = vpow.pop %v2572
    %v2574 = vadd.f32 %v2573, 1.0
    %v2575 = vrcp.pop %v2574
    %v2576 = vmul.f32 1.0, %v2575
    %v2577 = vadd.f32 %v2564, %v2345
    %v2579 = vrot.slane %v2577, 6
    %2580 = vrot.lane.b32.xlu0 %v2579, 64
    %v2581 = vpop.permute.xlu0 %2580
    %v2583 = vmul.f32 %v2576, %v2581
    %2585 = vrot.lane.b32.xlu0 %v2583, 64
    %v2586 = vpop.permute.xlu0 %2585
    %v2588 = vadd.f32 %v2242, %v2586
    %v2589 = vtanh.pop %v2588
    %v2590 = vsub.f32 1.0, %v2576
    %2592 = vrot.lane.b32.xlu0 %v2589, 96
    %v2593 = vpop.permute.xlu0 %2592
    %v2595 = vmul.f32 %v2590, %v2593
    %v2596 = vrot.slane %v2366, 6
    %v2598 = vmul.f32 %v2576, %v2596
    %v2599 = vadd.f32 %v2595, %v2598
    %2601 = vrot.lane.b32.xlu0 %v2599, 96
    %v2602 = vpop.permute.xlu0 %2601
    %2604 = vst.msk [vmem:[#allocation3] sm:$0xc] %vm629, %v2602
    %v2605 = vrot.slane %v2489, 6
    %v2606 = vsel %vm281, %v2605, 0
    %2608 = vmatprep.subr.mxu0 0.0
    %2609 = vmatpush1.msra.mxu0 %v2256
    %2610 = vmatprep.subr.mxu0 0.0
    %2611 = vmatpush1.msra.mxu0 %v2257
    %2612 = vmatprep.subr.mxu0 0.0
    %2613 = vmatpush1.msra.mxu0 %v2258
    %2614 = vmatprep.subr.mxu0 0.0
    %2615 = vmatpush1.msra.mxu0 %v2259
    %2616 = vmatprep.subr.mxu0 0.0
    %2617 = vmatpush1.msra.mxu0 0.0
    %2618 = vmatprep.subr.mxu0 0.0
    %2619 = vmatpush1.msra.mxu0 0.0
    %2620 = vmatprep.subr.mxu0 0.0
    %2621 = vmatpush1.msra.mxu0 0.0
    %2622 = vmatprep.subr.mxu0 0.0
    %2623 = vmatpush1.msra.mxu0 0.0
    %2624 = vmatprep.subr.mxu0 0.0
    %2625 = vmatpush1.msra.mxu0 0.0
    %2626 = vmatprep.subr.mxu0 0.0
    %2627 = vmatpush1.msra.mxu0 0.0
    %2628 = vmatprep.subr.mxu0 0.0
    %2629 = vmatpush1.msra.mxu0 0.0
    %2630 = vmatprep.subr.mxu0 0.0
    %2631 = vmatpush1.msra.mxu0 0.0
    %2632 = vmatprep.subr.mxu0 0.0
    %2633 = vmatpush1.msra.mxu0 0.0
    %2634 = vmatprep.subr.mxu0 0.0
    %2635 = vmatpush1.msra.mxu0 0.0
    %2636 = vmatprep.subr.mxu0 0.0
    %2637 = vmatpush1.msra.mxu0 0.0
    %2638 = vmatprep.subr.mxu0 0.0
    %2639 = vmatpush1.msra.mxu0 0.0
    %2640 = vmatprep.subr.mxu0 0.0
    %2641 = vmatpush1.msra.mxu0 0.0
    %2642 = vmatprep.subr.mxu0 0.0
    %2643 = vmatpush1.msra.mxu0 0.0
    %2644 = vmatprep.subr.mxu0 0.0
    %2645 = vmatpush1.msra.mxu0 0.0
    %2646 = vmatprep.subr.mxu0 0.0
    %2647 = vmatpush1.msra.mxu0 0.0
    %2648 = vmatprep.subr.mxu0 0.0
    %2649 = vmatpush1.msra.mxu0 0.0
    %2650 = vmatprep.subr.mxu0 0.0
    %2651 = vmatpush1.msra.mxu0 0.0
    %2652 = vmatprep.subr.mxu0 0.0
    %2653 = vmatpush1.msra.mxu0 0.0
    %2654 = vmatprep.subr.mxu0 0.0
    %2655 = vmatpush1.msra.mxu0 0.0
    %2656 = vmatprep.subr.mxu0 0.0
    %2657 = vmatpush1.msra.mxu0 0.0
    %2658 = vmatprep.subr.mxu0 0.0
    %2659 = vmatpush1.msra.mxu0 0.0
    %2660 = vmatprep.subr.mxu0 0.0
    %2661 = vmatpush1.msra.mxu0 0.0
    %2662 = vmatprep.subr.mxu0 0.0
    %2663 = vmatpush1.msra.mxu0 0.0
    %2664 = vmatprep.subr.mxu0 0.0
    %2665 = vmatpush1.msra.mxu0 0.0
    %2666 = vmatprep.subr.mxu0 0.0
    %2667 = vmatpush1.msra.mxu0 0.0
    %2668 = vmatprep.subr.mxu0 0.0
    %2669 = vmatpush1.msra.mxu0 0.0
    %2670 = vmatprep.subr.mxu0 0.0
    %2671 = vmatpush1.msra.mxu0 0.0
    %2672 = vmatprep.mubr.f32.mxu0 0.0
    %2673 = vmatmul.mubr.f32.gmra.mrb[0].mxu0 %v2606
    %v2674 = vpop.f32.mrb[0].mxu0
    %v2675 = vadd.f32 0.0, %v2674
    %v2676 = vpop.f32.mrb[0].mxu0
    %2677 = vdwg.mxu0
    %v2679 = vrot.slane %v2675, 4
    %2680 = vrot.lane.b32.xlu0 %v2679, 96
    %v2681 = vpop.permute.xlu0 %2680
    %v2683 = vadd.f32 %v2248, %v2681
    %v2684 = vxor.u32 %v2683, 2147483648
    %v2685 = vmul.f32 %v2684, 1.442695
    %v2686 = vpow.pop %v2685
    %v2687 = vadd.f32 %v2686, 1.0
    %v2688 = vrcp.pop %v2687
    %v2689 = vmul.f32 1.0, %v2688
    %v2690 = vadd.f32 %v2250, %v2681
    %v2691 = vxor.u32 %v2690, 2147483648
    %v2692 = vmul.f32 %v2691, 1.442695
    %v2693 = vpow.pop %v2692
    %v2694 = vadd.f32 %v2693, 1.0
    %v2695 = vrcp.pop %v2694
    %v2696 = vmul.f32 1.0, %v2695
    %v2697 = vadd.f32 %v2675, %v2467
    %v2699 = vrot.slane %v2697, 4
    %2700 = vrot.lane.b32.xlu0 %v2699, 32
    %v2701 = vpop.permute.xlu0 %2700
    %v2703 = vmul.f32 %v2689, %v2701
    %2705 = vrot.lane.b32.xlu0 %v2703, 64
    %v2706 = vpop.permute.xlu0 %2705
    %v2708 = vadd.f32 %v2250, %v2706
    %v2709 = vtanh.pop %v2708
    %v2710 = vsub.f32 1.0, %v2696
    %2712 = vrot.lane.b32.xlu0 %v2709, 96
    %v2713 = vpop.permute.xlu0 %2712
    %v2715 = vmul.f32 %v2710, %v2713
    %v2716 = vrot.slane %v2489, 2
    %v2718 = vmul.f32 %v2696, %v2716
    %v2719 = vadd.f32 %v2715, %v2718
    %2721 = vrot.lane.b32.xlu0 %v2719, 32
    %v2722 = vpop.permute.xlu0 %2721
    %2724 = vst.msk [vmem:[#allocation3 + $0x8] sm:$0x30] %vm750, %v2722
    %v2725 = vrot.slane %v2599, 2
    %2726 = vrot.lane.b32.xlu0 %v2725, 96
    %v2727 = vpop.permute.xlu0 %2726
    %v2728 = vsel %vm281, %v2727, 0
    %2730 = vmatprep.subr.mxu0 0.0
    %2731 = vmatpush1.msra.mxu0 %v2252
    %2732 = vmatprep.subr.mxu0 0.0
    %2733 = vmatpush1.msra.mxu0 %v2253
    %2734 = vmatprep.subr.mxu0 0.0
    %2735 = vmatpush1.msra.mxu0 %v2254
    %2736 = vmatprep.subr.mxu0 0.0
    %2737 = vmatpush1.msra.mxu0 %v2255
    %2738 = vmatprep.subr.mxu0 0.0
    %2739 = vmatpush1.msra.mxu0 0.0
    %2740 = vmatprep.subr.mxu0 0.0
    %2741 = vmatpush1.msra.mxu0 0.0
    %2742 = vmatprep.subr.mxu0 0.0
    %2743 = vmatpush1.msra.mxu0 0.0
    %2744 = vmatprep.subr.mxu0 0.0
    %2745 = vmatpush1.msra.mxu0 0.0
    %2746 = vmatprep.subr.mxu0 0.0
    %2747 = vmatpush1.msra.mxu0 0.0
    %2748 = vmatprep.subr.mxu0 0.0
    %2749 = vmatpush1.msra.mxu0 0.0
    %2750 = vmatprep.subr.mxu0 0.0
    %2751 = vmatpush1.msra.mxu0 0.0
    %2752 = vmatprep.subr.mxu0 0.0
    %2753 = vmatpush1.msra.mxu0 0.0
    %2754 = vmatprep.subr.mxu0 0.0
    %2755 = vmatpush1.msra.mxu0 0.0
    %2756 = vmatprep.subr.mxu0 0.0
    %2757 = vmatpush1.msra.mxu0 0.0
    %2758 = vmatprep.subr.mxu0 0.0
    %2759 = vmatpush1.msra.mxu0 0.0
    %2760 = vmatprep.subr.mxu0 0.0
    %2761 = vmatpush1.msra.mxu0 0.0
    %2762 = vmatprep.subr.mxu0 0.0
    %2763 = vmatpush1.msra.mxu0 0.0
    %2764 = vmatprep.subr.mxu0 0.0
    %2765 = vmatpush1.msra.mxu0 0.0
    %2766 = vmatprep.subr.mxu0 0.0
    %2767 = vmatpush1.msra.mxu0 0.0
    %2768 = vmatprep.subr.mxu0 0.0
    %2769 = vmatpush1.msra.mxu0 0.0
    %2770 = vmatprep.subr.mxu0 0.0
    %2771 = vmatpush1.msra.mxu0 0.0
    %2772 = vmatprep.subr.mxu0 0.0
    %2773 = vmatpush1.msra.mxu0 0.0
    %2774 = vmatprep.subr.mxu0 0.0
    %2775 = vmatpush1.msra.mxu0 0.0
    %2776 = vmatprep.subr.mxu0 0.0
    %2777 = vmatpush1.msra.mxu0 0.0
    %2778 = vmatprep.subr.mxu0 0.0
    %2779 = vmatpush1.msra.mxu0 0.0
    %2780 = vmatprep.subr.mxu0 0.0
    %2781 = vmatpush1.msra.mxu0 0.0
    %2782 = vmatprep.subr.mxu0 0.0
    %2783 = vmatpush1.msra.mxu0 0.0
    %2784 = vmatprep.subr.mxu0 0.0
    %2785 = vmatpush1.msra.mxu0 0.0
    %2786 = vmatprep.subr.mxu0 0.0
    %2787 = vmatpush1.msra.mxu0 0.0
    %2788 = vmatprep.subr.mxu0 0.0
    %2789 = vmatpush1.msra.mxu0 0.0
    %2790 = vmatprep.subr.mxu0 0.0
    %2791 = vmatpush1.msra.mxu0 0.0
    %2792 = vmatprep.subr.mxu0 0.0
    %2793 = vmatpush1.msra.mxu0 0.0
    %2794 = vmatprep.mubr.f32.mxu0 0.0
    %2795 = vmatmul.mubr.f32.gmra.mrb[0].mxu0 %v2728
    %v2796 = vpop.f32.mrb[0].mxu0
    %v2797 = vadd.f32 0.0, %v2796
    %v2798 = vpop.f32.mrb[0].mxu0
    %2799 = vdwg.mxu0
    %v2801 = vrot.slane %v2797, 4
    %v2803 = vadd.f32 %v2242, %v2801
    %v2804 = vxor.u32 %v2803, 2147483648
    %v2805 = vmul.f32 %v2804, 1.442695
    %v2806 = vpow.pop %v2805
    %v2807 = vadd.f32 %v2806, 1.0
    %v2808 = vrcp.pop %v2807
    %v2809 = vmul.f32 1.0, %v2808
    %v2810 = vadd.f32 %v2797, %v2345
    %v2812 = vrot.slane %v2810, 4
    %2813 = vrot.lane.b32.xlu0 %v2812, 64
    %v2814 = vpop.permute.xlu0 %2813
    %v2816 = vmul.f32 %v2809, %v2814
    %2818 = vrot.lane.b32.xlu0 %v2816, 64
    %v2819 = vpop.permute.xlu0 %2818
    %v2821 = vadd.f32 %v2242, %v2819
    %v2822 = vtanh.pop %v2821
    %v2823 = vsub.f32 1.0, %v2809
    %2825 = vrot.lane.b32.xlu0 %v2822, 96
    %v2826 = vpop.permute.xlu0 %2825
    %v2828 = vmul.f32 %v2823, %v2826
    %v2829 = vrot.slane %v2599, 6
    %v2831 = vmul.f32 %v2809, %v2829
    %v2832 = vadd.f32 %v2828, %v2831
    %2834 = vrot.lane.b32.xlu0 %v2832, 96
    %v2835 = vpop.permute.xlu0 %2834
    %2837 = vst.msk [vmem:[#allocation3] sm:$0x30] %vm864, %v2835
    %v2838 = vrot.slane %v2719, 4
    %v2839 = vsel %vm281, %v2838, 0
    %2841 = vmatprep.subr.mxu0 0.0
    %2842 = vmatpush1.msra.mxu0 %v2256
    %2843 = vmatprep.subr.mxu0 0.0
    %2844 = vmatpush1.msra.mxu0 %v2257
    %2845 = vmatprep.subr.mxu0 0.0
    %2846 = vmatpush1.msra.mxu0 %v2258
    %2847 = vmatprep.subr.mxu0 0.0
    %2848 = vmatpush1.msra.mxu0 %v2259
    %2849 = vmatprep.subr.mxu0 0.0
    %2850 = vmatpush1.msra.mxu0 0.0
    %2851 = vmatprep.subr.mxu0 0.0
    %2852 = vmatpush1.msra.mxu0 0.0
    %2853 = vmatprep.subr.mxu0 0.0
    %2854 = vmatpush1.msra.mxu0 0.0
    %2855 = vmatprep.subr.mxu0 0.0
    %2856 = vmatpush1.msra.mxu0 0.0
    %2857 = vmatprep.subr.mxu0 0.0
    %2858 = vmatpush1.msra.mxu0 0.0
    %2859 = vmatprep.subr.mxu0 0.0
    %2860 = vmatpush1.msra.mxu0 0.0
    %2861 = vmatprep.subr.mxu0 0.0
    %2862 = vmatpush1.msra.mxu0 0.0
    %2863 = vmatprep.subr.mxu0 0.0
    %2864 = vmatpush1.msra.mxu0 0.0
    %2865 = vmatprep.subr.mxu0 0.0
    %2866 = vmatpush1.msra.mxu0 0.0
    %2867 = vmatprep.subr.mxu0 0.0
    %2868 = vmatpush1.msra.mxu0 0.0
    %2869 = vmatprep.subr.mxu0 0.0
    %2870 = vmatpush1.msra.mxu0 0.0
    %2871 = vmatprep.subr.mxu0 0.0
    %2872 = vmatpush1.msra.mxu0 0.0
    %2873 = vmatprep.subr.mxu0 0.0
    %2874 = vmatpush1.msra.mxu0 0.0
    %2875 = vmatprep.subr.mxu0 0.0
    %2876 = vmatpush1.msra.mxu0 0.0
    %2877 = vmatprep.subr.mxu0 0.0
    %2878 = vmatpush1.msra.mxu0 0.0
    %2879 = vmatprep.subr.mxu0 0.0
    %2880 = vmatpush1.msra.mxu0 0.0
    %2881 = vmatprep.subr.mxu0 0.0
    %2882 = vmatpush1.msra.mxu0 0.0
    %2883 = vmatprep.subr.mxu0 0.0
    %2884 = vmatpush1.msra.mxu0 0.0
    %2885 = vmatprep.subr.mxu0 0.0
    %2886 = vmatpush1.msra.mxu0 0.0
    %2887 = vmatprep.subr.mxu0 0.0
    %2888 = vmatpush1.msra.mxu0 0.0
    %2889 = vmatprep.subr.mxu0 0.0
    %2890 = vmatpush1.msra.mxu0 0.0
    %2891 = vmatprep.subr.mxu0 0.0
    %2892 = vmatpush1.msra.mxu0 0.0
    %2893 = vmatprep.subr.mxu0 0.0
    %2894 = vmatpush1.msra.mxu0 0.0
    %2895 = vmatprep.subr.mxu0 0.0
    %2896 = vmatpush1.msra.mxu0 0.0
    %2897 = vmatprep.subr.mxu0 0.0
    %2898 = vmatpush1.msra.mxu0 0.0
    %2899 = vmatprep.subr.mxu0 0.0
    %2900 = vmatpush1.msra.mxu0 0.0
    %2901 = vmatprep.subr.mxu0 0.0
    %2902 = vmatpush1.msra.mxu0 0.0
    %2903 = vmatprep.subr.mxu0 0.0
    %2904 = vmatpush1.msra.mxu0 0.0
    %2905 = vmatprep.mubr.f32.mxu0 0.0
    %2906 = vmatmul.mubr.f32.gmra.mrb[0].mxu0 %v2839
    %v2907 = vpop.f32.mrb[0].mxu0
    %v2908 = vadd.f32 0.0, %v2907
    %v2909 = vpop.f32.mrb[0].mxu0
    %2910 = vdwg.mxu0
    %v2912 = vrot.slane %v2908, 6
    %2913 = vrot.lane.b32.xlu0 %v2912, 96
    %v2914 = vpop.permute.xlu0 %2913
    %v2916 = vadd.f32 %v2248, %v2914
    %v2917 = vxor.u32 %v2916, 2147483648
    %v2918 = vmul.f32 %v2917, 1.442695
    %v2919 = vpow.pop %v2918
    %v2920 = vadd.f32 %v2919, 1.0
    %v2921 = vrcp.pop %v2920
    %v2922 = vmul.f32 1.0, %v2921
    %v2923 = vadd.f32 %v2250, %v2914
    %v2924 = vxor.u32 %v2923, 2147483648
    %v2925 = vmul.f32 %v2924, 1.442695
    %v2926 = vpow.pop %v2925
    %v2927 = vadd.f32 %v2926, 1.0
    %v2928 = vrcp.pop %v2927
    %v2929 = vmul.f32 1.0, %v2928
    %v2930 = vadd.f32 %v2908, %v2467
    %v2932 = vrot.slane %v2930, 6
    %2933 = vrot.lane.b32.xlu0 %v2932, 32
    %v2934 = vpop.permute.xlu0 %2933
    %v2936 = vmul.f32 %v2922, %v2934
    %2938 = vrot.lane.b32.xlu0 %v2936, 64
    %v2939 = vpop.permute.xlu0 %2938
    %v2941 = vadd.f32 %v2250, %v2939
    %v2942 = vtanh.pop %v2941
    %v2943 = vsub.f32 1.0, %v2929
    %2945 = vrot.lane.b32.xlu0 %v2942, 96
    %v2946 = vpop.permute.xlu0 %2945
    %v2948 = vmul.f32 %v2943, %v2946
    %v2949 = vrot.slane %v2719, 2
    %v2951 = vmul.f32 %v2929, %v2949
    %v2952 = vadd.f32 %v2948, %v2951
    %2954 = vrot.lane.b32.xlu0 %v2952, 32
    %v2955 = vpop.permute.xlu0 %2954
    %2957 = vst.msk [vmem:[#allocation3 + $0x8] sm:$0xc] %vm985, %v2955
    %v2958 = vrot.slane %v2832, 4
    %2959 = vrot.lane.b32.xlu0 %v2958, 96
    %v2960 = vpop.permute.xlu0 %2959
    %v2961 = vsel %vm281, %v2960, 0
    %2963 = vmatprep.subr.mxu0 0.0
    %2964 = vmatpush1.msra.mxu0 %v2252
    %2965 = vmatprep.subr.mxu0 0.0
    %2966 = vmatpush1.msra.mxu0 %v2253
    %2967 = vmatprep.subr.mxu0 0.0
    %2968 = vmatpush1.msra.mxu0 %v2254
    %2969 = vmatprep.subr.mxu0 0.0
    %2970 = vmatpush1.msra.mxu0 %v2255
    %2971 = vmatprep.subr.mxu0 0.0
    %2972 = vmatpush1.msra.mxu0 0.0
    %2973 = vmatprep.subr.mxu0 0.0
    %2974 = vmatpush1.msra.mxu0 0.0
    %2975 = vmatprep.subr.mxu0 0.0
    %2976 = vmatpush1.msra.mxu0 0.0
    %2977 = vmatprep.subr.mxu0 0.0
    %2978 = vmatpush1.msra.mxu0 0.0
    %2979 = vmatprep.subr.mxu0 0.0
    %2980 = vmatpush1.msra.mxu0 0.0
    %2981 = vmatprep.subr.mxu0 0.0
    %2982 = vmatpush1.msra.mxu0 0.0
    %2983 = vmatprep.subr.mxu0 0.0
    %2984 = vmatpush1.msra.mxu0 0.0
    %2985 = vmatprep.subr.mxu0 0.0
    %2986 = vmatpush1.msra.mxu0 0.0
    %2987 = vmatprep.subr.mxu0 0.0
    %2988 = vmatpush1.msra.mxu0 0.0
    %2989 = vmatprep.subr.mxu0 0.0
    %2990 = vmatpush1.msra.mxu0 0.0
    %2991 = vmatprep.subr.mxu0 0.0
    %2992 = vmatpush1.msra.mxu0 0.0
    %2993 = vmatprep.subr.mxu0 0.0
    %2994 = vmatpush1.msra.mxu0 0.0
    %2995 = vmatprep.subr.mxu0 0.0
    %2996 = vmatpush1.msra.mxu0 0.0
    %2997 = vmatprep.subr.mxu0 0.0
    %2998 = vmatpush1.msra.mxu0 0.0
    %2999 = vmatprep.subr.mxu0 0.0
    %3000 = vmatpush1.msra.mxu0 0.0
    %3001 = vmatprep.subr.mxu0 0.0
    %3002 = vmatpush1.msra.mxu0 0.0
    %3003 = vmatprep.subr.mxu0 0.0
    %3004 = vmatpush1.msra.mxu0 0.0
    %3005 = vmatprep.subr.mxu0 0.0
    %3006 = vmatpush1.msra.mxu0 0.0
    %3007 = vmatprep.subr.mxu0 0.0
    %3008 = vmatpush1.msra.mxu0 0.0
    %3009 = vmatprep.subr.mxu0 0.0
    %3010 = vmatpush1.msra.mxu0 0.0
    %3011 = vmatprep.subr.mxu0 0.0
    %3012 = vmatpush1.msra.mxu0 0.0
    %3013 = vmatprep.subr.mxu0 0.0
    %3014 = vmatpush1.msra.mxu0 0.0
    %3015 = vmatprep.subr.mxu0 0.0
    %3016 = vmatpush1.msra.mxu0 0.0
    %3017 = vmatprep.subr.mxu0 0.0
    %3018 = vmatpush1.msra.mxu0 0.0
    %3019 = vmatprep.subr.mxu0 0.0
    %3020 = vmatpush1.msra.mxu0 0.0
    %3021 = vmatprep.subr.mxu0 0.0
    %3022 = vmatpush1.msra.mxu0 0.0
    %3023 = vmatprep.subr.mxu0 0.0
    %3024 = vmatpush1.msra.mxu0 0.0
    %3025 = vmatprep.subr.mxu0 0.0
    %3026 = vmatpush1.msra.mxu0 0.0
    %3027 = vmatprep.mubr.f32.mxu0 0.0
    %3028 = vmatmul.mubr.f32.gmra.mrb[0].mxu0 %v2961
    %v3029 = vpop.f32.mrb[0].mxu0
    %v3030 = vadd.f32 0.0, %v3029
    %v3031 = vpop.f32.mrb[0].mxu0
    %3032 = vdwg.mxu0
    %v3034 = vrot.slane %v3030, 2
    %v3036 = vadd.f32 %v2242, %v3034
    %v3037 = vxor.u32 %v3036, 2147483648
    %v3038 = vmul.f32 %v3037, 1.442695
    %v3039 = vpow.pop %v3038
    %v3040 = vadd.f32 %v3039, 1.0
    %v3041 = vrcp.pop %v3040
    %v3042 = vmul.f32 1.0, %v3041
    %v3043 = vadd.f32 %v3030, %v2345
    %v3045 = vrot.slane %v3043, 2
    %3046 = vrot.lane.b32.xlu0 %v3045, 64
    %v3047 = vpop.permute.xlu0 %3046
    %v3049 = vmul.f32 %v3042, %v3047
    %3051 = vrot.lane.b32.xlu0 %v3049, 64
    %v3052 = vpop.permute.xlu0 %3051
    %v3054 = vadd.f32 %v2242, %v3052
    %v3055 = vtanh.pop %v3054
    %v3056 = vsub.f32 1.0, %v3042
    %3058 = vrot.lane.b32.xlu0 %v3055, 96
    %v3059 = vpop.permute.xlu0 %3058
    %v3061 = vmul.f32 %v3056, %v3059
    %v3062 = vrot.slane %v2832, 6
    %v3064 = vmul.f32 %v3042, %v3062
    %v3065 = vadd.f32 %v3061, %v3064
    %3067 = vrot.lane.b32.xlu0 %v3065, 96
    %v3068 = vpop.permute.xlu0 %3067
    %3070 = vst.msk [vmem:[#allocation3] sm:$0xc0] %vm1099, %v3068
    %v3071 = vrot.slane %v2952, 2
    %v3072 = vsel %vm281, %v3071, 0
    %3074 = vmatprep.subr.mxu0 0.0
    %3075 = vmatpush1.msra.mxu0 %v2256
    %3076 = vmatprep.subr.mxu0 0.0
    %3077 = vmatpush1.msra.mxu0 %v2257
    %3078 = vmatprep.subr.mxu0 0.0
    %3079 = vmatpush1.msra.mxu0 %v2258
    %3080 = vmatprep.subr.mxu0 0.0
    %3081 = vmatpush1.msra.mxu0 %v2259
    %3082 = vmatprep.subr.mxu0 0.0
    %3083 = vmatpush1.msra.mxu0 0.0
    %3084 = vmatprep.subr.mxu0 0.0
    %3085 = vmatpush1.msra.mxu0 0.0
    %3086 = vmatprep.subr.mxu0 0.0
    %3087 = vmatpush1.msra.mxu0 0.0
    %3088 = vmatprep.subr.mxu0 0.0
    %3089 = vmatpush1.msra.mxu0 0.0
    %3090 = vmatprep.subr.mxu0 0.0
    %3091 = vmatpush1.msra.mxu0 0.0
    %3092 = vmatprep.subr.mxu0 0.0
    %3093 = vmatpush1.msra.mxu0 0.0
    %3094 = vmatprep.subr.mxu0 0.0
    %3095 = vmatpush1.msra.mxu0 0.0
    %3096 = vmatprep.subr.mxu0 0.0
    %3097 = vmatpush1.msra.mxu0 0.0
    %3098 = vmatprep.subr.mxu0 0.0
    %3099 = vmatpush1.msra.mxu0 0.0
    %3100 = vmatprep.subr.mxu0 0.0
    %3101 = vmatpush1.msra.mxu0 0.0
    %3102 = vmatprep.subr.mxu0 0.0
    %3103 = vmatpush1.msra.mxu0 0.0
    %3104 = vmatprep.subr.mxu0 0.0
    %3105 = vmatpush1.msra.mxu0 0.0
    %3106 = vmatprep.subr.mxu0 0.0
    %3107 = vmatpush1.msra.mxu0 0.0
    %3108 = vmatprep.subr.mxu0 0.0
    %3109 = vmatpush1.msra.mxu0 0.0
    %3110 = vmatprep.subr.mxu0 0.0
    %3111 = vmatpush1.msra.mxu0 0.0
    %3112 = vmatprep.subr.mxu0 0.0
    %3113 = vmatpush1.msra.mxu0 0.0
    %3114 = vmatprep.subr.mxu0 0.0
    %3115 = vmatpush1.msra.mxu0 0.0
    %3116 = vmatprep.subr.mxu0 0.0
    %3117 = vmatpush1.msra.mxu0 0.0
    %3118 = vmatprep.subr.mxu0 0.0
    %3119 = vmatpush1.msra.mxu0 0.0
    %3120 = vmatprep.subr.mxu0 0.0
    %3121 = vmatpush1.msra.mxu0 0.0
    %3122 = vmatprep.subr.mxu0 0.0
    %3123 = vmatpush1.msra.mxu0 0.0
    %3124 = vmatprep.subr.mxu0 0.0
    %3125 = vmatpush1.msra.mxu0 0.0
    %3126 = vmatprep.subr.mxu0 0.0
    %3127 = vmatpush1.msra.mxu0 0.0
    %3128 = vmatprep.subr.mxu0 0.0
    %3129 = vmatpush1.msra.mxu0 0.0
    %3130 = vmatprep.subr.mxu0 0.0
    %3131 = vmatpush1.msra.mxu0 0.0
    %3132 = vmatprep.subr.mxu0 0.0
    %3133 = vmatpush1.msra.mxu0 0.0
    %3134 = vmatprep.subr.mxu0 0.0
    %3135 = vmatpush1.msra.mxu0 0.0
    %3136 = vmatprep.subr.mxu0 0.0
    %3137 = vmatpush1.msra.mxu0 0.0
    %3138 = vmatprep.mubr.f32.mxu0 0.0
    %3139 = vmatmul.mubr.f32.gmra.mrb[0].mxu0 %v3072
    %v3140 = vpop.f32.mrb[0].mxu0
    %v3141 = vadd.f32 0.0, %v3140
    %v3142 = vpop.f32.mrb[0].mxu0
    %3143 = vdwg.mxu0
    %3145 = vrot.lane.b32.xlu0 %v3141, 96
    %v3146 = vpop.permute.xlu0 %3145
    %v3148 = vadd.f32 %v2248, %v3146
    %v3149 = vxor.u32 %v3148, 2147483648
    %v3150 = vmul.f32 %v3149, 1.442695
    %v3151 = vpow.pop %v3150
    %v3152 = vadd.f32 %v3151, 1.0
    %v3153 = vrcp.pop %v3152
    %v3154 = vmul.f32 1.0, %v3153
    %v3155 = vadd.f32 %v2250, %v3146
    %v3156 = vxor.u32 %v3155, 2147483648
    %v3157 = vmul.f32 %v3156, 1.442695
    %v3158 = vpow.pop %v3157
    %v3159 = vadd.f32 %v3158, 1.0
    %v3160 = vrcp.pop %v3159
    %v3161 = vmul.f32 1.0, %v3160
    %v3162 = vadd.f32 %v3141, %v2467
    %3164 = vrot.lane.b32.xlu0 %v3162, 32
    %v3165 = vpop.permute.xlu0 %3164
    %v3167 = vmul.f32 %v3154, %v3165
    %3169 = vrot.lane.b32.xlu0 %v3167, 64
    %v3170 = vpop.permute.xlu0 %3169
    %v3172 = vadd.f32 %v2250, %v3170
    %v3173 = vtanh.pop %v3172
    %v3174 = vsub.f32 1.0, %v3161
    %3176 = vrot.lane.b32.xlu0 %v3173, 96
    %v3177 = vpop.permute.xlu0 %3176
    %v3179 = vmul.f32 %v3174, %v3177
    %v3181 = vmul.f32 %v3161, %v3071
    %v3182 = vadd.f32 %v3179, %v3181
    %3184 = vrot.lane.b32.xlu0 %v3182, 32
    %v3185 = vpop.permute.xlu0 %3184
    %3187 = vst.msk [vmem:[#allocation3 + $0x8] sm:$0x3] %vm1217, %v3185
    %v3188 = vrot.slane %v3065, 6
    %3189 = vrot.lane.b32.xlu0 %v3188, 96
    %v3190 = vpop.permute.xlu0 %3189
    %v3191 = vsel %vm281, %v3190, 0
    %3193 = vmatprep.subr.mxu0 0.0
    %3194 = vmatpush1.msra.mxu0 %v2252
    %3195 = vmatprep.subr.mxu0 0.0
    %3196 = vmatpush1.msra.mxu0 %v2253
    %3197 = vmatprep.subr.mxu0 0.0
    %3198 = vmatpush1.msra.mxu0 %v2254
    %3199 = vmatprep.subr.mxu0 0.0
    %3200 = vmatpush1.msra.mxu0 %v2255
    %3201 = vmatprep.subr.mxu0 0.0
    %3202 = vmatpush1.msra.mxu0 0.0
    %3203 = vmatprep.subr.mxu0 0.0
    %3204 = vmatpush1.msra.mxu0 0.0
    %3205 = vmatprep.subr.mxu0 0.0
    %3206 = vmatpush1.msra.mxu0 0.0
    %3207 = vmatprep.subr.mxu0 0.0
    %3208 = vmatpush1.msra.mxu0 0.0
    %3209 = vmatprep.subr.mxu0 0.0
    %3210 = vmatpush1.msra.mxu0 0.0
    %3211 = vmatprep.subr.mxu0 0.0
    %3212 = vmatpush1.msra.mxu0 0.0
    %3213 = vmatprep.subr.mxu0 0.0
    %3214 = vmatpush1.msra.mxu0 0.0
    %3215 = vmatprep.subr.mxu0 0.0
    %3216 = vmatpush1.msra.mxu0 0.0
    %3217 = vmatprep.subr.mxu0 0.0
    %3218 = vmatpush1.msra.mxu0 0.0
    %3219 = vmatprep.subr.mxu0 0.0
    %3220 = vmatpush1.msra.mxu0 0.0
    %3221 = vmatprep.subr.mxu0 0.0
    %3222 = vmatpush1.msra.mxu0 0.0
    %3223 = vmatprep.subr.mxu0 0.0
    %3224 = vmatpush1.msra.mxu0 0.0
    %3225 = vmatprep.subr.mxu0 0.0
    %3226 = vmatpush1.msra.mxu0 0.0
    %3227 = vmatprep.subr.mxu0 0.0
    %3228 = vmatpush1.msra.mxu0 0.0
    %3229 = vmatprep.subr.mxu0 0.0
    %3230 = vmatpush1.msra.mxu0 0.0
    %3231 = vmatprep.subr.mxu0 0.0
    %3232 = vmatpush1.msra.mxu0 0.0
    %3233 = vmatprep.subr.mxu0 0.0
    %3234 = vmatpush1.msra.mxu0 0.0
    %3235 = vmatprep.subr.mxu0 0.0
    %3236 = vmatpush1.msra.mxu0 0.0
    %3237 = vmatprep.subr.mxu0 0.0
    %3238 = vmatpush1.msra.mxu0 0.0
    %3239 = vmatprep.subr.mxu0 0.0
    %3240 = vmatpush1.msra.mxu0 0.0
    %3241 = vmatprep.subr.mxu0 0.0
    %3242 = vmatpush1.msra.mxu0 0.0
    %3243 = vmatprep.subr.mxu0 0.0
    %3244 = vmatpush1.msra.mxu0 0.0
    %3245 = vmatprep.subr.mxu0 0.0
    %3246 = vmatpush1.msra.mxu0 0.0
    %3247 = vmatprep.subr.mxu0 0.0
    %3248 = vmatpush1.msra.mxu0 0.0
    %3249 = vmatprep.subr.mxu0 0.0
    %3250 = vmatpush1.msra.mxu0 0.0
    %3251 = vmatprep.subr.mxu0 0.0
    %3252 = vmatpush1.msra.mxu0 0.0
    %3253 = vmatprep.subr.mxu0 0.0
    %3254 = vmatpush1.msra.mxu0 0.0
    %3255 = vmatprep.subr.mxu0 0.0
    %3256 = vmatpush1.msra.mxu0 0.0
    %3257 = vmatprep.mubr.f32.mxu0 0.0
    %3258 = vmatmul.mubr.f32.gmra.mrb[0].mxu0 %v3191
    %v3259 = vpop.f32.mrb[0].mxu0
    %v3260 = vadd.f32 0.0, %v3259
    %v3261 = vpop.f32.mrb[0].mxu0
    %3262 = vdwg.mxu0
    %v3263 = vadd.f32 %v2248, %v3260
    %v3264 = vxor.u32 %v3263, 2147483648
    %v3265 = vmul.f32 %v3264, 1.442695
    %v3266 = vpow.pop %v3265
    %v3267 = vadd.f32 %v3266, 1.0
    %v3268 = vrcp.pop %v3267
    %v3269 = vmul.f32 1.0, %v3268
    %v3270 = vadd.f32 %v3260, %v2345
    %3272 = vrot.lane.b32.xlu0 %v3270, 64
    %v3273 = vpop.permute.xlu0 %3272
    %v3275 = vmul.f32 %v3269, %v3273
    %3277 = vrot.lane.b32.xlu0 %v3275, 64
    %v3278 = vpop.permute.xlu0 %3277
    %v3280 = vadd.f32 %v2248, %v3278
    %v3281 = vtanh.pop %v3280
    %v3282 = vsub.f32 1.0, %v3269
    %3284 = vrot.lane.b32.xlu0 %v3281, 96
    %v3285 = vpop.permute.xlu0 %3284
    %v3287 = vmul.f32 %v3282, %v3285
    %v3289 = vmul.f32 %v3269, %v3188
    %v3290 = vadd.f32 %v3287, %v3289
    %3292 = vrot.lane.b32.xlu0 %v3290, 96
    %v3293 = vpop.permute.xlu0 %3292
    %3295 = vst.msk [vmem:[#allocation3 + $0x8] sm:$0x3] %vm394, %v3293
    %v3296 = vsel %vm281, %v3182, 0
    %3298 = vmatprep.subr.mxu0 0.0
    %3299 = vmatpush1.msra.mxu0 %v2256
    %3300 = vmatprep.subr.mxu0 0.0
    %3301 = vmatpush1.msra.mxu0 %v2257
    %3302 = vmatprep.subr.mxu0 0.0
    %3303 = vmatpush1.msra.mxu0 %v2258
    %3304 = vmatprep.subr.mxu0 0.0
    %3305 = vmatpush1.msra.mxu0 %v2259
    %3306 = vmatprep.subr.mxu0 0.0
    %3307 = vmatpush1.msra.mxu0 0.0
    %3308 = vmatprep.subr.mxu0 0.0
    %3309 = vmatpush1.msra.mxu0 0.0
    %3310 = vmatprep.subr.mxu0 0.0
    %3311 = vmatpush1.msra.mxu0 0.0
    %3312 = vmatprep.subr.mxu0 0.0
    %3313 = vmatpush1.msra.mxu0 0.0
    %3314 = vmatprep.subr.mxu0 0.0
    %3315 = vmatpush1.msra.mxu0 0.0
    %3316 = vmatprep.subr.mxu0 0.0
    %3317 = vmatpush1.msra.mxu0 0.0
    %3318 = vmatprep.subr.mxu0 0.0
    %3319 = vmatpush1.msra.mxu0 0.0
    %3320 = vmatprep.subr.mxu0 0.0
    %3321 = vmatpush1.msra.mxu0 0.0
    %3322 = vmatprep.subr.mxu0 0.0
    %3323 = vmatpush1.msra.mxu0 0.0
    %3324 = vmatprep.subr.mxu0 0.0
    %3325 = vmatpush1.msra.mxu0 0.0
    %3326 = vmatprep.subr.mxu0 0.0
    %3327 = vmatpush1.msra.mxu0 0.0
    %3328 = vmatprep.subr.mxu0 0.0
    %3329 = vmatpush1.msra.mxu0 0.0
    %3330 = vmatprep.subr.mxu0 0.0
    %3331 = vmatpush1.msra.mxu0 0.0
    %3332 = vmatprep.subr.mxu0 0.0
    %3333 = vmatpush1.msra.mxu0 0.0
    %3334 = vmatprep.subr.mxu0 0.0
    %3335 = vmatpush1.msra.mxu0 0.0
    %3336 = vmatprep.subr.mxu0 0.0
    %3337 = vmatpush1.msra.mxu0 0.0
    %3338 = vmatprep.subr.mxu0 0.0
    %3339 = vmatpush1.msra.mxu0 0.0
    %3340 = vmatprep.subr.mxu0 0.0
    %3341 = vmatpush1.msra.mxu0 0.0
    %3342 = vmatprep.subr.mxu0 0.0
    %3343 = vmatpush1.msra.mxu0 0.0
    %3344 = vmatprep.subr.mxu0 0.0
    %3345 = vmatpush1.msra.mxu0 0.0
    %3346 = vmatprep.subr.mxu0 0.0
    %3347 = vmatpush1.msra.mxu0 0.0
    %3348 = vmatprep.subr.mxu0 0.0
    %3349 = vmatpush1.msra.mxu0 0.0
    %3350 = vmatprep.subr.mxu0 0.0
    %3351 = vmatpush1.msra.mxu0 0.0
    %3352 = vmatprep.subr.mxu0 0.0
    %3353 = vmatpush1.msra.mxu0 0.0
    %3354 = vmatprep.subr.mxu0 0.0
    %3355 = vmatpush1.msra.mxu0 0.0
    %3356 = vmatprep.subr.mxu0 0.0
    %3357 = vmatpush1.msra.mxu0 0.0
    %3358 = vmatprep.subr.mxu0 0.0
    %3359 = vmatpush1.msra.mxu0 0.0
    %3360 = vmatprep.subr.mxu0 0.0
    %3361 = vmatpush1.msra.mxu0 0.0
    %3362 = vmatprep.mubr.f32.mxu0 0.0
    %3363 = vmatmul.mubr.f32.gmra.mrb[0].mxu0 %v3296
    %v3364 = vpop.f32.mrb[0].mxu0
    %v3365 = vadd.f32 0.0, %v3364
    %v3366 = vpop.f32.mrb[0].mxu0
    %3367 = vdwg.mxu0
    %v3369 = vrot.slane %v3365, 2
    %3370 = vrot.lane.b32.xlu0 %v3369, 96
    %v3371 = vpop.permute.xlu0 %3370
    %v3373 = vadd.f32 %v2242, %v3371
    %v3374 = vxor.u32 %v3373, 2147483648
    %v3375 = vmul.f32 %v3374, 1.442695
    %v3376 = vpow.pop %v3375
    %v3377 = vadd.f32 %v3376, 1.0
    %v3378 = vrcp.pop %v3377
    %v3379 = vmul.f32 1.0, %v3378
    %v3380 = vadd.f32 %v2244, %v3371
    %v3381 = vxor.u32 %v3380, 2147483648
    %v3382 = vmul.f32 %v3381, 1.442695
    %v3383 = vpow.pop %v3382
    %v3384 = vadd.f32 %v3383, 1.0
    %v3385 = vrcp.pop %v3384
    %v3386 = vmul.f32 1.0, %v3385
    %v3387 = vadd.f32 %v3365, %v2467
    %v3389 = vrot.slane %v3387, 2
    %3390 = vrot.lane.b32.xlu0 %v3389, 32
    %v3391 = vpop.permute.xlu0 %3390
    %v3393 = vmul.f32 %v3379, %v3391
    %3395 = vrot.lane.b32.xlu0 %v3393, 64
    %v3396 = vpop.permute.xlu0 %3395
    %v3398 = vadd.f32 %v2244, %v3396
    %v3399 = vtanh.pop %v3398
    %v3400 = vsub.f32 1.0, %v3386
    %3402 = vrot.lane.b32.xlu0 %v3399, 96
    %v3403 = vpop.permute.xlu0 %3402
    %v3405 = vmul.f32 %v3400, %v3403
    %v3406 = vrot.slane %v3182, 2
    %v3408 = vmul.f32 %v3386, %v3406
    %v3409 = vadd.f32 %v3405, %v3408
    %3411 = vrot.lane.b32.xlu0 %v3409, 32
    %v3412 = vpop.permute.xlu0 %3411
    %3414 = vst.msk [vmem:[#allocation3] sm:$0xc0] %vm518, %v3412
    %v3415 = vsel %vm281, %v3293, 0
    %3417 = vmatprep.subr.mxu0 0.0
    %3418 = vmatpush1.msra.mxu0 %v2252
    %3419 = vmatprep.subr.mxu0 0.0
    %3420 = vmatpush1.msra.mxu0 %v2253
    %3421 = vmatprep.subr.mxu0 0.0
    %3422 = vmatpush1.msra.mxu0 %v2254
    %3423 = vmatprep.subr.mxu0 0.0
    %3424 = vmatpush1.msra.mxu0 %v2255
    %3425 = vmatprep.subr.mxu0 0.0
    %3426 = vmatpush1.msra.mxu0 0.0
    %3427 = vmatprep.subr.mxu0 0.0
    %3428 = vmatpush1.msra.mxu0 0.0
    %3429 = vmatprep.subr.mxu0 0.0
    %3430 = vmatpush1.msra.mxu0 0.0
    %3431 = vmatprep.subr.mxu0 0.0
    %3432 = vmatpush1.msra.mxu0 0.0
    %3433 = vmatprep.subr.mxu0 0.0
    %3434 = vmatpush1.msra.mxu0 0.0
    %3435 = vmatprep.subr.mxu0 0.0
    %3436 = vmatpush1.msra.mxu0 0.0
    %3437 = vmatprep.subr.mxu0 0.0
    %3438 = vmatpush1.msra.mxu0 0.0
    %3439 = vmatprep.subr.mxu0 0.0
    %3440 = vmatpush1.msra.mxu0 0.0
    %3441 = vmatprep.subr.mxu0 0.0
    %3442 = vmatpush1.msra.mxu0 0.0
    %3443 = vmatprep.subr.mxu0 0.0
    %3444 = vmatpush1.msra.mxu0 0.0
    %3445 = vmatprep.subr.mxu0 0.0
    %3446 = vmatpush1.msra.mxu0 0.0
    %3447 = vmatprep.subr.mxu0 0.0
    %3448 = vmatpush1.msra.mxu0 0.0
    %3449 = vmatprep.subr.mxu0 0.0
    %3450 = vmatpush1.msra.mxu0 0.0
    %3451 = vmatprep.subr.mxu0 0.0
    %3452 = vmatpush1.msra.mxu0 0.0
    %3453 = vmatprep.subr.mxu0 0.0
    %3454 = vmatpush1.msra.mxu0 0.0
    %3455 = vmatprep.subr.mxu0 0.0
    %3456 = vmatpush1.msra.mxu0 0.0
    %3457 = vmatprep.subr.mxu0 0.0
    %3458 = vmatpush1.msra.mxu0 0.0
    %3459 = vmatprep.subr.mxu0 0.0
    %3460 = vmatpush1.msra.mxu0 0.0
    %3461 = vmatprep.subr.mxu0 0.0
    %3462 = vmatpush1.msra.mxu0 0.0
    %3463 = vmatprep.subr.mxu0 0.0
    %3464 = vmatpush1.msra.mxu0 0.0
    %3465 = vmatprep.subr.mxu0 0.0
    %3466 = vmatpush1.msra.mxu0 0.0
    %3467 = vmatprep.subr.mxu0 0.0
    %3468 = vmatpush1.msra.mxu0 0.0
    %3469 = vmatprep.subr.mxu0 0.0
    %3470 = vmatpush1.msra.mxu0 0.0
    %3471 = vmatprep.subr.mxu0 0.0
    %3472 = vmatpush1.msra.mxu0 0.0
    %3473 = vmatprep.subr.mxu0 0.0
    %3474 = vmatpush1.msra.mxu0 0.0
    %3475 = vmatprep.subr.mxu0 0.0
    %3476 = vmatpush1.msra.mxu0 0.0
    %3477 = vmatprep.subr.mxu0 0.0
    %3478 = vmatpush1.msra.mxu0 0.0
    %3479 = vmatprep.subr.mxu0 0.0
    %3480 = vmatpush1.msra.mxu0 0.0
    %3481 = vmatprep.mubr.f32.mxu0 0.0
    %3482 = vmatmul.mubr.f32.gmra.mrb[0].mxu0 %v3415
    %v3483 = vpop.f32.mrb[0].mxu0
    %v3484 = vadd.f32 0.0, %v3483
    %v3485 = vpop.f32.mrb[0].mxu0
    %3486 = vdwg.mxu0
    %v3488 = vrot.slane %v3484, 6
    %v3490 = vadd.f32 %v2248, %v3488
    %v3491 = vxor.u32 %v3490, 2147483648
    %v3492 = vmul.f32 %v3491, 1.442695
    %v3493 = vpow.pop %v3492
    %v3494 = vadd.f32 %v3493, 1.0
    %v3495 = vrcp.pop %v3494
    %v3496 = vmul.f32 1.0, %v3495
    %v3497 = vadd.f32 %v3484, %v2345
    %v3499 = vrot.slane %v3497, 6
    %3500 = vrot.lane.b32.xlu0 %v3499, 64
    %v3501 = vpop.permute.xlu0 %3500
    %v3503 = vmul.f32 %v3496, %v3501
    %3505 = vrot.lane.b32.xlu0 %v3503, 64
    %v3506 = vpop.permute.xlu0 %3505
    %v3508 = vadd.f32 %v2248, %v3506
    %v3509 = vtanh.pop %v3508
    %v3510 = vsub.f32 1.0, %v3496
    %3512 = vrot.lane.b32.xlu0 %v3509, 96
    %v3513 = vpop.permute.xlu0 %3512
    %v3515 = vmul.f32 %v3510, %v3513
    %v3516 = vrot.slane %v3290, 6
    %v3518 = vmul.f32 %v3496, %v3516
    %v3519 = vadd.f32 %v3515, %v3518
    %3521 = vrot.lane.b32.xlu0 %v3519, 96
    %v3522 = vpop.permute.xlu0 %3521
    %3524 = vst.msk [vmem:[#allocation3 + $0x8] sm:$0xc] %vm629, %v3522
    %v3525 = vrot.slane %v3409, 6
    %v3526 = vsel %vm281, %v3525, 0
    %3528 = vmatprep.subr.mxu0 0.0
    %3529 = vmatpush1.msra.mxu0 %v2256
    %3530 = vmatprep.subr.mxu0 0.0
    %3531 = vmatpush1.msra.mxu0 %v2257
    %3532 = vmatprep.subr.mxu0 0.0
    %3533 = vmatpush1.msra.mxu0 %v2258
    %3534 = vmatprep.subr.mxu0 0.0
    %3535 = vmatpush1.msra.mxu0 %v2259
    %3536 = vmatprep.subr.mxu0 0.0
    %3537 = vmatpush1.msra.mxu0 0.0
    %3538 = vmatprep.subr.mxu0 0.0
    %3539 = vmatpush1.msra.mxu0 0.0
    %3540 = vmatprep.subr.mxu0 0.0
    %3541 = vmatpush1.msra.mxu0 0.0
    %3542 = vmatprep.subr.mxu0 0.0
    %3543 = vmatpush1.msra.mxu0 0.0
    %3544 = vmatprep.subr.mxu0 0.0
    %3545 = vmatpush1.msra.mxu0 0.0
    %3546 = vmatprep.subr.mxu0 0.0
    %3547 = vmatpush1.msra.mxu0 0.0
    %3548 = vmatprep.subr.mxu0 0.0
    %3549 = vmatpush1.msra.mxu0 0.0
    %3550 = vmatprep.subr.mxu0 0.0
    %3551 = vmatpush1.msra.mxu0 0.0
    %3552 = vmatprep.subr.mxu0 0.0
    %3553 = vmatpush1.msra.mxu0 0.0
    %3554 = vmatprep.subr.mxu0 0.0
    %3555 = vmatpush1.msra.mxu0 0.0
    %3556 = vmatprep.subr.mxu0 0.0
    %3557 = vmatpush1.msra.mxu0 0.0
    %3558 = vmatprep.subr.mxu0 0.0
    %3559 = vmatpush1.msra.mxu0 0.0
    %3560 = vmatprep.subr.mxu0 0.0
    %3561 = vmatpush1.msra.mxu0 0.0
    %3562 = vmatprep.subr.mxu0 0.0
    %3563 = vmatpush1.msra.mxu0 0.0
    %3564 = vmatprep.subr.mxu0 0.0
    %3565 = vmatpush1.msra.mxu0 0.0
    %3566 = vmatprep.subr.mxu0 0.0
    %3567 = vmatpush1.msra.mxu0 0.0
    %3568 = vmatprep.subr.mxu0 0.0
    %3569 = vmatpush1.msra.mxu0 0.0
    %3570 = vmatprep.subr.mxu0 0.0
    %3571 = vmatpush1.msra.mxu0 0.0
    %3572 = vmatprep.subr.mxu0 0.0
    %3573 = vmatpush1.msra.mxu0 0.0
    %3574 = vmatprep.subr.mxu0 0.0
    %3575 = vmatpush1.msra.mxu0 0.0
    %3576 = vmatprep.subr.mxu0 0.0
    %3577 = vmatpush1.msra.mxu0 0.0
    %3578 = vmatprep.subr.mxu0 0.0
    %3579 = vmatpush1.msra.mxu0 0.0
    %3580 = vmatprep.subr.mxu0 0.0
    %3581 = vmatpush1.msra.mxu0 0.0
    %3582 = vmatprep.subr.mxu0 0.0
    %3583 = vmatpush1.msra.mxu0 0.0
    %3584 = vmatprep.subr.mxu0 0.0
    %3585 = vmatpush1.msra.mxu0 0.0
    %3586 = vmatprep.subr.mxu0 0.0
    %3587 = vmatpush1.msra.mxu0 0.0
    %3588 = vmatprep.subr.mxu0 0.0
    %3589 = vmatpush1.msra.mxu0 0.0
    %3590 = vmatprep.subr.mxu0 0.0
    %3591 = vmatpush1.msra.mxu0 0.0
    %3592 = vmatprep.mubr.f32.mxu0 0.0
    %3593 = vmatmul.mubr.f32.gmra.mrb[0].mxu0 %v3526
    %v3594 = vpop.f32.mrb[0].mxu0
    %v3595 = vadd.f32 0.0, %v3594
    %v3596 = vpop.f32.mrb[0].mxu0
    %3597 = vdwg.mxu0
    %v3599 = vrot.slane %v3595, 4
    %3600 = vrot.lane.b32.xlu0 %v3599, 96
    %v3601 = vpop.permute.xlu0 %3600
    %v3603 = vadd.f32 %v2242, %v3601
    %v3604 = vxor.u32 %v3603, 2147483648
    %v3605 = vmul.f32 %v3604, 1.442695
    %v3606 = vpow.pop %v3605
    %v3607 = vadd.f32 %v3606, 1.0
    %v3608 = vrcp.pop %v3607
    %v3609 = vmul.f32 1.0, %v3608
    %v3610 = vadd.f32 %v2244, %v3601
    %v3611 = vxor.u32 %v3610, 2147483648
    %v3612 = vmul.f32 %v3611, 1.442695
    %v3613 = vpow.pop %v3612
    %v3614 = vadd.f32 %v3613, 1.0
    %v3615 = vrcp.pop %v3614
    %v3616 = vmul.f32 1.0, %v3615
    %v3617 = vadd.f32 %v3595, %v2467
    %v3619 = vrot.slane %v3617, 4
    %3620 = vrot.lane.b32.xlu0 %v3619, 32
    %v3621 = vpop.permute.xlu0 %3620
    %v3623 = vmul.f32 %v3609, %v3621
    %3625 = vrot.lane.b32.xlu0 %v3623, 64
    %v3626 = vpop.permute.xlu0 %3625
    %v3628 = vadd.f32 %v2244, %v3626
    %v3629 = vtanh.pop %v3628
    %v3630 = vsub.f32 1.0, %v3616
    %3632 = vrot.lane.b32.xlu0 %v3629, 96
    %v3633 = vpop.permute.xlu0 %3632
    %v3635 = vmul.f32 %v3630, %v3633
    %v3636 = vrot.slane %v3409, 2
    %v3638 = vmul.f32 %v3616, %v3636
    %v3639 = vadd.f32 %v3635, %v3638
    %3641 = vrot.lane.b32.xlu0 %v3639, 32
    %v3642 = vpop.permute.xlu0 %3641
    %3644 = vst.msk [vmem:[#allocation3] sm:$0x30] %vm750, %v3642
    %v3645 = vrot.slane %v3519, 2
    %3646 = vrot.lane.b32.xlu0 %v3645, 96
    %v3647 = vpop.permute.xlu0 %3646
    %v3648 = vsel %vm281, %v3647, 0
    %3650 = vmatprep.subr.mxu0 0.0
    %3651 = vmatpush1.msra.mxu0 %v2252
    %3652 = vmatprep.subr.mxu0 0.0
    %3653 = vmatpush1.msra.mxu0 %v2253
    %3654 = vmatprep.subr.mxu0 0.0
    %3655 = vmatpush1.msra.mxu0 %v2254
    %3656 = vmatprep.subr.mxu0 0.0
    %3657 = vmatpush1.msra.mxu0 %v2255
    %3658 = vmatprep.subr.mxu0 0.0
    %3659 = vmatpush1.msra.mxu0 0.0
    %3660 = vmatprep.subr.mxu0 0.0
    %3661 = vmatpush1.msra.mxu0 0.0
    %3662 = vmatprep.subr.mxu0 0.0
    %3663 = vmatpush1.msra.mxu0 0.0
    %3664 = vmatprep.subr.mxu0 0.0
    %3665 = vmatpush1.msra.mxu0 0.0
    %3666 = vmatprep.subr.mxu0 0.0
    %3667 = vmatpush1.msra.mxu0 0.0
    %3668 = vmatprep.subr.mxu0 0.0
    %3669 = vmatpush1.msra.mxu0 0.0
    %3670 = vmatprep.subr.mxu0 0.0
    %3671 = vmatpush1.msra.mxu0 0.0
    %3672 = vmatprep.subr.mxu0 0.0
    %3673 = vmatpush1.msra.mxu0 0.0
    %3674 = vmatprep.subr.mxu0 0.0
    %3675 = vmatpush1.msra.mxu0 0.0
    %3676 = vmatprep.subr.mxu0 0.0
    %3677 = vmatpush1.msra.mxu0 0.0
    %3678 = vmatprep.subr.mxu0 0.0
    %3679 = vmatpush1.msra.mxu0 0.0
    %3680 = vmatprep.subr.mxu0 0.0
    %3681 = vmatpush1.msra.mxu0 0.0
    %3682 = vmatprep.subr.mxu0 0.0
    %3683 = vmatpush1.msra.mxu0 0.0
    %3684 = vmatprep.subr.mxu0 0.0
    %3685 = vmatpush1.msra.mxu0 0.0
    %3686 = vmatprep.subr.mxu0 0.0
    %3687 = vmatpush1.msra.mxu0 0.0
    %3688 = vmatprep.subr.mxu0 0.0
    %3689 = vmatpush1.msra.mxu0 0.0
    %3690 = vmatprep.subr.mxu0 0.0
    %3691 = vmatpush1.msra.mxu0 0.0
    %3692 = vmatprep.subr.mxu0 0.0
    %3693 = vmatpush1.msra.mxu0 0.0
    %3694 = vmatprep.subr.mxu0 0.0
    %3695 = vmatpush1.msra.mxu0 0.0
    %3696 = vmatprep.subr.mxu0 0.0
    %3697 = vmatpush1.msra.mxu0 0.0
    %3698 = vmatprep.subr.mxu0 0.0
    %3699 = vmatpush1.msra.mxu0 0.0
    %3700 = vmatprep.subr.mxu0 0.0
    %3701 = vmatpush1.msra.mxu0 0.0
    %3702 = vmatprep.subr.mxu0 0.0
    %3703 = vmatpush1.msra.mxu0 0.0
    %3704 = vmatprep.subr.mxu0 0.0
    %3705 = vmatpush1.msra.mxu0 0.0
    %3706 = vmatprep.subr.mxu0 0.0
    %3707 = vmatpush1.msra.mxu0 0.0
    %3708 = vmatprep.subr.mxu0 0.0
    %3709 = vmatpush1.msra.mxu0 0.0
    %3710 = vmatprep.subr.mxu0 0.0
    %3711 = vmatpush1.msra.mxu0 0.0
    %3712 = vmatprep.subr.mxu0 0.0
    %3713 = vmatpush1.msra.mxu0 0.0
    %3714 = vmatprep.mubr.f32.mxu0 0.0
    %3715 = vmatmul.mubr.f32.gmra.mrb[0].mxu0 %v3648
    %v3716 = vpop.f32.mrb[0].mxu0
    %v3717 = vadd.f32 0.0, %v3716
    %v3718 = vpop.f32.mrb[0].mxu0
    %3719 = vdwg.mxu0
    %v3721 = vrot.slane %v3717, 4
    %v3723 = vadd.f32 %v2248, %v3721
    %v3724 = vxor.u32 %v3723, 2147483648
    %v3725 = vmul.f32 %v3724, 1.442695
    %v3726 = vpow.pop %v3725
    %v3727 = vadd.f32 %v3726, 1.0
    %v3728 = vrcp.pop %v3727
    %v3729 = vmul.f32 1.0, %v3728
    %v3730 = vadd.f32 %v3717, %v2345
    %v3732 = vrot.slane %v3730, 4
    %3733 = vrot.lane.b32.xlu0 %v3732, 64
    %v3734 = vpop.permute.xlu0 %3733
    %v3736 = vmul.f32 %v3729, %v3734
    %3738 = vrot.lane.b32.xlu0 %v3736, 64
    %v3739 = vpop.permute.xlu0 %3738
    %v3741 = vadd.f32 %v2248, %v3739
    %v3742 = vtanh.pop %v3741
    %v3743 = vsub.f32 1.0, %v3729
    %3745 = vrot.lane.b32.xlu0 %v3742, 96
    %v3746 = vpop.permute.xlu0 %3745
    %v3748 = vmul.f32 %v3743, %v3746
    %v3749 = vrot.slane %v3519, 6
    %v3751 = vmul.f32 %v3729, %v3749
    %v3752 = vadd.f32 %v3748, %v3751
    %3754 = vrot.lane.b32.xlu0 %v3752, 96
    %v3755 = vpop.permute.xlu0 %3754
    %3757 = vst.msk [vmem:[#allocation3 + $0x8] sm:$0x30] %vm864, %v3755
    %v3758 = vrot.slane %v3639, 4
    %v3759 = vsel %vm281, %v3758, 0
    %3761 = vmatprep.subr.mxu0 0.0
    %3762 = vmatpush1.msra.mxu0 %v2256
    %3763 = vmatprep.subr.mxu0 0.0
    %3764 = vmatpush1.msra.mxu0 %v2257
    %3765 = vmatprep.subr.mxu0 0.0
    %3766 = vmatpush1.msra.mxu0 %v2258
    %3767 = vmatprep.subr.mxu0 0.0
    %3768 = vmatpush1.msra.mxu0 %v2259
    %3769 = vmatprep.subr.mxu0 0.0
    %3770 = vmatpush1.msra.mxu0 0.0
    %3771 = vmatprep.subr.mxu0 0.0
    %3772 = vmatpush1.msra.mxu0 0.0
    %3773 = vmatprep.subr.mxu0 0.0
    %3774 = vmatpush1.msra.mxu0 0.0
    %3775 = vmatprep.subr.mxu0 0.0
    %3776 = vmatpush1.msra.mxu0 0.0
    %3777 = vmatprep.subr.mxu0 0.0
    %3778 = vmatpush1.msra.mxu0 0.0
    %3779 = vmatprep.subr.mxu0 0.0
    %3780 = vmatpush1.msra.mxu0 0.0
    %3781 = vmatprep.subr.mxu0 0.0
    %3782 = vmatpush1.msra.mxu0 0.0
    %3783 = vmatprep.subr.mxu0 0.0
    %3784 = vmatpush1.msra.mxu0 0.0
    %3785 = vmatprep.subr.mxu0 0.0
    %3786 = vmatpush1.msra.mxu0 0.0
    %3787 = vmatprep.subr.mxu0 0.0
    %3788 = vmatpush1.msra.mxu0 0.0
    %3789 = vmatprep.subr.mxu0 0.0
    %3790 = vmatpush1.msra.mxu0 0.0
    %3791 = vmatprep.subr.mxu0 0.0
    %3792 = vmatpush1.msra.mxu0 0.0
    %3793 = vmatprep.subr.mxu0 0.0
    %3794 = vmatpush1.msra.mxu0 0.0
    %3795 = vmatprep.subr.mxu0 0.0
    %3796 = vmatpush1.msra.mxu0 0.0
    %3797 = vmatprep.subr.mxu0 0.0
    %3798 = vmatpush1.msra.mxu0 0.0
    %3799 = vmatprep.subr.mxu0 0.0
    %3800 = vmatpush1.msra.mxu0 0.0
    %3801 = vmatprep.subr.mxu0 0.0
    %3802 = vmatpush1.msra.mxu0 0.0
    %3803 = vmatprep.subr.mxu0 0.0
    %3804 = vmatpush1.msra.mxu0 0.0
    %3805 = vmatprep.subr.mxu0 0.0
    %3806 = vmatpush1.msra.mxu0 0.0
    %3807 = vmatprep.subr.mxu0 0.0
    %3808 = vmatpush1.msra.mxu0 0.0
    %3809 = vmatprep.subr.mxu0 0.0
    %3810 = vmatpush1.msra.mxu0 0.0
    %3811 = vmatprep.subr.mxu0 0.0
    %3812 = vmatpush1.msra.mxu0 0.0
    %3813 = vmatprep.subr.mxu0 0.0
    %3814 = vmatpush1.msra.mxu0 0.0
    %3815 = vmatprep.subr.mxu0 0.0
    %3816 = vmatpush1.msra.mxu0 0.0
    %3817 = vmatprep.subr.mxu0 0.0
    %3818 = vmatpush1.msra.mxu0 0.0
    %3819 = vmatprep.subr.mxu0 0.0
    %3820 = vmatpush1.msra.mxu0 0.0
    %3821 = vmatprep.subr.mxu0 0.0
    %3822 = vmatpush1.msra.mxu0 0.0
    %3823 = vmatprep.subr.mxu0 0.0
    %3824 = vmatpush1.msra.mxu0 0.0
    %3825 = vmatprep.mubr.f32.mxu0 0.0
    %3826 = vmatmul.mubr.f32.gmra.mrb[0].mxu0 %v3759
    %v3827 = vpop.f32.mrb[0].mxu0
    %v3828 = vadd.f32 0.0, %v3827
    %v3829 = vpop.f32.mrb[0].mxu0
    %3830 = vdwg.mxu0
    %v3832 = vrot.slane %v3828, 6
    %3833 = vrot.lane.b32.xlu0 %v3832, 96
    %v3834 = vpop.permute.xlu0 %3833
    %v3836 = vadd.f32 %v2242, %v3834
    %v3837 = vxor.u32 %v3836, 2147483648
    %v3838 = vmul.f32 %v3837, 1.442695
    %v3839 = vpow.pop %v3838
    %v3840 = vadd.f32 %v3839, 1.0
    %v3841 = vrcp.pop %v3840
    %v3842 = vmul.f32 1.0, %v3841
    %v3843 = vadd.f32 %v2244, %v3834
    %v3844 = vxor.u32 %v3843, 2147483648
    %v3845 = vmul.f32 %v3844, 1.442695
    %v3846 = vpow.pop %v3845
    %v3847 = vadd.f32 %v3846, 1.0
    %v3848 = vrcp.pop %v3847
    %v3849 = vmul.f32 1.0, %v3848
    %v3850 = vadd.f32 %v3828, %v2467
    %v3852 = vrot.slane %v3850, 6
    %3853 = vrot.lane.b32.xlu0 %v3852, 32
    %v3854 = vpop.permute.xlu0 %3853
    %v3856 = vmul.f32 %v3842, %v3854
    %3858 = vrot.lane.b32.xlu0 %v3856, 64
    %v3859 = vpop.permute.xlu0 %3858
    %v3861 = vadd.f32 %v2244, %v3859
    %v3862 = vtanh.pop %v3861
    %v3863 = vsub.f32 1.0, %v3849
    %3865 = vrot.lane.b32.xlu0 %v3862, 96
    %v3866 = vpop.permute.xlu0 %3865
    %v3868 = vmul.f32 %v3863, %v3866
    %v3869 = vrot.slane %v3639, 2
    %v3871 = vmul.f32 %v3849, %v3869
    %v3872 = vadd.f32 %v3868, %v3871
    %3874 = vrot.lane.b32.xlu0 %v3872, 32
    %v3875 = vpop.permute.xlu0 %3874
    %3877 = vst.msk [vmem:[#allocation3] sm:$0xc] %vm985, %v3875
    %v3878 = vrot.slane %v3752, 4
    %3879 = vrot.lane.b32.xlu0 %v3878, 96
    %v3880 = vpop.permute.xlu0 %3879
    %v3881 = vsel %vm281, %v3880, 0
    %3883 = vmatprep.subr.mxu0 0.0
    %3884 = vmatpush1.msra.mxu0 %v2252
    %3885 = vmatprep.subr.mxu0 0.0
    %3886 = vmatpush1.msra.mxu0 %v2253
    %3887 = vmatprep.subr.mxu0 0.0
    %3888 = vmatpush1.msra.mxu0 %v2254
    %3889 = vmatprep.subr.mxu0 0.0
    %3890 = vmatpush1.msra.mxu0 %v2255
    %3891 = vmatprep.subr.mxu0 0.0
    %3892 = vmatpush1.msra.mxu0 0.0
    %3893 = vmatprep.subr.mxu0 0.0
    %3894 = vmatpush1.msra.mxu0 0.0
    %3895 = vmatprep.subr.mxu0 0.0
    %3896 = vmatpush1.msra.mxu0 0.0
    %3897 = vmatprep.subr.mxu0 0.0
    %3898 = vmatpush1.msra.mxu0 0.0
    %3899 = vmatprep.subr.mxu0 0.0
    %3900 = vmatpush1.msra.mxu0 0.0
    %3901 = vmatprep.subr.mxu0 0.0
    %3902 = vmatpush1.msra.mxu0 0.0
    %3903 = vmatprep.subr.mxu0 0.0
    %3904 = vmatpush1.msra.mxu0 0.0
    %3905 = vmatprep.subr.mxu0 0.0
    %3906 = vmatpush1.msra.mxu0 0.0
    %3907 = vmatprep.subr.mxu0 0.0
    %3908 = vmatpush1.msra.mxu0 0.0
    %3909 = vmatprep.subr.mxu0 0.0
    %3910 = vmatpush1.msra.mxu0 0.0
    %3911 = vmatprep.subr.mxu0 0.0
    %3912 = vmatpush1.msra.mxu0 0.0
    %3913 = vmatprep.subr.mxu0 0.0
    %3914 = vmatpush1.msra.mxu0 0.0
    %3915 = vmatprep.subr.mxu0 0.0
    %3916 = vmatpush1.msra.mxu0 0.0
    %3917 = vmatprep.subr.mxu0 0.0
    %3918 = vmatpush1.msra.mxu0 0.0
    %3919 = vmatprep.subr.mxu0 0.0
    %3920 = vmatpush1.msra.mxu0 0.0
    %3921 = vmatprep.subr.mxu0 0.0
    %3922 = vmatpush1.msra.mxu0 0.0
    %3923 = vmatprep.subr.mxu0 0.0
    %3924 = vmatpush1.msra.mxu0 0.0
    %3925 = vmatprep.subr.mxu0 0.0
    %3926 = vmatpush1.msra.mxu0 0.0
    %3927 = vmatprep.subr.mxu0 0.0
    %3928 = vmatpush1.msra.mxu0 0.0
    %3929 = vmatprep.subr.mxu0 0.0
    %3930 = vmatpush1.msra.mxu0 0.0
    %3931 = vmatprep.subr.mxu0 0.0
    %3932 = vmatpush1.msra.mxu0 0.0
    %3933 = vmatprep.subr.mxu0 0.0
    %3934 = vmatpush1.msra.mxu0 0.0
    %3935 = vmatprep.subr.mxu0 0.0
    %3936 = vmatpush1.msra.mxu0 0.0
    %3937 = vmatprep.subr.mxu0 0.0
    %3938 = vmatpush1.msra.mxu0 0.0
    %3939 = vmatprep.subr.mxu0 0.0
    %3940 = vmatpush1.msra.mxu0 0.0
    %3941 = vmatprep.subr.mxu0 0.0
    %3942 = vmatpush1.msra.mxu0 0.0
    %3943 = vmatprep.subr.mxu0 0.0
    %3944 = vmatpush1.msra.mxu0 0.0
    %3945 = vmatprep.subr.mxu0 0.0
    %3946 = vmatpush1.msra.mxu0 0.0
    %3947 = vmatprep.mubr.f32.mxu0 0.0
    %3948 = vmatmul.mubr.f32.gmra.mrb[0].mxu0 %v3881
    %v3949 = vpop.f32.mrb[0].mxu0
    %v3950 = vadd.f32 0.0, %v3949
    %v3951 = vpop.f32.mrb[0].mxu0
    %3952 = vdwg.mxu0
    %v3954 = vrot.slane %v3950, 2
    %v3956 = vadd.f32 %v2248, %v3954
    %v3957 = vxor.u32 %v3956, 2147483648
    %v3958 = vmul.f32 %v3957, 1.442695
    %v3959 = vpow.pop %v3958
    %v3960 = vadd.f32 %v3959, 1.0
    %v3961 = vrcp.pop %v3960
    %v3962 = vmul.f32 1.0, %v3961
    %v3963 = vadd.f32 %v3950, %v2345
    %v3965 = vrot.slane %v3963, 2
    %3966 = vrot.lane.b32.xlu0 %v3965, 64
    %v3967 = vpop.permute.xlu0 %3966
    %v3969 = vmul.f32 %v3962, %v3967
    %3971 = vrot.lane.b32.xlu0 %v3969, 64
    %v3972 = vpop.permute.xlu0 %3971
    %v3974 = vadd.f32 %v2248, %v3972
    %v3975 = vtanh.pop %v3974
    %v3976 = vsub.f32 1.0, %v3962
    %3978 = vrot.lane.b32.xlu0 %v3975, 96
    %v3979 = vpop.permute.xlu0 %3978
    %v3981 = vmul.f32 %v3976, %v3979
    %v3982 = vrot.slane %v3752, 6
    %v3984 = vmul.f32 %v3962, %v3982
    %v3985 = vadd.f32 %v3981, %v3984
    %3987 = vrot.lane.b32.xlu0 %v3985, 96
    %v3988 = vpop.permute.xlu0 %3987
    %3990 = vst.msk [vmem:[#allocation3 + $0x8] sm:$0xc0] %vm1099, %v3988
    %v3991 = vrot.slane %v3872, 2
    %v3992 = vsel %vm281, %v3991, 0
    %3994 = vmatprep.subr.mxu0 0.0
    %3995 = vmatpush1.msra.mxu0 %v2256
    %3996 = vmatprep.subr.mxu0 0.0
    %3997 = vmatpush1.msra.mxu0 %v2257
    %3998 = vmatprep.subr.mxu0 0.0
    %3999 = vmatpush1.msra.mxu0 %v2258
    %4000 = vmatprep.subr.mxu0 0.0
    %4001 = vmatpush1.msra.mxu0 %v2259
    %4002 = vmatprep.subr.mxu0 0.0
    %4003 = vmatpush1.msra.mxu0 0.0
    %4004 = vmatprep.subr.mxu0 0.0
    %4005 = vmatpush1.msra.mxu0 0.0
    %4006 = vmatprep.subr.mxu0 0.0
    %4007 = vmatpush1.msra.mxu0 0.0
    %4008 = vmatprep.subr.mxu0 0.0
    %4009 = vmatpush1.msra.mxu0 0.0
    %4010 = vmatprep.subr.mxu0 0.0
    %4011 = vmatpush1.msra.mxu0 0.0
    %4012 = vmatprep.subr.mxu0 0.0
    %4013 = vmatpush1.msra.mxu0 0.0
    %4014 = vmatprep.subr.mxu0 0.0
    %4015 = vmatpush1.msra.mxu0 0.0
    %4016 = vmatprep.subr.mxu0 0.0
    %4017 = vmatpush1.msra.mxu0 0.0
    %4018 = vmatprep.subr.mxu0 0.0
    %4019 = vmatpush1.msra.mxu0 0.0
    %4020 = vmatprep.subr.mxu0 0.0
    %4021 = vmatpush1.msra.mxu0 0.0
    %4022 = vmatprep.subr.mxu0 0.0
    %4023 = vmatpush1.msra.mxu0 0.0
    %4024 = vmatprep.subr.mxu0 0.0
    %4025 = vmatpush1.msra.mxu0 0.0
    %4026 = vmatprep.subr.mxu0 0.0
    %4027 = vmatpush1.msra.mxu0 0.0
    %4028 = vmatprep.subr.mxu0 0.0
    %4029 = vmatpush1.msra.mxu0 0.0
    %4030 = vmatprep.subr.mxu0 0.0
    %4031 = vmatpush1.msra.mxu0 0.0
    %4032 = vmatprep.subr.mxu0 0.0
    %4033 = vmatpush1.msra.mxu0 0.0
    %4034 = vmatprep.subr.mxu0 0.0
    %4035 = vmatpush1.msra.mxu0 0.0
    %4036 = vmatprep.subr.mxu0 0.0
    %4037 = vmatpush1.msra.mxu0 0.0
    %4038 = vmatprep.subr.mxu0 0.0
    %4039 = vmatpush1.msra.mxu0 0.0
    %4040 = vmatprep.subr.mxu0 0.0
    %4041 = vmatpush1.msra.mxu0 0.0
    %4042 = vmatprep.subr.mxu0 0.0
    %4043 = vmatpush1.msra.mxu0 0.0
    %4044 = vmatprep.subr.mxu0 0.0
    %4045 = vmatpush1.msra.mxu0 0.0
    %4046 = vmatprep.subr.mxu0 0.0
    %4047 = vmatpush1.msra.mxu0 0.0
    %4048 = vmatprep.subr.mxu0 0.0
    %4049 = vmatpush1.msra.mxu0 0.0
    %4050 = vmatprep.subr.mxu0 0.0
    %4051 = vmatpush1.msra.mxu0 0.0
    %4052 = vmatprep.subr.mxu0 0.0
    %4053 = vmatpush1.msra.mxu0 0.0
    %4054 = vmatprep.subr.mxu0 0.0
    %4055 = vmatpush1.msra.mxu0 0.0
    %4056 = vmatprep.subr.mxu0 0.0
    %4057 = vmatpush1.msra.mxu0 0.0
    %4058 = vmatprep.mubr.f32.mxu0 0.0
    %4059 = vmatmul.mubr.f32.gmra.mrb[0].mxu0 %v3992
    %v4060 = vpop.f32.mrb[0].mxu0
    %v4061 = vadd.f32 0.0, %v4060
    %v4062 = vpop.f32.mrb[0].mxu0
    %4063 = vdwg.mxu0
    %4065 = vrot.lane.b32.xlu0 %v4061, 96
    %v4066 = vpop.permute.xlu0 %4065
    %v4068 = vadd.f32 %v2242, %v4066
    %v4069 = vxor.u32 %v4068, 2147483648
    %v4070 = vmul.f32 %v4069, 1.442695
    %v4071 = vpow.pop %v4070
    %v4072 = vadd.f32 %v4071, 1.0
    %v4073 = vrcp.pop %v4072
    %v4074 = vmul.f32 1.0, %v4073
    %v4075 = vadd.f32 %v2244, %v4066
    %v4076 = vxor.u32 %v4075, 2147483648
    %v4077 = vmul.f32 %v4076, 1.442695
    %v4078 = vpow.pop %v4077
    %v4079 = vadd.f32 %v4078, 1.0
    %v4080 = vrcp.pop %v4079
    %v4081 = vmul.f32 1.0, %v4080
    %v4082 = vadd.f32 %v4061, %v2467
    %4084 = vrot.lane.b32.xlu0 %v4082, 32
    %v4085 = vpop.permute.xlu0 %4084
    %v4087 = vmul.f32 %v4074, %v4085
    %4089 = vrot.lane.b32.xlu0 %v4087, 64
    %v4090 = vpop.permute.xlu0 %4089
    %v4092 = vadd.f32 %v2244, %v4090
    %v4093 = vtanh.pop %v4092
    %v4094 = vsub.f32 1.0, %v4081
    %4096 = vrot.lane.b32.xlu0 %v4093, 96
    %v4097 = vpop.permute.xlu0 %4096
    %v4099 = vmul.f32 %v4094, %v4097
    %v4101 = vmul.f32 %v4081, %v3991
    %v4102 = vadd.f32 %v4099, %v4101
    %4104 = vrot.lane.b32.xlu0 %v4102, 32
    %v4105 = vpop.permute.xlu0 %4104
    %4107 = vst.msk [vmem:[#allocation3] sm:$0x3] %vm1217, %v4105
    %v4108 = vld [vmem:[#allocation3] sm:$0xff]
    %v4109 = vld [vmem:[#allocation3 + $0x8] sm:$0xff]
    %4112 = vrot.lane.b32.xlu0 %v4108, 96
    %v4113 = vpop.permute.xlu0 %4112
    %4114 = vrot.lane.b32.xlu0 %v4109, 96
    %v4115 = vpop.permute.xlu0 %4114
    %v4118 = vadd.f32 %v4108, %v4113
    %v4119 = vadd.f32 %v4109, %v4115
    %v4120 = vmax.f32 %v4118, 0.0
    %v4121 = vmax.f32 %v4119, 0.0
    %v4122 = vld [vmem:[#allocation14] sm:$0xff]
    %v4123 = vld [vmem:[#allocation14 + $0x8] sm:$0xff]
    %v4124 = vld [vmem:[#allocation14 + $0x10] sm:$0xff]
    %v4125 = vld [vmem:[#allocation14 + $0x18] sm:$0xff]
    %v4126 = vld [vmem:[%s14] sm:$0x1]
    %v4128 = vlaneseq
    %v4129 = vshrl.u32 %v4128, 7
    %v4130 = vsub.s32 0, %v4129
    %v4131 = vrot.slane %v4126, %v4130
    %v4134 = vsel %vm281, %v4120, 0
    %v4137 = vsel %vm281, %v4121, 0
    %4139 = vmatprep.subr.mxu0 0.0
    %4140 = vmatpush1.msra.mxu0 %v4122
    %4141 = vmatprep.subr.mxu0 0.0
    %4142 = vmatpush1.msra.mxu0 %v4123
    %4143 = vmatprep.subr.mxu0 0.0
    %4144 = vmatpush1.msra.mxu0 %v4124
    %4145 = vmatprep.subr.mxu0 0.0
    %4146 = vmatpush1.msra.mxu0 %v4125
    %4147 = vmatprep.subr.mxu0 0.0
    %4148 = vmatpush1.msra.mxu0 0.0
    %4149 = vmatprep.subr.mxu0 0.0
    %4150 = vmatpush1.msra.mxu0 0.0
    %4151 = vmatprep.subr.mxu0 0.0
    %4152 = vmatpush1.msra.mxu0 0.0
    %4153 = vmatprep.subr.mxu0 0.0
    %4154 = vmatpush1.msra.mxu0 0.0
    %4155 = vmatprep.subr.mxu0 0.0
    %4156 = vmatpush1.msra.mxu0 0.0
    %4157 = vmatprep.subr.mxu0 0.0
    %4158 = vmatpush1.msra.mxu0 0.0
    %4159 = vmatprep.subr.mxu0 0.0
    %4160 = vmatpush1.msra.mxu0 0.0
    %4161 = vmatprep.subr.mxu0 0.0
    %4162 = vmatpush1.msra.mxu0 0.0
    %4163 = vmatprep.subr.mxu0 0.0
    %4164 = vmatpush1.msra.mxu0 0.0
    %4165 = vmatprep.subr.mxu0 0.0
    %4166 = vmatpush1.msra.mxu0 0.0
    %4167 = vmatprep.subr.mxu0 0.0
    %4168 = vmatpush1.msra.mxu0 0.0
    %4169 = vmatprep.subr.mxu0 0.0
    %4170 = vmatpush1.msra.mxu0 0.0
    %4171 = vmatprep.subr.mxu0 0.0
    %4172 = vmatpush1.msra.mxu0 0.0
    %4173 = vmatprep.subr.mxu0 0.0
    %4174 = vmatpush1.msra.mxu0 0.0
    %4175 = vmatprep.subr.mxu0 0.0
    %4176 = vmatpush1.msra.mxu0 0.0
    %4177 = vmatprep.subr.mxu0 0.0
    %4178 = vmatpush1.msra.mxu0 0.0
    %4179 = vmatprep.subr.mxu0 0.0
    %4180 = vmatpush1.msra.mxu0 0.0
    %4181 = vmatprep.subr.mxu0 0.0
    %4182 = vmatpush1.msra.mxu0 0.0
    %4183 = vmatprep.subr.mxu0 0.0
    %4184 = vmatpush1.msra.mxu0 0.0
    %4185 = vmatprep.subr.mxu0 0.0
    %4186 = vmatpush1.msra.mxu0 0.0
    %4187 = vmatprep.subr.mxu0 0.0
    %4188 = vmatpush1.msra.mxu0 0.0
    %4189 = vmatprep.subr.mxu0 0.0
    %4190 = vmatpush1.msra.mxu0 0.0
    %4191 = vmatprep.subr.mxu0 0.0
    %4192 = vmatpush1.msra.mxu0 0.0
    %4193 = vmatprep.subr.mxu0 0.0
    %4194 = vmatpush1.msra.mxu0 0.0
    %4195 = vmatprep.subr.mxu0 0.0
    %4196 = vmatpush1.msra.mxu0 0.0
    %4197 = vmatprep.subr.mxu0 0.0
    %4198 = vmatpush1.msra.mxu0 0.0
    %4199 = vmatprep.subr.mxu0 0.0
    %4200 = vmatpush1.msra.mxu0 0.0
    %4201 = vmatprep.subr.mxu0 0.0
    %4202 = vmatpush1.msra.mxu0 0.0
    %4203 = vmatprep.mubr.f32.mxu0 0.0
    %4204 = vmatmul.mubr.f32.gmra.mrb[0].mxu0 %v4134
    %v4205 = vpop.f32.mrb[0].mxu0
    %v4206 = vadd.f32 %v4131, %v4205
    %v4207 = vpop.f32.mrb[0].mxu0
    %4208 = vmatprep.mubr.f32.mxu0 0.0
    %4209 = vmatmul.mubr.f32.gmra.mrb[0].mxu0 %v4137
    %v4210 = vpop.f32.mrb[0].mxu0
    %v4211 = vadd.f32 %v4131, %v4210
    %v4212 = vpop.f32.mrb[0].mxu0
    %4213 = vdwg.mxu0
    %v4214 = vmax.f32 %v4206, 0.0
    %v4215 = vmax.f32 %v4211, 0.0
    %v4216 = vld [vmem:[%s15] sm:$0xff]
    %v4217 = vld [vmem:[%s15 + $0x8] sm:$0xff]
    %v4218 = vld [vmem:[%s15 + $0x10] sm:$0xff]
    %v4219 = vld [vmem:[%s15 + $0x18] sm:$0xff]
    %v4220 = vld [vmem:[%s15 + $0x20] sm:$0xff]
    %v4221 = vld [vmem:[%s15 + $0x28] sm:$0xff]
    %v4222 = vld [vmem:[%s15 + $0x30] sm:$0xff]
    %v4223 = vld [vmem:[%s15 + $0x38] sm:$0xff]
    %v4224 = vld [vmem:[%s16] sm:$0x1]
    %v4226 = vlaneseq
    %v4227 = vshrl.u32 %v4226, 7
    %v4228 = vsub.s32 0, %v4227
    %v4229 = vrot.slane %v4224, %v4228
    %v4232 = vsel %vm187, %v4214, 0
    %v4235 = vsel %vm187, %v4215, 0
    %4237 = vmatprep.subr.mxu0 0.0
    %4238 = vmatpush1.msra.mxu0 %v4216
    %4239 = vmatprep.subr.mxu0 0.0
    %4240 = vmatpush1.msra.mxu0 %v4217
    %4241 = vmatprep.subr.mxu0 0.0
    %4242 = vmatpush1.msra.mxu0 %v4218
    %4243 = vmatprep.subr.mxu0 0.0
    %4244 = vmatpush1.msra.mxu0 %v4219
    %4245 = vmatprep.subr.mxu0 0.0
    %4246 = vmatpush1.msra.mxu0 %v4220
    %4247 = vmatprep.subr.mxu0 0.0
    %4248 = vmatpush1.msra.mxu0 %v4221
    %4249 = vmatprep.subr.mxu0 0.0
    %4250 = vmatpush1.msra.mxu0 %v4222
    %4251 = vmatprep.subr.mxu0 0.0
    %4252 = vmatpush1.msra.mxu0 %v4223
    %4253 = vmatprep.subr.mxu0 0.0
    %4254 = vmatpush1.msra.mxu0 0.0
    %4255 = vmatprep.subr.mxu0 0.0
    %4256 = vmatpush1.msra.mxu0 0.0
    %4257 = vmatprep.subr.mxu0 0.0
    %4258 = vmatpush1.msra.mxu0 0.0
    %4259 = vmatprep.subr.mxu0 0.0
    %4260 = vmatpush1.msra.mxu0 0.0
    %4261 = vmatprep.subr.mxu0 0.0
    %4262 = vmatpush1.msra.mxu0 0.0
    %4263 = vmatprep.subr.mxu0 0.0
    %4264 = vmatpush1.msra.mxu0 0.0
    %4265 = vmatprep.subr.mxu0 0.0
    %4266 = vmatpush1.msra.mxu0 0.0
    %4267 = vmatprep.subr.mxu0 0.0
    %4268 = vmatpush1.msra.mxu0 0.0
    %4269 = vmatprep.subr.mxu0 0.0
    %4270 = vmatpush1.msra.mxu0 0.0
    %4271 = vmatprep.subr.mxu0 0.0
    %4272 = vmatpush1.msra.mxu0 0.0
    %4273 = vmatprep.subr.mxu0 0.0
    %4274 = vmatpush1.msra.mxu0 0.0
    %4275 = vmatprep.subr.mxu0 0.0
    %4276 = vmatpush1.msra.mxu0 0.0
    %4277 = vmatprep.subr.mxu0 0.0
    %4278 = vmatpush1.msra.mxu0 0.0
    %4279 = vmatprep.subr.mxu0 0.0
    %4280 = vmatpush1.msra.mxu0 0.0
    %4281 = vmatprep.subr.mxu0 0.0
    %4282 = vmatpush1.msra.mxu0 0.0
    %4283 = vmatprep.subr.mxu0 0.0
    %4284 = vmatpush1.msra.mxu0 0.0
    %4285 = vmatprep.subr.mxu0 0.0
    %4286 = vmatpush1.msra.mxu0 0.0
    %4287 = vmatprep.subr.mxu0 0.0
    %4288 = vmatpush1.msra.mxu0 0.0
    %4289 = vmatprep.subr.mxu0 0.0
    %4290 = vmatpush1.msra.mxu0 0.0
    %4291 = vmatprep.subr.mxu0 0.0
    %4292 = vmatpush1.msra.mxu0 0.0
    %4293 = vmatprep.subr.mxu0 0.0
    %4294 = vmatpush1.msra.mxu0 0.0
    %4295 = vmatprep.subr.mxu0 0.0
    %4296 = vmatpush1.msra.mxu0 0.0
    %4297 = vmatprep.subr.mxu0 0.0
    %4298 = vmatpush1.msra.mxu0 0.0
    %4299 = vmatprep.subr.mxu0 0.0
    %4300 = vmatpush1.msra.mxu0 0.0
    %4301 = vmatprep.mubr.f32.mxu0 0.0
    %4302 = vmatmul.mubr.f32.gmra.mrb[0].mxu0 %v4232
    %v4303 = vpop.f32.mrb[0].mxu0
    %v4304 = vadd.f32 %v4229, %v4303
    %v4305 = vpop.f32.mrb[0].mxu0
    %4306 = vmatprep.mubr.f32.mxu0 0.0
    %4307 = vmatmul.mubr.f32.gmra.mrb[0].mxu0 %v4235
    %v4308 = vpop.f32.mrb[0].mxu0
    %v4309 = vadd.f32 %v4229, %v4308
    %v4310 = vpop.f32.mrb[0].mxu0
    %4311 = vdwg.mxu0
    %v4312 = vmax.f32 %v4304, 0.0
    %v4313 = vmax.f32 %v4309, 0.0
    %v4314 = vld [vmem:[%s17] sm:$0xff]
    %v4315 = vld [vmem:[%s17 + $0x8] sm:$0xff]
    %v4316 = vld [vmem:[%s17 + $0x10] sm:$0xff]
    %v4317 = vld [vmem:[%s17 + $0x18] sm:$0xff]
    %v4318 = vld [vmem:[%s18] sm:$0x1]
    %v4320 = vlaneseq
    %v4321 = vshrl.u32 %v4320, 7
    %v4322 = vsub.s32 0, %v4321
    %v4323 = vrot.slane %v4318, %v4322
    %v4326 = vsel %vm281, %v4312, 0
    %v4329 = vsel %vm281, %v4313, 0
    %4331 = vmatprep.subr.mxu0 0.0
    %4332 = vmatpush1.msra.mxu0 %v4314
    %4333 = vmatprep.subr.mxu0 0.0
    %4334 = vmatpush1.msra.mxu0 %v4315
    %4335 = vmatprep.subr.mxu0 0.0
    %4336 = vmatpush1.msra.mxu0 %v4316
    %4337 = vmatprep.subr.mxu0 0.0
    %4338 = vmatpush1.msra.mxu0 %v4317
    %4339 = vmatprep.subr.mxu0 0.0
    %4340 = vmatpush1.msra.mxu0 0.0
    %4341 = vmatprep.subr.mxu0 0.0
    %4342 = vmatpush1.msra.mxu0 0.0
    %4343 = vmatprep.subr.mxu0 0.0
    %4344 = vmatpush1.msra.mxu0 0.0
    %4345 = vmatprep.subr.mxu0 0.0
    %4346 = vmatpush1.msra.mxu0 0.0
    %4347 = vmatprep.subr.mxu0 0.0
    %4348 = vmatpush1.msra.mxu0 0.0
    %4349 = vmatprep.subr.mxu0 0.0
    %4350 = vmatpush1.msra.mxu0 0.0
    %4351 = vmatprep.subr.mxu0 0.0
    %4352 = vmatpush1.msra.mxu0 0.0
    %4353 = vmatprep.subr.mxu0 0.0
    %4354 = vmatpush1.msra.mxu0 0.0
    %4355 = vmatprep.subr.mxu0 0.0
    %4356 = vmatpush1.msra.mxu0 0.0
    %4357 = vmatprep.subr.mxu0 0.0
    %4358 = vmatpush1.msra.mxu0 0.0
    %4359 = vmatprep.subr.mxu0 0.0
    %4360 = vmatpush1.msra.mxu0 0.0
    %4361 = vmatprep.subr.mxu0 0.0
    %4362 = vmatpush1.msra.mxu0 0.0
    %4363 = vmatprep.subr.mxu0 0.0
    %4364 = vmatpush1.msra.mxu0 0.0
    %4365 = vmatprep.subr.mxu0 0.0
    %4366 = vmatpush1.msra.mxu0 0.0
    %4367 = vmatprep.subr.mxu0 0.0
    %4368 = vmatpush1.msra.mxu0 0.0
    %4369 = vmatprep.subr.mxu0 0.0
    %4370 = vmatpush1.msra.mxu0 0.0
    %4371 = vmatprep.subr.mxu0 0.0
    %4372 = vmatpush1.msra.mxu0 0.0
    %4373 = vmatprep.subr.mxu0 0.0
    %4374 = vmatpush1.msra.mxu0 0.0
    %4375 = vmatprep.subr.mxu0 0.0
    %4376 = vmatpush1.msra.mxu0 0.0
    %4377 = vmatprep.subr.mxu0 0.0
    %4378 = vmatpush1.msra.mxu0 0.0
    %4379 = vmatprep.subr.mxu0 0.0
    %4380 = vmatpush1.msra.mxu0 0.0
    %4381 = vmatprep.subr.mxu0 0.0
    %4382 = vmatpush1.msra.mxu0 0.0
    %4383 = vmatprep.subr.mxu0 0.0
    %4384 = vmatpush1.msra.mxu0 0.0
    %4385 = vmatprep.subr.mxu0 0.0
    %4386 = vmatpush1.msra.mxu0 0.0
    %4387 = vmatprep.subr.mxu0 0.0
    %4388 = vmatpush1.msra.mxu0 0.0
    %4389 = vmatprep.subr.mxu0 0.0
    %4390 = vmatpush1.msra.mxu0 0.0
    %4391 = vmatprep.subr.mxu0 0.0
    %4392 = vmatpush1.msra.mxu0 0.0
    %4393 = vmatprep.subr.mxu0 0.0
    %4394 = vmatpush1.msra.mxu0 0.0
    %4395 = vmatprep.mubr.f32.mxu0 0.0
    %4396 = vmatmul.mubr.f32.gmra.mrb[0].mxu0 %v4326
    %v4397 = vpop.f32.mrb[0].mxu0
    %v4398 = vadd.f32 %v4323, %v4397
    %v4399 = vpop.f32.mrb[0].mxu0
    %4400 = vmatprep.mubr.f32.mxu0 0.0
    %4401 = vmatmul.mubr.f32.gmra.mrb[0].mxu0 %v4329
    %v4402 = vpop.f32.mrb[0].mxu0
    %v4403 = vadd.f32 %v4323, %v4402
    %v4404 = vpop.f32.mrb[0].mxu0
    %4405 = vdwg.mxu0
    %vm4406 = vcmask 25600
    %4407 = vst.msk [vmem:[%s19] sm:$0x3] %vm4406, %v4398
    %4409 = vrot.lane.b32.xlu0 %v4398, 4
    %v4410 = vpop.permute.xlu0 %4409
    %vm4412 = vcmask 60450
    %4413 = vst.msk [vmem:[%s19 - $0x2] sm:$0xc] %vm4412, %v4410
    %4414 = vrot.lane.b32.xlu0 %v4398, 8
    %v4415 = vpop.permute.xlu0 %4414
    %vm4417 = vcmask 95300
    %4418 = vst.msk [vmem:[%s19 - $0x4] sm:$0x30] %vm4417, %v4415
    %4419 = vrot.lane.b32.xlu0 %v4398, 12
    %v4420 = vpop.permute.xlu0 %4419
    %vm4422 = vcmask 130150
    %4423 = vst.msk [vmem:[%s19 - $0x6] sm:$0xc0] %vm4422, %v4420
    %4425 = vrot.lane.b32.xlu0 %v4403, 16
    %v4426 = vpop.permute.xlu0 %4425
    %vm4428 = vcmask 156800
    %4429 = vst.msk [vmem:[%s19] sm:$0x3] %vm4428, %v4426
    %4430 = vrot.lane.b32.xlu0 %v4403, 20
    %v4431 = vpop.permute.xlu0 %4430
    %vm4433 = vcmask 191650
    %4434 = vst.msk [vmem:[%s19 - $0x2] sm:$0xc] %vm4433, %v4431
    %4435 = vrot.lane.b32.xlu0 %v4403, 24
    %v4436 = vpop.permute.xlu0 %4435
    %vm4438 = vcmask 226500
    %4439 = vst.msk [vmem:[%s19 - $0x4] sm:$0x30] %vm4438, %v4436
    %4440 = vrot.lane.b32.xlu0 %v4403, 28
    %v4441 = vpop.permute.xlu0 %4440
    %vm4443 = vcmask 261350
    %4444 = vst.msk [vmem:[%s19 - $0x6] sm:$0xc0] %vm4443, %v4441
    // Predicated region
    $region106: #{pqrnn_forward.1} parent=1 // pred_check
      _
    $region107: #{pqrnn_forward.1} parent=1 // pred_check_branch
      %4446 = sbr.rel (0) target = $region109
    $region108: #{pqrnn_forward.1} parent=1 // pred_region
      _
    $region109: #{pqrnn_forward.1} parent=1 // pred_fallthru
      _
    // Predicated region
    $region110: #{pqrnn_forward.1} parent=1 // pred_check
      _
    $region111: #{pqrnn_forward.1} parent=1 // pred_check_branch
      %4448 = sbr.rel (0) target = $region113
    $region112: #{pqrnn_forward.1} parent=1 // pred_region
      _
    $region113: #{pqrnn_forward.1} parent=1 // pred_fallthru
      _
    %4449 = vsyncpa [#allocation5], 1
    %4450 = vsyncpa [#allocation7], 1
    %4451 = vsyncpa [#allocation10], 1
    %4452 = vsyncpa [#allocation13], 1

</llo_original>
